<compile_context>
chip_gen: v6e
topology: v6e:2x2x1
jax: 0.10.0
libtpu: 0.0.40
codegen_flags: <defaults>
</compile_context>

<pallas_src>
import math
from functools import partial

import numpy as np
import jax
import jax.numpy as jnp
from jax.experimental import pallas as pl
from jax.experimental.pallas import tpu as pltpu

# ------------------------- model hyper-parameters (small) -------------------
B = 2            # batch
IN_CHANS = 4     # in_chans
IMG = 16         # img_size (square)
PATCH = 8        # patch_size
EMBED_DIM = 128  # embed_dim (lane-friendly)
DEPTH = 2        # depth
NUM_HEADS = 4    # num_heads -> head_dim = 32
MLP_RATIO = 4.0
LN_EPS = 1e-5    # nn.LayerNorm default
INIT_STD = 0.02

N_PATCHES = (IMG // PATCH) * (IMG // PATCH)        # 4
PATCH_DIM = IN_CHANS * PATCH * PATCH               # 256
MLP_HIDDEN = int(EMBED_DIM * MLP_RATIO)            # 512

# TODO(synk): tanh-GELU deviates ~1e-3 from nn.GELU's erf; set False for parity.
GELU_APPROXIMATE = True


# ------------------------------ pos embed (glue) ----------------------------
def get_2d_sincos_pos_embed(embed_dim, grid_size):
    """MAE-style fixed 2D sin-cos positional embedding (no cls token)."""
    grid_h = np.arange(grid_size, dtype=np.float32)
    grid_w = np.arange(grid_size, dtype=np.float32)
    grid = np.meshgrid(grid_w, grid_h)                 # w first
    grid = np.stack(grid, axis=0).reshape(2, 1, grid_size, grid_size)

    def emb_1d(d, pos):
        omega = np.arange(d // 2, dtype=np.float32) / (d / 2.0)
        omega = 1.0 / (10000.0 ** omega)
        out = np.einsum("m,d->md", pos.reshape(-1).astype(np.float32), omega)
        return np.concatenate([np.sin(out), np.cos(out)], axis=1)

    emb_h = emb_1d(embed_dim // 2, grid[0])
    emb_w = emb_1d(embed_dim // 2, grid[1])
    return np.concatenate([emb_h, emb_w], axis=1)      # (grid_size**2, D)


# ------------------------------ Pallas kernel --------------------------------
def _layernorm(z, w, b):
    mu = jnp.mean(z, axis=-1, keepdims=True)
    var = jnp.mean((z - mu) * (z - mu), axis=-1, keepdims=True)
    return (z - mu) * jax.lax.rsqrt(var + LN_EPS) * w + b


def _block(x, neg_mask, num_heads, headcat_ref,
           ln1w, ln1b, qkvw, qkvb, projw, projb,
           ln2w, ln2b, fc1w, fc1b, fc2w, fc2b):
    """One transformer block on the folded (B*N, D) token tile."""
    D = x.shape[-1]
    hd = D // num_heads
    scale = 1.0 / math.sqrt(hd)          # qk_scale=None -> head_dim ** -0.5

    # ---- attention branch: x = x + proj(MHSA(LN1(x))) ----
    y = _layernorm(x, ln1w, ln1b)
    qkv = jnp.dot(y.astype(jnp.bfloat16), qkvw,
                  preferred_element_type=jnp.float32) + qkvb      # (BN, 3D) f32

    # 128-lane-aligned q/k/v splits, then stack heads ONCE into a leading
    # batch dim -> all heads run through batched dot_generals / one softmax.
    def heads(m):                                      # (BN, D) -> (H, BN, hd)
        return jnp.stack(
            [m[:, h * hd:(h + 1) * hd] for h in range(num_heads)], axis=0)

    q = heads(qkv[:, :D])
    k = heads(qkv[:, D:2 * D])
    v = heads(qkv[:, 2 * D:])

    # scores for all heads & all images at once; block-diagonal additive mask
    # keeps attention within each image.  Kept strictly f32 (see -1e30 mask).
    s = jnp.einsum("hqd,hkd->hqk", q, k,
                   preferred_element_type=jnp.float32) * scale   # (H, BN, BN)
    s = s + neg_mask
    s = s - jnp.max(s, axis=-1, keepdims=True)
    p = jnp.exp(s)
    p = p * pl.reciprocal(jnp.sum(p, axis=-1, keepdims=True), approx=True)
    o = jnp.einsum("hqk,hkd->hqd", p, v,
                   preferred_element_type=jnp.float32)           # (H, BN, hd)

    # head outputs -> one (BN, D) tile via static-lane-offset stores, then a
    # single (BN,D)@(D,D) projection matmul (one MXU push instead of 4 K=32).
    for h in range(num_heads):
        headcat_ref[:, h * hd:(h + 1) * hd] = o[h]
    attn = jnp.dot(headcat_ref[...].astype(jnp.bfloat16), projw,
                   preferred_element_type=jnp.float32) + projb
    x = x + attn

    # ---- MLP branch: x = x + fc2(GELU(fc1(LN2(x)))) ----
    y2 = _layernorm(x, ln2w, ln2b)
    h1 = jnp.dot(y2.astype(jnp.bfloat16), fc1w,
                 preferred_element_type=jnp.float32) + fc1b
    h1 = jax.nn.gelu(h1, approximate=GELU_APPROXIMATE)
    mlp = jnp.dot(h1.astype(jnp.bfloat16), fc2w,
                  preferred_element_type=jnp.float32) + fc2b
    return x + mlp


def vit_kernel(patches_ref, posb_ref, mask_ref, pw_ref,
               ln1w_ref, ln1b_ref, qkvw_ref, qkvb_ref, projw_ref, projb_ref,
               ln2w_ref, ln2b_ref, fc1w_ref, fc1b_ref, fc2w_ref, fc2b_ref,
               normw_ref, normb_ref, o_ref, headcat_ref, *, num_heads):
    depth = qkvw_ref.shape[0]

    # patch embedding (+ conv bias folded into pos table) in bf16 on the MXU;
    # positional table is already tiled to (B*N, D) -> single vreg add.
    x = jnp.dot(patches_ref[...].astype(jnp.bfloat16), pw_ref[...],
                preferred_element_type=jnp.float32)               # (BN, D)
    x = x + posb_ref[...]

    neg_mask = mask_ref[...]                                      # (BN, BN) f32

    for i in range(depth):               # static unroll over transformer blocks
        x = _block(x, neg_mask, num_heads, headcat_ref,
                   ln1w_ref[i], ln1b_ref[i], qkvw_ref[i], qkvb_ref[i],
                   projw_ref[i], projb_ref[i], ln2w_ref[i], ln2b_ref[i],
                   fc1w_ref[i], fc1b_ref[i], fc2w_ref[i], fc2b_ref[i])

    o_ref[...] = _layernorm(x, normw_ref[...], normb_ref[...])


# ------------------------------ parameter init -------------------------------
def init_params(key):
    kit = iter(jax.random.split(key, 1 + 4 * DEPTH))
    std = INIT_STD

    # PatchEmbed: Conv2d(in_chans, D, kernel=patch, stride=patch)
    # conv weight (D, C, p, p) -> matmul weight (C*p*p, D); flatten order (c, ph, pw)
    conv_w = jax.random.normal(next(kit), (EMBED_DIM, IN_CHANS, PATCH, PATCH),
                               jnp.float32) * std
    patch_w = conv_w.reshape(EMBED_DIM, PATCH_DIM).T
    patch_b = jnp.zeros((EMBED_DIM,), jnp.float32)

    # fixed sincos pos embed (requires_grad=False); fold the (zero) conv bias in
    # TODO(synk): if the conv bias ever becomes trainable/non-zero keep this fold updated.
    pos = jnp.asarray(get_2d_sincos_pos_embed(EMBED_DIM, IMG // PATCH), jnp.float32)
    posb = pos + patch_b[None, :]                      # (N, D)

    ln1_w, ln1_b, qkv_w, qkv_b = [], [], [], []
    proj_w, proj_b, ln2_w, ln2_b = [], [], [], []
    fc1_w, fc1_b, fc2_w, fc2_b = [], [], [], []
    for i in range(DEPTH):
        rescale = 1.0 / math.sqrt(2.0 * (i + 1))       # _rescale_blocks
        ln1_w.append(jnp.ones((1, EMBED_DIM), jnp.float32))
        ln1_b.append(jnp.zeros((1, EMBED_DIM), jnp.float32))
        qkv_w.append(jax.random.normal(next(kit), (EMBED_DIM, 3 * EMBED_DIM),
                                       jnp.float32) * std)
        qkv_b.append(jnp.zeros((1, 3 * EMBED_DIM), jnp.float32))
        proj_w.append(jax.random.normal(next(kit), (EMBED_DIM, EMBED_DIM),
                                        jnp.float32) * std * rescale)
        proj_b.append(jnp.zeros((1, EMBED_DIM), jnp.float32))
        ln2_w.append(jnp.ones((1, EMBED_DIM), jnp.float32))
        ln2_b.append(jnp.zeros((1, EMBED_DIM), jnp.float32))
        fc1_w.append(jax.random.normal(next(kit), (EMBED_DIM, MLP_HIDDEN),
                                       jnp.float32) * std)
        fc1_b.append(jnp.zeros((1, MLP_HIDDEN), jnp.float32))
        fc2_w.append(jax.random.normal(next(kit), (MLP_HIDDEN, EMBED_DIM),
                                       jnp.float32) * std * rescale)
        fc2_b.append(jnp.zeros((1, EMBED_DIM), jnp.float32))

    return {
        "patch_w": patch_w.astype(jnp.bfloat16),       # matmul weights in bf16
        "posb": posb,
        "ln1_w": jnp.stack(ln1_w), "ln1_b": jnp.stack(ln1_b),
        "qkv_w": jnp.stack(qkv_w).astype(jnp.bfloat16),
        "qkv_b": jnp.stack(qkv_b),
        "proj_w": jnp.stack(proj_w).astype(jnp.bfloat16),
        "proj_b": jnp.stack(proj_b),
        "ln2_w": jnp.stack(ln2_w), "ln2_b": jnp.stack(ln2_b),
        "fc1_w": jnp.stack(fc1_w).astype(jnp.bfloat16),
        "fc1_b": jnp.stack(fc1_b),
        "fc2_w": jnp.stack(fc2_w).astype(jnp.bfloat16),
        "fc2_b": jnp.stack(fc2_b),
        "norm_w": jnp.ones((1, EMBED_DIM), jnp.float32),
        "norm_b": jnp.zeros((1, EMBED_DIM), jnp.float32),
    }


# ------------------------------ forward (glue + fused kernel) ----------------
@jax.jit
def vit_forward(x, params):
    # x: NCHW float32 [B, C, H, W]   (masks=None path)
    Bsz, C, H, W = x.shape
    p = PATCH
    Hp, Wp = H // p, W // p
    N = Hp * Wp
    BN = Bsz * N

    # Conv2d(stride=patch) == per-patch linear: extract patches in (c, ph, pw) order
    patches = (
        x.reshape(Bsz, C, Hp, p, Wp, p)
         .transpose(0, 2, 4, 1, 3, 5)                  # (B, Hp, Wp, C, p, p)
         .reshape(BN, C * p * p)
    )

    # pos embedding pre-tiled to (B*N, D) (4 KB) -> kernel does a plain add
    posb_bn = jnp.tile(params["posb"], (Bsz, 1))

    # block-diagonal additive mask (tokens attend only within their own image),
    # built once on the host as a tiny f32 constant.
    tok_img = jnp.arange(BN, dtype=jnp.int32) // N
    neg_mask = jnp.where(tok_img[:, None] == tok_img[None, :],
                         jnp.float32(0.0), jnp.float32(-1e30))

    vmem = pl.BlockSpec(memory_space=pltpu.MemorySpace.VMEM)
    out = pl.pallas_call(
        partial(vit_kernel, num_heads=NUM_HEADS),
        out_shape=jax.ShapeDtypeStruct((BN, EMBED_DIM), jnp.float32),
        in_specs=[vmem] * 18,
        out_specs=vmem,
        scratch_shapes=[pltpu.VMEM((BN, EMBED_DIM), jnp.float32)],
    )(patches, posb_bn, neg_mask, params["patch_w"],
      params["ln1_w"], params["ln1_b"], params["qkv_w"], params["qkv_b"],
      params["proj_w"], params["proj_b"], params["ln2_w"], params["ln2_b"],
      params["fc1_w"], params["fc1_b"], params["fc2_w"], params["fc2_b"],
      params["norm_w"], params["norm_b"])
    return out.reshape(Bsz, N, EMBED_DIM)

# TODO(synk): masks / apply_masks, activation checkpointing and pos-embed
#             interpolation (non-default input sizes) are not exercised here;
#             dropout / drop-path are identity (rates default to 0).


if __name__ == "__main__":
    key = jax.random.PRNGKey(0)
    k_param, k_x = jax.random.split(key)
    params = init_params(k_param)
    x = jax.random.normal(k_x, (B, IN_CHANS, IMG, IMG), jnp.float32)

    out = vit_forward(x, params)
    out = jax.block_until_ready(out)
    assert out.shape == (B, N_PATCHES, EMBED_DIM)
    assert bool(jnp.all(jnp.isfinite(out)))
    print("KERNEL_OK")
</pallas_src>

<mosaic_0001>
module attributes {stable_mosaic.version = 11 : i64} {
  func.func @vit_kernel(%arg0: memref<8x256xf32, #tpu.memory_space<vmem>>, %arg1: memref<8x128xf32, #tpu.memory_space<vmem>>, %arg2: memref<8x8xf32, #tpu.memory_space<vmem>>, %arg3: memref<256x128xbf16, #tpu.memory_space<vmem>>, %arg4: memref<2x1x128xf32, #tpu.memory_space<vmem>>, %arg5: memref<2x1x128xf32, #tpu.memory_space<vmem>>, %arg6: memref<2x128x384xbf16, #tpu.memory_space<vmem>>, %arg7: memref<2x1x384xf32, #tpu.memory_space<vmem>>, %arg8: memref<2x128x128xbf16, #tpu.memory_space<vmem>>, %arg9: memref<2x1x128xf32, #tpu.memory_space<vmem>>, %arg10: memref<2x1x128xf32, #tpu.memory_space<vmem>>, %arg11: memref<2x1x128xf32, #tpu.memory_space<vmem>>, %arg12: memref<2x128x512xbf16, #tpu.memory_space<vmem>>, %arg13: memref<2x1x512xf32, #tpu.memory_space<vmem>>, %arg14: memref<2x512x128xbf16, #tpu.memory_space<vmem>>, %arg15: memref<2x1x128xf32, #tpu.memory_space<vmem>>, %arg16: memref<1x128xf32, #tpu.memory_space<vmem>>, %arg17: memref<1x128xf32, #tpu.memory_space<vmem>>, %arg18: memref<8x128xf32, #tpu.memory_space<vmem>>, %arg19: memref<8x128xf32, #tpu.memory_space<vmem>>) attributes {dimension_semantics = [], scalar_prefetch = 0 : i64, scratch_operands = 1 : i64, tpu.core_type = #tpu.core_type<tc>} {
    %c0 = arith.constant 0 : index
    %c0_0 = arith.constant 0 : index
    %0 = vector.load %arg0[%c0, %c0_0] : memref<8x256xf32, #tpu.memory_space<vmem>>, vector<8x256xf32>
    %1 = arith.truncf %0 : vector<8x256xf32> to vector<8x256xbf16>
    %c0_1 = arith.constant 0 : index
    %c0_2 = arith.constant 0 : index
    %2 = vector.load %arg3[%c0_1, %c0_2] : memref<256x128xbf16, #tpu.memory_space<vmem>>, vector<256x128xbf16>
    %cst = arith.constant dense<0.000000e+00> : vector<8x128xf32>
    %3 = tpu.matmul %1, %2, %cst {dimension_numbers = #tpu.dot_dimension_numbers<[1], [0], [0], [1], [0, 0, 1, 1], [], []>} : vector<8x256xbf16>, vector<256x128xbf16>, vector<8x128xf32> -> vector<8x128xf32>
    %c0_3 = arith.constant 0 : index
    %c0_4 = arith.constant 0 : index
    %4 = vector.load %arg1[%c0_3, %c0_4] : memref<8x128xf32, #tpu.memory_space<vmem>>, vector<8x128xf32>
    %5 = arith.addf %3, %4 : vector<8x128xf32>
    %c0_5 = arith.constant 0 : index
    %c0_6 = arith.constant 0 : index
    %6 = vector.load %arg2[%c0_5, %c0_6] : memref<8x8xf32, #tpu.memory_space<vmem>>, vector<8x8xf32>
    %c0_7 = arith.constant 0 : index
    %c0_8 = arith.constant 0 : index
    %c0_9 = arith.constant 0 : index
    %7 = vector.load %arg4[%c0_7, %c0_8, %c0_9] : memref<2x1x128xf32, #tpu.memory_space<vmem>>, vector<1x1x128xf32>
    %8 = vector.shape_cast %7 : vector<1x1x128xf32> to vector<1x128xf32>
    %c0_10 = arith.constant 0 : index
    %c0_11 = arith.constant 0 : index
    %c0_12 = arith.constant 0 : index
    %9 = vector.load %arg5[%c0_10, %c0_11, %c0_12] : memref<2x1x128xf32, #tpu.memory_space<vmem>>, vector<1x1x128xf32>
    %10 = vector.shape_cast %9 : vector<1x1x128xf32> to vector<1x128xf32>
    %c0_13 = arith.constant 0 : index
    %c0_14 = arith.constant 0 : index
    %c0_15 = arith.constant 0 : index
    %11 = vector.load %arg6[%c0_13, %c0_14, %c0_15] : memref<2x128x384xbf16, #tpu.memory_space<vmem>>, vector<1x128x384xbf16>
    %12 = vector.shape_cast %11 : vector<1x128x384xbf16> to vector<128x384xbf16>
    %c0_16 = arith.constant 0 : index
    %c0_17 = arith.constant 0 : index
    %c0_18 = arith.constant 0 : index
    %13 = vector.load %arg7[%c0_16, %c0_17, %c0_18] : memref<2x1x384xf32, #tpu.memory_space<vmem>>, vector<1x1x384xf32>
    %14 = vector.shape_cast %13 : vector<1x1x384xf32> to vector<1x384xf32>
    %c0_19 = arith.constant 0 : index
    %c0_20 = arith.constant 0 : index
    %c0_21 = arith.constant 0 : index
    %15 = vector.load %arg8[%c0_19, %c0_20, %c0_21] : memref<2x128x128xbf16, #tpu.memory_space<vmem>>, vector<1x128x128xbf16>
    %16 = vector.shape_cast %15 : vector<1x128x128xbf16> to vector<128x128xbf16>
    %c0_22 = arith.constant 0 : index
    %c0_23 = arith.constant 0 : index
    %c0_24 = arith.constant 0 : index
    %17 = vector.load %arg9[%c0_22, %c0_23, %c0_24] : memref<2x1x128xf32, #tpu.memory_space<vmem>>, vector<1x1x128xf32>
    %18 = vector.shape_cast %17 : vector<1x1x128xf32> to vector<1x128xf32>
    %c0_25 = arith.constant 0 : index
    %c0_26 = arith.constant 0 : index
    %c0_27 = arith.constant 0 : index
    %19 = vector.load %arg10[%c0_25, %c0_26, %c0_27] : memref<2x1x128xf32, #tpu.memory_space<vmem>>, vector<1x1x128xf32>
    %20 = vector.shape_cast %19 : vector<1x1x128xf32> to vector<1x128xf32>
    %c0_28 = arith.constant 0 : index
    %c0_29 = arith.constant 0 : index
    %c0_30 = arith.constant 0 : index
    %21 = vector.load %arg11[%c0_28, %c0_29, %c0_30] : memref<2x1x128xf32, #tpu.memory_space<vmem>>, vector<1x1x128xf32>
    %22 = vector.shape_cast %21 : vector<1x1x128xf32> to vector<1x128xf32>
    %c0_31 = arith.constant 0 : index
    %c0_32 = arith.constant 0 : index
    %c0_33 = arith.constant 0 : index
    %23 = vector.load %arg12[%c0_31, %c0_32, %c0_33] : memref<2x128x512xbf16, #tpu.memory_space<vmem>>, vector<1x128x512xbf16>
    %24 = vector.shape_cast %23 : vector<1x128x512xbf16> to vector<128x512xbf16>
    %c0_34 = arith.constant 0 : index
    %c0_35 = arith.constant 0 : index
    %c0_36 = arith.constant 0 : index
    %25 = vector.load %arg13[%c0_34, %c0_35, %c0_36] : memref<2x1x512xf32, #tpu.memory_space<vmem>>, vector<1x1x512xf32>
    %26 = vector.shape_cast %25 : vector<1x1x512xf32> to vector<1x512xf32>
    %c0_37 = arith.constant 0 : index
    %c0_38 = arith.constant 0 : index
    %c0_39 = arith.constant 0 : index
    %27 = vector.load %arg14[%c0_37, %c0_38, %c0_39] : memref<2x512x128xbf16, #tpu.memory_space<vmem>>, vector<1x512x128xbf16>
    %28 = vector.shape_cast %27 : vector<1x512x128xbf16> to vector<512x128xbf16>
    %c0_40 = arith.constant 0 : index
    %c0_41 = arith.constant 0 : index
    %c0_42 = arith.constant 0 : index
    %29 = vector.load %arg15[%c0_40, %c0_41, %c0_42] : memref<2x1x128xf32, #tpu.memory_space<vmem>>, vector<1x1x128xf32>
    %30 = vector.shape_cast %29 : vector<1x1x128xf32> to vector<1x128xf32>
    %cst_43 = arith.constant dense<0.000000e+00> : vector<8xf32>
    %31 = vector.multi_reduction <add>, %5, %cst_43 [1] : vector<8x128xf32> to vector<8xf32>
    %32 = vector.shape_cast %31 : vector<8xf32> to vector<8x1xf32>
    %cst_44 = arith.constant 1.280000e+02 : f32
    %33 = vector.broadcast %cst_44 : f32 to vector<8x1xf32>
    %34 = arith.divf %32, %33 : vector<8x1xf32>
    %35 = vector.broadcast %34 : vector<8x1xf32> to vector<8x128xf32>
    %36 = arith.subf %5, %35 : vector<8x128xf32>
    %37 = vector.broadcast %34 : vector<8x1xf32> to vector<8x128xf32>
    %38 = arith.subf %5, %37 : vector<8x128xf32>
    %39 = arith.mulf %36, %38 : vector<8x128xf32>
    %cst_45 = arith.constant dense<0.000000e+00> : vector<8xf32>
    %40 = vector.multi_reduction <add>, %39, %cst_45 [1] : vector<8x128xf32> to vector<8xf32>
    %41 = vector.shape_cast %40 : vector<8xf32> to vector<8x1xf32>
    %cst_46 = arith.constant 1.280000e+02 : f32
    %42 = vector.broadcast %cst_46 : f32 to vector<8x1xf32>
    %43 = arith.divf %41, %42 : vector<8x1xf32>
    %44 = vector.broadcast %34 : vector<8x1xf32> to vector<8x128xf32>
    %45 = arith.subf %5, %44 : vector<8x128xf32>
    %cst_47 = arith.constant 9.99999974E-6 : f32
    %46 = vector.broadcast %cst_47 : f32 to vector<8x1xf32>
    %47 = arith.addf %43, %46 : vector<8x1xf32>
    %48 = math.rsqrt %47 : vector<8x1xf32>
    %49 = vector.broadcast %48 : vector<8x1xf32> to vector<8x128xf32>
    %50 = arith.mulf %45, %49 : vector<8x128xf32>
    %51 = vector.broadcast %8 : vector<1x128xf32> to vector<8x128xf32>
    %52 = arith.mulf %50, %51 : vector<8x128xf32>
    %53 = vector.broadcast %10 : vector<1x128xf32> to vector<8x128xf32>
    %54 = arith.addf %52, %53 : vector<8x128xf32>
    %55 = arith.truncf %54 : vector<8x128xf32> to vector<8x128xbf16>
    %cst_48 = arith.constant dense<0.000000e+00> : vector<8x384xf32>
    %56 = tpu.matmul %55, %12, %cst_48 {dimension_numbers = #tpu.dot_dimension_numbers<[1], [0], [0], [1], [0, 0, 1, 1], [], []>} : vector<8x128xbf16>, vector<128x384xbf16>, vector<8x384xf32> -> vector<8x384xf32>
    %57 = vector.broadcast %14 : vector<1x384xf32> to vector<8x384xf32>
    %58 = arith.addf %56, %57 : vector<8x384xf32>
    %59 = vector.extract_strided_slice %58 {offsets = [0, 0], sizes = [8, 128], strides = [1, 1]} : vector<8x384xf32> to vector<8x128xf32>
    %60 = vector.extract_strided_slice %59 {offsets = [0, 0], sizes = [8, 32], strides = [1, 1]} : vector<8x128xf32> to vector<8x32xf32>
    %61 = vector.extract_strided_slice %59 {offsets = [0, 32], sizes = [8, 32], strides = [1, 1]} : vector<8x128xf32> to vector<8x32xf32>
    %62 = vector.extract_strided_slice %59 {offsets = [0, 64], sizes = [8, 32], strides = [1, 1]} : vector<8x128xf32> to vector<8x32xf32>
    %63 = vector.extract_strided_slice %59 {offsets = [0, 96], sizes = [8, 32], strides = [1, 1]} : vector<8x128xf32> to vector<8x32xf32>
    %64 = vector.shape_cast %60 : vector<8x32xf32> to vector<1x8x32xf32>
    %65 = vector.shape_cast %61 : vector<8x32xf32> to vector<1x8x32xf32>
    %66 = vector.shape_cast %62 : vector<8x32xf32> to vector<1x8x32xf32>
    %67 = vector.shape_cast %63 : vector<8x32xf32> to vector<1x8x32xf32>
    %68 = tpu.concatenate %64, %65, %66, %67 in 0 : vector<1x8x32xf32>, vector<1x8x32xf32>, vector<1x8x32xf32>, vector<1x8x32xf32> -> vector<4x8x32xf32>
    %69 = vector.extract_strided_slice %58 {offsets = [0, 128], sizes = [8, 128], strides = [1, 1]} : vector<8x384xf32> to vector<8x128xf32>
    %70 = vector.extract_strided_slice %69 {offsets = [0, 0], sizes = [8, 32], strides = [1, 1]} : vector<8x128xf32> to vector<8x32xf32>
    %71 = vector.extract_strided_slice %69 {offsets = [0, 32], sizes = [8, 32], strides = [1, 1]} : vector<8x128xf32> to vector<8x32xf32>
    %72 = vector.extract_strided_slice %69 {offsets = [0, 64], sizes = [8, 32], strides = [1, 1]} : vector<8x128xf32> to vector<8x32xf32>
    %73 = vector.extract_strided_slice %69 {offsets = [0, 96], sizes = [8, 32], strides = [1, 1]} : vector<8x128xf32> to vector<8x32xf32>
    %74 = vector.shape_cast %70 : vector<8x32xf32> to vector<1x8x32xf32>
    %75 = vector.shape_cast %71 : vector<8x32xf32> to vector<1x8x32xf32>
    %76 = vector.shape_cast %72 : vector<8x32xf32> to vector<1x8x32xf32>
    %77 = vector.shape_cast %73 : vector<8x32xf32> to vector<1x8x32xf32>
    %78 = tpu.concatenate %74, %75, %76, %77 in 0 : vector<1x8x32xf32>, vector<1x8x32xf32>, vector<1x8x32xf32>, vector<1x8x32xf32> -> vector<4x8x32xf32>
    %79 = vector.extract_strided_slice %58 {offsets = [0, 256], sizes = [8, 128], strides = [1, 1]} : vector<8x384xf32> to vector<8x128xf32>
    %80 = vector.extract_strided_slice %79 {offsets = [0, 0], sizes = [8, 32], strides = [1, 1]} : vector<8x128xf32> to vector<8x32xf32>
    %81 = vector.extract_strided_slice %79 {offsets = [0, 32], sizes = [8, 32], strides = [1, 1]} : vector<8x128xf32> to vector<8x32xf32>
    %82 = vector.extract_strided_slice %79 {offsets = [0, 64], sizes = [8, 32], strides = [1, 1]} : vector<8x128xf32> to vector<8x32xf32>
    %83 = vector.extract_strided_slice %79 {offsets = [0, 96], sizes = [8, 32], strides = [1, 1]} : vector<8x128xf32> to vector<8x32xf32>
    %84 = vector.shape_cast %80 : vector<8x32xf32> to vector<1x8x32xf32>
    %85 = vector.shape_cast %81 : vector<8x32xf32> to vector<1x8x32xf32>
    %86 = vector.shape_cast %82 : vector<8x32xf32> to vector<1x8x32xf32>
    %87 = vector.shape_cast %83 : vector<8x32xf32> to vector<1x8x32xf32>
    %88 = tpu.concatenate %84, %85, %86, %87 in 0 : vector<1x8x32xf32>, vector<1x8x32xf32>, vector<1x8x32xf32>, vector<1x8x32xf32> -> vector<4x8x32xf32>
    "tpu.trace_start"() <{level = 10 : i32, message = "hqd,hkd->hqk"}> : () -> ()
    %cst_49 = arith.constant dense<0.000000e+00> : vector<4x8x8xf32>
    %89 = tpu.matmul %68, %78, %cst_49 {dimension_numbers = #tpu.dot_dimension_numbers<[2], [2], [1], [1], [0, 0, 0, 1, 1, 1], [0], [0]>} : vector<4x8x32xf32>, vector<4x8x32xf32>, vector<4x8x8xf32> -> vector<4x8x8xf32>
    "tpu.trace_stop"() : () -> ()
    %cst_50 = arith.constant 0.176776692 : f32
    %90 = vector.broadcast %cst_50 : f32 to vector<4x8x8xf32>
    %91 = arith.mulf %89, %90 : vector<4x8x8xf32>
    %92 = vector.shape_cast %6 : vector<8x8xf32> to vector<1x8x8xf32>
    %93 = vector.broadcast %92 : vector<1x8x8xf32> to vector<4x8x8xf32>
    %94 = arith.addf %91, %93 : vector<4x8x8xf32>
    %cst_51 = arith.constant dense<0xFF800000> : vector<4x8xf32>
    %95 = vector.multi_reduction <maximumf>, %94, %cst_51 [2] : vector<4x8x8xf32> to vector<4x8xf32>
    %96 = vector.shape_cast %95 : vector<4x8xf32> to vector<4x8x1xf32>
    %97 = vector.broadcast %96 : vector<4x8x1xf32> to vector<4x8x8xf32>
    %98 = arith.subf %94, %97 : vector<4x8x8xf32>
    %99 = math.exp %98 : vector<4x8x8xf32>
    %cst_52 = arith.constant dense<0.000000e+00> : vector<4x8xf32>
    %100 = vector.multi_reduction <add>, %99, %cst_52 [2] : vector<4x8x8xf32> to vector<4x8xf32>
    %101 = vector.shape_cast %100 : vector<4x8xf32> to vector<4x8x1xf32>
    %102 = tpu.reciprocal %101 {approx = true} : vector<4x8x1xf32> -> vector<4x8x1xf32>
    %103 = vector.broadcast %102 : vector<4x8x1xf32> to vector<4x8x8xf32>
    %104 = arith.mulf %99, %103 : vector<4x8x8xf32>
    "tpu.trace_start"() <{level = 10 : i32, message = "hqk,hkd->hqd"}> : () -> ()
    %cst_53 = arith.constant dense<0.000000e+00> : vector<4x8x32xf32>
    %105 = tpu.matmul %104, %88, %cst_53 {dimension_numbers = #tpu.dot_dimension_numbers<[2], [1], [1], [2], [0, 0, 0, 1, 1, 2], [0], [0]>} : vector<4x8x8xf32>, vector<4x8x32xf32>, vector<4x8x32xf32> -> vector<4x8x32xf32>
    "tpu.trace_stop"() : () -> ()
    %106 = vector.extract_strided_slice %105 {offsets = [0, 0, 0], sizes = [1, 8, 32], strides = [1, 1, 1]} : vector<4x8x32xf32> to vector<1x8x32xf32>
    %107 = vector.shape_cast %106 : vector<1x8x32xf32> to vector<8x32xf32>
    %c0_54 = arith.constant 0 : index
    %c0_55 = arith.constant 0 : index
    %108 = vector.load %arg19[%c0_54, %c0_55] : memref<8x128xf32, #tpu.memory_space<vmem>>, vector<8x32xf32>
    tpu.vector_store %arg19[%c0_54, %c0_55], %107 {strides = array<i32>} : memref<8x128xf32, #tpu.memory_space<vmem>>, vector<8x32xf32>,
    %109 = vector.extract_strided_slice %105 {offsets = [1, 0, 0], sizes = [1, 8, 32], strides = [1, 1, 1]} : vector<4x8x32xf32> to vector<1x8x32xf32>
    %110 = vector.shape_cast %109 : vector<1x8x32xf32> to vector<8x32xf32>
    %c0_56 = arith.constant 0 : index
    %c32 = arith.constant 32 : index
    %111 = vector.load %arg19[%c0_56, %c32] : memref<8x128xf32, #tpu.memory_space<vmem>>, vector<8x32xf32>
    tpu.vector_store %arg19[%c0_56, %c32], %110 {strides = array<i32>} : memref<8x128xf32, #tpu.memory_space<vmem>>, vector<8x32xf32>,
    %112 = vector.extract_strided_slice %105 {offsets = [2, 0, 0], sizes = [1, 8, 32], strides = [1, 1, 1]} : vector<4x8x32xf32> to vector<1x8x32xf32>
    %113 = vector.shape_cast %112 : vector<1x8x32xf32> to vector<8x32xf32>
    %c0_57 = arith.constant 0 : index
    %c64 = arith.constant 64 : index
    %114 = vector.load %arg19[%c0_57, %c64] : memref<8x128xf32, #tpu.memory_space<vmem>>, vector<8x32xf32>
    tpu.vector_store %arg19[%c0_57, %c64], %113 {strides = array<i32>} : memref<8x128xf32, #tpu.memory_space<vmem>>, vector<8x32xf32>,
    %115 = vector.extract_strided_slice %105 {offsets = [3, 0, 0], sizes = [1, 8, 32], strides = [1, 1, 1]} : vector<4x8x32xf32> to vector<1x8x32xf32>
    %116 = vector.shape_cast %115 : vector<1x8x32xf32> to vector<8x32xf32>
    %c0_58 = arith.constant 0 : index
    %c96 = arith.constant 96 : index
    %117 = vector.load %arg19[%c0_58, %c96] : memref<8x128xf32, #tpu.memory_space<vmem>>, vector<8x32xf32>
    tpu.vector_store %arg19[%c0_58, %c96], %116 {strides = array<i32>} : memref<8x128xf32, #tpu.memory_space<vmem>>, vector<8x32xf32>,
    %c0_59 = arith.constant 0 : index
    %c0_60 = arith.constant 0 : index
    %118 = vector.load %arg19[%c0_59, %c0_60] : memref<8x128xf32, #tpu.memory_space<vmem>>, vector<8x128xf32>
    %119 = arith.truncf %118 : vector<8x128xf32> to vector<8x128xbf16>
    %cst_61 = arith.constant dense<0.000000e+00> : vector<8x128xf32>
    %120 = tpu.matmul %119, %16, %cst_61 {dimension_numbers = #tpu.dot_dimension_numbers<[1], [0], [0], [1], [0, 0, 1, 1], [], []>} : vector<8x128xbf16>, vector<128x128xbf16>, vector<8x128xf32> -> vector<8x128xf32>
    %121 = vector.broadcast %18 : vector<1x128xf32> to vector<8x128xf32>
    %122 = arith.addf %120, %121 : vector<8x128xf32>
    %123 = arith.addf %5, %122 : vector<8x128xf32>
    %cst_62 = arith.constant dense<0.000000e+00> : vector<8xf32>
    %124 = vector.multi_reduction <add>, %123, %cst_62 [1] : vector<8x128xf32> to vector<8xf32>
    %125 = vector.shape_cast %124 : vector<8xf32> to vector<8x1xf32>
    %cst_63 = arith.constant 1.280000e+02 : f32
    %126 = vector.broadcast %cst_63 : f32 to vector<8x1xf32>
    %127 = arith.divf %125, %126 : vector<8x1xf32>
    %128 = vector.broadcast %127 : vector<8x1xf32> to vector<8x128xf32>
    %129 = arith.subf %123, %128 : vector<8x128xf32>
    %130 = vector.broadcast %127 : vector<8x1xf32> to vector<8x128xf32>
    %131 = arith.subf %123, %130 : vector<8x128xf32>
    %132 = arith.mulf %129, %131 : vector<8x128xf32>
    %cst_64 = arith.constant dense<0.000000e+00> : vector<8xf32>
    %133 = vector.multi_reduction <add>, %132, %cst_64 [1] : vector<8x128xf32> to vector<8xf32>
    %134 = vector.shape_cast %133 : vector<8xf32> to vector<8x1xf32>
    %cst_65 = arith.constant 1.280000e+02 : f32
    %135 = vector.broadcast %cst_65 : f32 to vector<8x1xf32>
    %136 = arith.divf %134, %135 : vector<8x1xf32>
    %137 = vector.broadcast %127 : vector<8x1xf32> to vector<8x128xf32>
    %138 = arith.subf %123, %137 : vector<8x128xf32>
    %cst_66 = arith.constant 9.99999974E-6 : f32
    %139 = vector.broadcast %cst_66 : f32 to vector<8x1xf32>
    %140 = arith.addf %136, %139 : vector<8x1xf32>
    %141 = math.rsqrt %140 : vector<8x1xf32>
    %142 = vector.broadcast %141 : vector<8x1xf32> to vector<8x128xf32>
    %143 = arith.mulf %138, %142 : vector<8x128xf32>
    %144 = vector.broadcast %20 : vector<1x128xf32> to vector<8x128xf32>
    %145 = arith.mulf %143, %144 : vector<8x128xf32>
    %146 = vector.broadcast %22 : vector<1x128xf32> to vector<8x128xf32>
    %147 = arith.addf %145, %146 : vector<8x128xf32>
    %148 = arith.truncf %147 : vector<8x128xf32> to vector<8x128xbf16>
    %cst_67 = arith.constant dense<0.000000e+00> : vector<8x512xf32>
    %149 = tpu.matmul %148, %24, %cst_67 {dimension_numbers = #tpu.dot_dimension_numbers<[1], [0], [0], [1], [0, 0, 1, 1], [], []>} : vector<8x128xbf16>, vector<128x512xbf16>, vector<8x512xf32> -> vector<8x512xf32>
    %150 = vector.broadcast %26 : vector<1x512xf32> to vector<8x512xf32>
    %151 = arith.addf %149, %150 : vector<8x512xf32>
    %152 = arith.mulf %151, %151 : vector<8x512xf32>
    %153 = arith.mulf %151, %152 : vector<8x512xf32>
    %cst_68 = arith.constant 4.471500e-02 : f32
    %154 = vector.broadcast %cst_68 : f32 to vector<8x512xf32>
    %155 = arith.mulf %154, %153 : vector<8x512xf32>
    %156 = arith.addf %151, %155 : vector<8x512xf32>
    %cst_69 = arith.constant 0.797884583 : f32
    %157 = vector.broadcast %cst_69 : f32 to vector<8x512xf32>
    %158 = arith.mulf %157, %156 : vector<8x512xf32>
    %159 = math.tanh %158 : vector<8x512xf32>
    %cst_70 = arith.constant 1.000000e+00 : f32
    %160 = vector.broadcast %cst_70 : f32 to vector<8x512xf32>
    %161 = arith.addf %160, %159 : vector<8x512xf32>
    %cst_71 = arith.constant 5.000000e-01 : f32
    %162 = vector.broadcast %cst_71 : f32 to vector<8x512xf32>
    %163 = arith.mulf %162, %161 : vector<8x512xf32>
    %164 = arith.mulf %151, %163 : vector<8x512xf32>
    %165 = arith.truncf %164 : vector<8x512xf32> to vector<8x512xbf16>
    %cst_72 = arith.constant dense<0.000000e+00> : vector<8x128xf32>
    %166 = tpu.matmul %165, %28, %cst_72 {dimension_numbers = #tpu.dot_dimension_numbers<[1], [0], [0], [1], [0, 0, 1, 1], [], []>} : vector<8x512xbf16>, vector<512x128xbf16>, vector<8x128xf32> -> vector<8x128xf32>
    %167 = vector.broadcast %30 : vector<1x128xf32> to vector<8x128xf32>
    %168 = arith.addf %166, %167 : vector<8x128xf32>
    %169 = arith.addf %123, %168 : vector<8x128xf32>
    %c1 = arith.constant 1 : index
    %c0_73 = arith.constant 0 : index
    %c0_74 = arith.constant 0 : index
    %170 = vector.load %arg4[%c1, %c0_73, %c0_74] : memref<2x1x128xf32, #tpu.memory_space<vmem>>, vector<1x1x128xf32>
    %171 = vector.shape_cast %170 : vector<1x1x128xf32> to vector<1x128xf32>
    %c1_75 = arith.constant 1 : index
    %c0_76 = arith.constant 0 : index
    %c0_77 = arith.constant 0 : index
    %172 = vector.load %arg5[%c1_75, %c0_76, %c0_77] : memref<2x1x128xf32, #tpu.memory_space<vmem>>, vector<1x1x128xf32>
    %173 = vector.shape_cast %172 : vector<1x1x128xf32> to vector<1x128xf32>
    %c1_78 = arith.constant 1 : index
    %c0_79 = arith.constant 0 : index
    %c0_80 = arith.constant 0 : index
    %174 = vector.load %arg6[%c1_78, %c0_79, %c0_80] : memref<2x128x384xbf16, #tpu.memory_space<vmem>>, vector<1x128x384xbf16>
    %175 = vector.shape_cast %174 : vector<1x128x384xbf16> to vector<128x384xbf16>
    %c1_81 = arith.constant 1 : index
    %c0_82 = arith.constant 0 : index
    %c0_83 = arith.constant 0 : index
    %176 = vector.load %arg7[%c1_81, %c0_82, %c0_83] : memref<2x1x384xf32, #tpu.memory_space<vmem>>, vector<1x1x384xf32>
    %177 = vector.shape_cast %176 : vector<1x1x384xf32> to vector<1x384xf32>
    %c1_84 = arith.constant 1 : index
    %c0_85 = arith.constant 0 : index
    %c0_86 = arith.constant 0 : index
    %178 = vector.load %arg8[%c1_84, %c0_85, %c0_86] : memref<2x128x128xbf16, #tpu.memory_space<vmem>>, vector<1x128x128xbf16>
    %179 = vector.shape_cast %178 : vector<1x128x128xbf16> to vector<128x128xbf16>
    %c1_87 = arith.constant 1 : index
    %c0_88 = arith.constant 0 : index
    %c0_89 = arith.constant 0 : index
    %180 = vector.load %arg9[%c1_87, %c0_88, %c0_89] : memref<2x1x128xf32, #tpu.memory_space<vmem>>, vector<1x1x128xf32>
    %181 = vector.shape_cast %180 : vector<1x1x128xf32> to vector<1x128xf32>
    %c1_90 = arith.constant 1 : index
    %c0_91 = arith.constant 0 : index
    %c0_92 = arith.constant 0 : index
    %182 = vector.load %arg10[%c1_90, %c0_91, %c0_92] : memref<2x1x128xf32, #tpu.memory_space<vmem>>, vector<1x1x128xf32>
    %183 = vector.shape_cast %182 : vector<1x1x128xf32> to vector<1x128xf32>
    %c1_93 = arith.constant 1 : index
    %c0_94 = arith.constant 0 : index
    %c0_95 = arith.constant 0 : index
    %184 = vector.load %arg11[%c1_93, %c0_94, %c0_95] : memref<2x1x128xf32, #tpu.memory_space<vmem>>, vector<1x1x128xf32>
    %185 = vector.shape_cast %184 : vector<1x1x128xf32> to vector<1x128xf32>
    %c1_96 = arith.constant 1 : index
    %c0_97 = arith.constant 0 : index
    %c0_98 = arith.constant 0 : index
    %186 = vector.load %arg12[%c1_96, %c0_97, %c0_98] : memref<2x128x512xbf16, #tpu.memory_space<vmem>>, vector<1x128x512xbf16>
    %187 = vector.shape_cast %186 : vector<1x128x512xbf16> to vector<128x512xbf16>
    %c1_99 = arith.constant 1 : index
    %c0_100 = arith.constant 0 : index
    %c0_101 = arith.constant 0 : index
    %188 = vector.load %arg13[%c1_99, %c0_100, %c0_101] : memref<2x1x512xf32, #tpu.memory_space<vmem>>, vector<1x1x512xf32>
    %189 = vector.shape_cast %188 : vector<1x1x512xf32> to vector<1x512xf32>
    %c1_102 = arith.constant 1 : index
    %c0_103 = arith.constant 0 : index
    %c0_104 = arith.constant 0 : index
    %190 = vector.load %arg14[%c1_102, %c0_103, %c0_104] : memref<2x512x128xbf16, #tpu.memory_space<vmem>>, vector<1x512x128xbf16>
    %191 = vector.shape_cast %190 : vector<1x512x128xbf16> to vector<512x128xbf16>
    %c1_105 = arith.constant 1 : index
    %c0_106 = arith.constant 0 : index
    %c0_107 = arith.constant 0 : index
    %192 = vector.load %arg15[%c1_105, %c0_106, %c0_107] : memref<2x1x128xf32, #tpu.memory_space<vmem>>, vector<1x1x128xf32>
    %193 = vector.shape_cast %192 : vector<1x1x128xf32> to vector<1x128xf32>
    %cst_108 = arith.constant dense<0.000000e+00> : vector<8xf32>
    %194 = vector.multi_reduction <add>, %169, %cst_108 [1] : vector<8x128xf32> to vector<8xf32>
    %195 = vector.shape_cast %194 : vector<8xf32> to vector<8x1xf32>
    %cst_109 = arith.constant 1.280000e+02 : f32
    %196 = vector.broadcast %cst_109 : f32 to vector<8x1xf32>
    %197 = arith.divf %195, %196 : vector<8x1xf32>
    %198 = vector.broadcast %197 : vector<8x1xf32> to vector<8x128xf32>
    %199 = arith.subf %169, %198 : vector<8x128xf32>
    %200 = vector.broadcast %197 : vector<8x1xf32> to vector<8x128xf32>
    %201 = arith.subf %169, %200 : vector<8x128xf32>
    %202 = arith.mulf %199, %201 : vector<8x128xf32>
    %cst_110 = arith.constant dense<0.000000e+00> : vector<8xf32>
    %203 = vector.multi_reduction <add>, %202, %cst_110 [1] : vector<8x128xf32> to vector<8xf32>
    %204 = vector.shape_cast %203 : vector<8xf32> to vector<8x1xf32>
    %cst_111 = arith.constant 1.280000e+02 : f32
    %205 = vector.broadcast %cst_111 : f32 to vector<8x1xf32>
    %206 = arith.divf %204, %205 : vector<8x1xf32>
    %207 = vector.broadcast %197 : vector<8x1xf32> to vector<8x128xf32>
    %208 = arith.subf %169, %207 : vector<8x128xf32>
    %cst_112 = arith.constant 9.99999974E-6 : f32
    %209 = vector.broadcast %cst_112 : f32 to vector<8x1xf32>
    %210 = arith.addf %206, %209 : vector<8x1xf32>
    %211 = math.rsqrt %210 : vector<8x1xf32>
    %212 = vector.broadcast %211 : vector<8x1xf32> to vector<8x128xf32>
    %213 = arith.mulf %208, %212 : vector<8x128xf32>
    %214 = vector.broadcast %171 : vector<1x128xf32> to vector<8x128xf32>
    %215 = arith.mulf %213, %214 : vector<8x128xf32>
    %216 = vector.broadcast %173 : vector<1x128xf32> to vector<8x128xf32>
    %217 = arith.addf %215, %216 : vector<8x128xf32>
    %218 = arith.truncf %217 : vector<8x128xf32> to vector<8x128xbf16>
    %cst_113 = arith.constant dense<0.000000e+00> : vector<8x384xf32>
    %219 = tpu.matmul %218, %175, %cst_113 {dimension_numbers = #tpu.dot_dimension_numbers<[1], [0], [0], [1], [0, 0, 1, 1], [], []>} : vector<8x128xbf16>, vector<128x384xbf16>, vector<8x384xf32> -> vector<8x384xf32>
    %220 = vector.broadcast %177 : vector<1x384xf32> to vector<8x384xf32>
    %221 = arith.addf %219, %220 : vector<8x384xf32>
    %222 = vector.extract_strided_slice %221 {offsets = [0, 0], sizes = [8, 128], strides = [1, 1]} : vector<8x384xf32> to vector<8x128xf32>
    %223 = vector.extract_strided_slice %222 {offsets = [0, 0], sizes = [8, 32], strides = [1, 1]} : vector<8x128xf32> to vector<8x32xf32>
    %224 = vector.extract_strided_slice %222 {offsets = [0, 32], sizes = [8, 32], strides = [1, 1]} : vector<8x128xf32> to vector<8x32xf32>
    %225 = vector.extract_strided_slice %222 {offsets = [0, 64], sizes = [8, 32], strides = [1, 1]} : vector<8x128xf32> to vector<8x32xf32>
    %226 = vector.extract_strided_slice %222 {offsets = [0, 96], sizes = [8, 32], strides = [1, 1]} : vector<8x128xf32> to vector<8x32xf32>
    %227 = vector.shape_cast %223 : vector<8x32xf32> to vector<1x8x32xf32>
    %228 = vector.shape_cast %224 : vector<8x32xf32> to vector<1x8x32xf32>
    %229 = vector.shape_cast %225 : vector<8x32xf32> to vector<1x8x32xf32>
    %230 = vector.shape_cast %226 : vector<8x32xf32> to vector<1x8x32xf32>
    %231 = tpu.concatenate %227, %228, %229, %230 in 0 : vector<1x8x32xf32>, vector<1x8x32xf32>, vector<1x8x32xf32>, vector<1x8x32xf32> -> vector<4x8x32xf32>
    %232 = vector.extract_strided_slice %221 {offsets = [0, 128], sizes = [8, 128], strides = [1, 1]} : vector<8x384xf32> to vector<8x128xf32>
    %233 = vector.extract_strided_slice %232 {offsets = [0, 0], sizes = [8, 32], strides = [1, 1]} : vector<8x128xf32> to vector<8x32xf32>
    %234 = vector.extract_strided_slice %232 {offsets = [0, 32], sizes = [8, 32], strides = [1, 1]} : vector<8x128xf32> to vector<8x32xf32>
    %235 = vector.extract_strided_slice %232 {offsets = [0, 64], sizes = [8, 32], strides = [1, 1]} : vector<8x128xf32> to vector<8x32xf32>
    %236 = vector.extract_strided_slice %232 {offsets = [0, 96], sizes = [8, 32], strides = [1, 1]} : vector<8x128xf32> to vector<8x32xf32>
    %237 = vector.shape_cast %233 : vector<8x32xf32> to vector<1x8x32xf32>
    %238 = vector.shape_cast %234 : vector<8x32xf32> to vector<1x8x32xf32>
    %239 = vector.shape_cast %235 : vector<8x32xf32> to vector<1x8x32xf32>
    %240 = vector.shape_cast %236 : vector<8x32xf32> to vector<1x8x32xf32>
    %241 = tpu.concatenate %237, %238, %239, %240 in 0 : vector<1x8x32xf32>, vector<1x8x32xf32>, vector<1x8x32xf32>, vector<1x8x32xf32> -> vector<4x8x32xf32>
    %242 = vector.extract_strided_slice %221 {offsets = [0, 256], sizes = [8, 128], strides = [1, 1]} : vector<8x384xf32> to vector<8x128xf32>
    %243 = vector.extract_strided_slice %242 {offsets = [0, 0], sizes = [8, 32], strides = [1, 1]} : vector<8x128xf32> to vector<8x32xf32>
    %244 = vector.extract_strided_slice %242 {offsets = [0, 32], sizes = [8, 32], strides = [1, 1]} : vector<8x128xf32> to vector<8x32xf32>
    %245 = vector.extract_strided_slice %242 {offsets = [0, 64], sizes = [8, 32], strides = [1, 1]} : vector<8x128xf32> to vector<8x32xf32>
    %246 = vector.extract_strided_slice %242 {offsets = [0, 96], sizes = [8, 32], strides = [1, 1]} : vector<8x128xf32> to vector<8x32xf32>
    %247 = vector.shape_cast %243 : vector<8x32xf32> to vector<1x8x32xf32>
    %248 = vector.shape_cast %244 : vector<8x32xf32> to vector<1x8x32xf32>
    %249 = vector.shape_cast %245 : vector<8x32xf32> to vector<1x8x32xf32>
    %250 = vector.shape_cast %246 : vector<8x32xf32> to vector<1x8x32xf32>
    %251 = tpu.concatenate %247, %248, %249, %250 in 0 : vector<1x8x32xf32>, vector<1x8x32xf32>, vector<1x8x32xf32>, vector<1x8x32xf32> -> vector<4x8x32xf32>
    "tpu.trace_start"() <{level = 10 : i32, message = "hqd,hkd->hqk"}> : () -> ()
    %cst_114 = arith.constant dense<0.000000e+00> : vector<4x8x8xf32>
    %252 = tpu.matmul %231, %241, %cst_114 {dimension_numbers = #tpu.dot_dimension_numbers<[2], [2], [1], [1], [0, 0, 0, 1, 1, 1], [0], [0]>} : vector<4x8x32xf32>, vector<4x8x32xf32>, vector<4x8x8xf32> -> vector<4x8x8xf32>
    "tpu.trace_stop"() : () -> ()
    %cst_115 = arith.constant 0.176776692 : f32
    %253 = vector.broadcast %cst_115 : f32 to vector<4x8x8xf32>
    %254 = arith.mulf %252, %253 : vector<4x8x8xf32>
    %255 = vector.shape_cast %6 : vector<8x8xf32> to vector<1x8x8xf32>
    %256 = vector.broadcast %255 : vector<1x8x8xf32> to vector<4x8x8xf32>
    %257 = arith.addf %254, %256 : vector<4x8x8xf32>
    %cst_116 = arith.constant dense<0xFF800000> : vector<4x8xf32>
    %258 = vector.multi_reduction <maximumf>, %257, %cst_116 [2] : vector<4x8x8xf32> to vector<4x8xf32>
    %259 = vector.shape_cast %258 : vector<4x8xf32> to vector<4x8x1xf32>
    %260 = vector.broadcast %259 : vector<4x8x1xf32> to vector<4x8x8xf32>
    %261 = arith.subf %257, %260 : vector<4x8x8xf32>
    %262 = math.exp %261 : vector<4x8x8xf32>
    %cst_117 = arith.constant dense<0.000000e+00> : vector<4x8xf32>
    %263 = vector.multi_reduction <add>, %262, %cst_117 [2] : vector<4x8x8xf32> to vector<4x8xf32>
    %264 = vector.shape_cast %263 : vector<4x8xf32> to vector<4x8x1xf32>
    %265 = tpu.reciprocal %264 {approx = true} : vector<4x8x1xf32> -> vector<4x8x1xf32>
    %266 = vector.broadcast %265 : vector<4x8x1xf32> to vector<4x8x8xf32>
    %267 = arith.mulf %262, %266 : vector<4x8x8xf32>
    "tpu.trace_start"() <{level = 10 : i32, message = "hqk,hkd->hqd"}> : () -> ()
    %cst_118 = arith.constant dense<0.000000e+00> : vector<4x8x32xf32>
    %268 = tpu.matmul %267, %251, %cst_118 {dimension_numbers = #tpu.dot_dimension_numbers<[2], [1], [1], [2], [0, 0, 0, 1, 1, 2], [0], [0]>} : vector<4x8x8xf32>, vector<4x8x32xf32>, vector<4x8x32xf32> -> vector<4x8x32xf32>
    "tpu.trace_stop"() : () -> ()
    %269 = vector.extract_strided_slice %268 {offsets = [0, 0, 0], sizes = [1, 8, 32], strides = [1, 1, 1]} : vector<4x8x32xf32> to vector<1x8x32xf32>
    %270 = vector.shape_cast %269 : vector<1x8x32xf32> to vector<8x32xf32>
    %c0_119 = arith.constant 0 : index
    %c0_120 = arith.constant 0 : index
    %271 = vector.load %arg19[%c0_119, %c0_120] : memref<8x128xf32, #tpu.memory_space<vmem>>, vector<8x32xf32>
    tpu.vector_store %arg19[%c0_119, %c0_120], %270 {strides = array<i32>} : memref<8x128xf32, #tpu.memory_space<vmem>>, vector<8x32xf32>,
    %272 = vector.extract_strided_slice %268 {offsets = [1, 0, 0], sizes = [1, 8, 32], strides = [1, 1, 1]} : vector<4x8x32xf32> to vector<1x8x32xf32>
    %273 = vector.shape_cast %272 : vector<1x8x32xf32> to vector<8x32xf32>
    %c0_121 = arith.constant 0 : index
    %c32_122 = arith.constant 32 : index
    %274 = vector.load %arg19[%c0_121, %c32_122] : memref<8x128xf32, #tpu.memory_space<vmem>>, vector<8x32xf32>
    tpu.vector_store %arg19[%c0_121, %c32_122], %273 {strides = array<i32>} : memref<8x128xf32, #tpu.memory_space<vmem>>, vector<8x32xf32>,
    %275 = vector.extract_strided_slice %268 {offsets = [2, 0, 0], sizes = [1, 8, 32], strides = [1, 1, 1]} : vector<4x8x32xf32> to vector<1x8x32xf32>
    %276 = vector.shape_cast %275 : vector<1x8x32xf32> to vector<8x32xf32>
    %c0_123 = arith.constant 0 : index
    %c64_124 = arith.constant 64 : index
    %277 = vector.load %arg19[%c0_123, %c64_124] : memref<8x128xf32, #tpu.memory_space<vmem>>, vector<8x32xf32>
    tpu.vector_store %arg19[%c0_123, %c64_124], %276 {strides = array<i32>} : memref<8x128xf32, #tpu.memory_space<vmem>>, vector<8x32xf32>,
    %278 = vector.extract_strided_slice %268 {offsets = [3, 0, 0], sizes = [1, 8, 32], strides = [1, 1, 1]} : vector<4x8x32xf32> to vector<1x8x32xf32>
    %279 = vector.shape_cast %278 : vector<1x8x32xf32> to vector<8x32xf32>
    %c0_125 = arith.constant 0 : index
    %c96_126 = arith.constant 96 : index
    %280 = vector.load %arg19[%c0_125, %c96_126] : memref<8x128xf32, #tpu.memory_space<vmem>>, vector<8x32xf32>
    tpu.vector_store %arg19[%c0_125, %c96_126], %279 {strides = array<i32>} : memref<8x128xf32, #tpu.memory_space<vmem>>, vector<8x32xf32>,
    %c0_127 = arith.constant 0 : index
    %c0_128 = arith.constant 0 : index
    %281 = vector.load %arg19[%c0_127, %c0_128] : memref<8x128xf32, #tpu.memory_space<vmem>>, vector<8x128xf32>
    %282 = arith.truncf %281 : vector<8x128xf32> to vector<8x128xbf16>
    %cst_129 = arith.constant dense<0.000000e+00> : vector<8x128xf32>
    %283 = tpu.matmul %282, %179, %cst_129 {dimension_numbers = #tpu.dot_dimension_numbers<[1], [0], [0], [1], [0, 0, 1, 1], [], []>} : vector<8x128xbf16>, vector<128x128xbf16>, vector<8x128xf32> -> vector<8x128xf32>
    %284 = vector.broadcast %181 : vector<1x128xf32> to vector<8x128xf32>
    %285 = arith.addf %283, %284 : vector<8x128xf32>
    %286 = arith.addf %169, %285 : vector<8x128xf32>
    %cst_130 = arith.constant dense<0.000000e+00> : vector<8xf32>
    %287 = vector.multi_reduction <add>, %286, %cst_130 [1] : vector<8x128xf32> to vector<8xf32>
    %288 = vector.shape_cast %287 : vector<8xf32> to vector<8x1xf32>
    %cst_131 = arith.constant 1.280000e+02 : f32
    %289 = vector.broadcast %cst_131 : f32 to vector<8x1xf32>
    %290 = arith.divf %288, %289 : vector<8x1xf32>
    %291 = vector.broadcast %290 : vector<8x1xf32> to vector<8x128xf32>
    %292 = arith.subf %286, %291 : vector<8x128xf32>
    %293 = vector.broadcast %290 : vector<8x1xf32> to vector<8x128xf32>
    %294 = arith.subf %286, %293 : vector<8x128xf32>
    %295 = arith.mulf %292, %294 : vector<8x128xf32>
    %cst_132 = arith.constant dense<0.000000e+00> : vector<8xf32>
    %296 = vector.multi_reduction <add>, %295, %cst_132 [1] : vector<8x128xf32> to vector<8xf32>
    %297 = vector.shape_cast %296 : vector<8xf32> to vector<8x1xf32>
    %cst_133 = arith.constant 1.280000e+02 : f32
    %298 = vector.broadcast %cst_133 : f32 to vector<8x1xf32>
    %299 = arith.divf %297, %298 : vector<8x1xf32>
    %300 = vector.broadcast %290 : vector<8x1xf32> to vector<8x128xf32>
    %301 = arith.subf %286, %300 : vector<8x128xf32>
    %cst_134 = arith.constant 9.99999974E-6 : f32
    %302 = vector.broadcast %cst_134 : f32 to vector<8x1xf32>
    %303 = arith.addf %299, %302 : vector<8x1xf32>
    %304 = math.rsqrt %303 : vector<8x1xf32>
    %305 = vector.broadcast %304 : vector<8x1xf32> to vector<8x128xf32>
    %306 = arith.mulf %301, %305 : vector<8x128xf32>
    %307 = vector.broadcast %183 : vector<1x128xf32> to vector<8x128xf32>
    %308 = arith.mulf %306, %307 : vector<8x128xf32>
    %309 = vector.broadcast %185 : vector<1x128xf32> to vector<8x128xf32>
    %310 = arith.addf %308, %309 : vector<8x128xf32>
    %311 = arith.truncf %310 : vector<8x128xf32> to vector<8x128xbf16>
    %cst_135 = arith.constant dense<0.000000e+00> : vector<8x512xf32>
    %312 = tpu.matmul %311, %187, %cst_135 {dimension_numbers = #tpu.dot_dimension_numbers<[1], [0], [0], [1], [0, 0, 1, 1], [], []>} : vector<8x128xbf16>, vector<128x512xbf16>, vector<8x512xf32> -> vector<8x512xf32>
    %313 = vector.broadcast %189 : vector<1x512xf32> to vector<8x512xf32>
    %314 = arith.addf %312, %313 : vector<8x512xf32>
    %315 = arith.mulf %314, %314 : vector<8x512xf32>
    %316 = arith.mulf %314, %315 : vector<8x512xf32>
    %cst_136 = arith.constant 4.471500e-02 : f32
    %317 = vector.broadcast %cst_136 : f32 to vector<8x512xf32>
    %318 = arith.mulf %317, %316 : vector<8x512xf32>
    %319 = arith.addf %314, %318 : vector<8x512xf32>
    %cst_137 = arith.constant 0.797884583 : f32
    %320 = vector.broadcast %cst_137 : f32 to vector<8x512xf32>
    %321 = arith.mulf %320, %319 : vector<8x512xf32>
    %322 = math.tanh %321 : vector<8x512xf32>
    %cst_138 = arith.constant 1.000000e+00 : f32
    %323 = vector.broadcast %cst_138 : f32 to vector<8x512xf32>
    %324 = arith.addf %323, %322 : vector<8x512xf32>
    %cst_139 = arith.constant 5.000000e-01 : f32
    %325 = vector.broadcast %cst_139 : f32 to vector<8x512xf32>
    %326 = arith.mulf %325, %324 : vector<8x512xf32>
    %327 = arith.mulf %314, %326 : vector<8x512xf32>
    %328 = arith.truncf %327 : vector<8x512xf32> to vector<8x512xbf16>
    %cst_140 = arith.constant dense<0.000000e+00> : vector<8x128xf32>
    %329 = tpu.matmul %328, %191, %cst_140 {dimension_numbers = #tpu.dot_dimension_numbers<[1], [0], [0], [1], [0, 0, 1, 1], [], []>} : vector<8x512xbf16>, vector<512x128xbf16>, vector<8x128xf32> -> vector<8x128xf32>
    %330 = vector.broadcast %193 : vector<1x128xf32> to vector<8x128xf32>
    %331 = arith.addf %329, %330 : vector<8x128xf32>
    %332 = arith.addf %286, %331 : vector<8x128xf32>
    %c0_141 = arith.constant 0 : index
    %c0_142 = arith.constant 0 : index
    %333 = vector.load %arg16[%c0_141, %c0_142] : memref<1x128xf32, #tpu.memory_space<vmem>>, vector<1x128xf32>
    %c0_143 = arith.constant 0 : index
    %c0_144 = arith.constant 0 : index
    %334 = vector.load %arg17[%c0_143, %c0_144] : memref<1x128xf32, #tpu.memory_space<vmem>>, vector<1x128xf32>
    %cst_145 = arith.constant dense<0.000000e+00> : vector<8xf32>
    %335 = vector.multi_reduction <add>, %332, %cst_145 [1] : vector<8x128xf32> to vector<8xf32>
    %336 = vector.shape_cast %335 : vector<8xf32> to vector<8x1xf32>
    %cst_146 = arith.constant 1.280000e+02 : f32
    %337 = vector.broadcast %cst_146 : f32 to vector<8x1xf32>
    %338 = arith.divf %336, %337 : vector<8x1xf32>
    %339 = vector.broadcast %338 : vector<8x1xf32> to vector<8x128xf32>
    %340 = arith.subf %332, %339 : vector<8x128xf32>
    %341 = vector.broadcast %338 : vector<8x1xf32> to vector<8x128xf32>
    %342 = arith.subf %332, %341 : vector<8x128xf32>
    %343 = arith.mulf %340, %342 : vector<8x128xf32>
    %cst_147 = arith.constant dense<0.000000e+00> : vector<8xf32>
    %344 = vector.multi_reduction <add>, %343, %cst_147 [1] : vector<8x128xf32> to vector<8xf32>
    %345 = vector.shape_cast %344 : vector<8xf32> to vector<8x1xf32>
    %cst_148 = arith.constant 1.280000e+02 : f32
    %346 = vector.broadcast %cst_148 : f32 to vector<8x1xf32>
    %347 = arith.divf %345, %346 : vector<8x1xf32>
    %348 = vector.broadcast %338 : vector<8x1xf32> to vector<8x128xf32>
    %349 = arith.subf %332, %348 : vector<8x128xf32>
    %cst_149 = arith.constant 9.99999974E-6 : f32
    %350 = vector.broadcast %cst_149 : f32 to vector<8x1xf32>
    %351 = arith.addf %347, %350 : vector<8x1xf32>
    %352 = math.rsqrt %351 : vector<8x1xf32>
    %353 = vector.broadcast %352 : vector<8x1xf32> to vector<8x128xf32>
    %354 = arith.mulf %349, %353 : vector<8x128xf32>
    %355 = vector.broadcast %333 : vector<1x128xf32> to vector<8x128xf32>
    %356 = arith.mulf %354, %355 : vector<8x128xf32>
    %357 = vector.broadcast %334 : vector<1x128xf32> to vector<8x128xf32>
    %358 = arith.addf %356, %357 : vector<8x128xf32>
    %c0_150 = arith.constant 0 : index
    %c0_151 = arith.constant 0 : index
    %359 = vector.load %arg18[%c0_150, %c0_151] : memref<8x128xf32, #tpu.memory_space<vmem>>, vector<8x128xf32>
    tpu.vector_store %arg18[%c0_150, %c0_151], %358 {strides = array<i32>} : memref<8x128xf32, #tpu.memory_space<vmem>>, vector<8x128xf32>,
    return
  }
}

</mosaic_0001>

<llo_original>
// kernel: vit_forward.1
$region0: #{vit_forward.1}
  #allocation0 [shape = 'u32[]', space=smem, size = 0x4, offset = 0x4, fixed_abs, tag = 'smem constant byte address 0x4 - core index']
  #allocation1 [shape = 'u32[144,128]{1,0:T(1,128)}', space=vmem, size = 0x12000, scoped, tag = 'internal scratch']
  #allocation2 [shape = 'f32[8,128]{1,0:T(8,128)}', space=vmem, size = 0x1000, scoped, tag = 'scratch operand']
  %s0 = inlined_call_operand.vmem [shape: f32[8,256], index: 0, kind: input, shape index: {}]
  %s1 = inlined_call_operand.vmem [shape: f32[8,128], index: 1, kind: input, shape index: {}]
  %s2 = inlined_call_operand.vmem [shape: f32[8,8], index: 2, kind: input, shape index: {}]
  %s3 = inlined_call_operand.vmem [shape: bf16[256,128], index: 3, kind: input, shape index: {}]
  %s4 = inlined_call_operand.vmem [shape: f32[2,1,128], index: 4, kind: input, shape index: {}]
  %s5 = inlined_call_operand.vmem [shape: f32[2,1,128], index: 5, kind: input, shape index: {}]
  %s6 = inlined_call_operand.hbm [shape: bf16[2,128,384], index: 6, kind: input, shape index: {}]
  %s7 = inlined_call_operand.vmem [shape: f32[2,1,384], index: 7, kind: input, shape index: {}]
  %s8 = inlined_call_operand.hbm [shape: bf16[2,128,128], index: 8, kind: input, shape index: {}]
  %s9 = inlined_call_operand.vmem [shape: f32[2,1,128], index: 9, kind: input, shape index: {}]
  %s10 = inlined_call_operand.vmem [shape: f32[2,1,128], index: 10, kind: input, shape index: {}]
  %s11 = inlined_call_operand.vmem [shape: f32[2,1,128], index: 11, kind: input, shape index: {}]
  %s12 = inlined_call_operand.vmem [shape: bf16[2,128,512], index: 12, kind: input, shape index: {}]
  %s13 = inlined_call_operand.vmem [shape: f32[2,1,512], index: 13, kind: input, shape index: {}]
  %s14 = inlined_call_operand.vmem [shape: bf16[2,512,128], index: 14, kind: input, shape index: {}]
  %s15 = inlined_call_operand.vmem [shape: f32[2,1,128], index: 15, kind: input, shape index: {}]
  %s16 = inlined_call_operand.vmem [shape: f32[1,128], index: 16, kind: input, shape index: {}]
  %s17 = inlined_call_operand.vmem [shape: f32[1,128], index: 17, kind: input, shape index: {}]
  %s18 = inlined_call_operand.hbm [shape: f32[8,128], index: 18, kind: output, shape index: {}]
  %s19 = sld [smem:[#allocation0]]
  $region90: #{vit_forward.1} parent=0
    _
  %s21 = ssub.s32 1, %s19
  %s22 = scalar_select 0, %s21, %s19
  $region1: #{vit_forward.1} parent=0
    #allocation3 [shape = 'u8[196608]{0}', space=vmem, size = 0x30000, scoped, tag = 'input window, operand 6, single buffered']
    #allocation4 [shape = 's32[1]{0}', space=sflag, size = 0x4, scoped, tag = 'scoped memory for vit_forward.1']
    #allocation5 [shape = 's32[1]{0}', space=sflag, size = 0x4, scoped, tag = 'scoped memory for vit_forward.1']
    #allocation6 [shape = 'u8[65536]{0}', space=vmem, size = 0x10000, scoped, tag = 'input window, operand 8, single buffered']
    #allocation7 [shape = 's32[1]{0}', space=sflag, size = 0x4, scoped, tag = 'scoped memory for vit_forward.1']
    #allocation8 [shape = 'u8[4096]{0}', space=vmem, size = 0x1000, scoped, tag = 'output window, operand 0, single buffered']
    %23 = vsyncpa [#allocation4], 0
    %24 = vsyncpa [#allocation7], 0
    %25 = vsyncpa [#allocation5], 0
    // Predicated region
    $region2: #{vit_forward.1} parent=1 // pred_check
      _
    $region3: #{vit_forward.1} parent=1 // pred_check_branch
      %27 = sbr.rel (0) target = $region5
    $region4: #{vit_forward.1} parent=1 // pred_region
      _
    $region5: #{vit_forward.1} parent=1 // pred_fallthru
      _
    // Predicated region
    $region6: #{vit_forward.1} parent=1 // pred_check
      _
    $region7: #{vit_forward.1} parent=1 // pred_check_branch
      %29 = sbr.rel (0) target = $region9
    $region8: #{vit_forward.1} parent=1 // pred_region
      _
    $region9: #{vit_forward.1} parent=1 // pred_fallthru
      _
    // Predicated region
    $region10: #{vit_forward.1} parent=1 // pred_check
      _
    $region11: #{vit_forward.1} parent=1 // pred_check_branch
      %31 = sbr.rel (0) target = $region13
    $region12: #{vit_forward.1} parent=1 // pred_region
      _
    $region13: #{vit_forward.1} parent=1 // pred_fallthru
      _
    // Predicated region
    $region14: #{vit_forward.1} parent=1 // pred_check
      _
    $region15: #{vit_forward.1} parent=1 // pred_check_branch
      %33 = sbr.rel (0) target = $region17
    $region16: #{vit_forward.1} parent=1 // pred_region
      _
    $region17: #{vit_forward.1} parent=1 // pred_fallthru
      _
    // Predicated region
    $region18: #{vit_forward.1} parent=1 // pred_check
      _
    $region19: #{vit_forward.1} parent=1 // pred_check_branch
      %35 = sbr.rel (0) target = $region21
    $region20: #{vit_forward.1} parent=1 // pred_region
      _
    $region21: #{vit_forward.1} parent=1 // pred_fallthru
      _
    // Predicated region
    $region22: #{vit_forward.1} parent=1 // pred_check
      _
    $region23: #{vit_forward.1} parent=1 // pred_check_branch
      %37 = sbr.rel (0) target = $region25
    $region24: #{vit_forward.1} parent=1 // pred_region
      _
    $region25: #{vit_forward.1} parent=1 // pred_fallthru
      _
    // Predicated region
    $region26: #{vit_forward.1} parent=1 // pred_check
      _
    $region27: #{vit_forward.1} parent=1 // pred_check_branch
      %39 = sbr.rel (0) target = $region29
    $region28: #{vit_forward.1} parent=1 // pred_region
      %s41 = ssub.s32 6144, 6144
      %42 = vsyncadd [#allocation4], %s41
      %s43 = sshll.u32 [#allocation3], 4
      %s44 = int_to_ptr.vmem [resolvable:$true] %s43
      %49 = dma.hbm_to_vmem [thread:$0]  %s6, 6144, %s44, [#allocation4], 192, 192, 12
    $region29: #{vit_forward.1} parent=1 // pred_fallthru
      _
    // Predicated region
    $region30: #{vit_forward.1} parent=1 // pred_check
      _
    $region31: #{vit_forward.1} parent=1 // pred_check_branch
      %51 = sbr.rel (0) target = $region33
    $region32: #{vit_forward.1} parent=1 // pred_region
      _
    $region33: #{vit_forward.1} parent=1 // pred_fallthru
      _
    // Predicated region
    $region34: #{vit_forward.1} parent=1 // pred_check
      _
    $region35: #{vit_forward.1} parent=1 // pred_check_branch
      %53 = sbr.rel (0) target = $region37
    $region36: #{vit_forward.1} parent=1 // pred_region
      %s55 = ssub.s32 2048, 2048
      %56 = vsyncadd [#allocation7], %s55
      %s57 = sshll.u32 [#allocation6], 4
      %s58 = int_to_ptr.vmem [resolvable:$true] %s57
      %63 = dma.hbm_to_vmem [thread:$0]  %s8, 2048, %s58, [#allocation7], 64, 64, 4
    $region37: #{vit_forward.1} parent=1 // pred_fallthru
      _
    // Predicated region
    $region38: #{vit_forward.1} parent=1 // pred_check
      _
    $region39: #{vit_forward.1} parent=1 // pred_check_branch
      %65 = sbr.rel (0) target = $region41
    $region40: #{vit_forward.1} parent=1 // pred_region
      _
    $region41: #{vit_forward.1} parent=1 // pred_fallthru
      _
    // Predicated region
    $region42: #{vit_forward.1} parent=1 // pred_check
      _
    $region43: #{vit_forward.1} parent=1 // pred_check_branch
      %67 = sbr.rel (0) target = $region45
    $region44: #{vit_forward.1} parent=1 // pred_region
      _
    $region45: #{vit_forward.1} parent=1 // pred_fallthru
      _
    // Predicated region
    $region46: #{vit_forward.1} parent=1 // pred_check
      _
    $region47: #{vit_forward.1} parent=1 // pred_check_branch
      %69 = sbr.rel (0) target = $region49
    $region48: #{vit_forward.1} parent=1 // pred_region
      _
    $region49: #{vit_forward.1} parent=1 // pred_fallthru
      _
    // Predicated region
    $region50: #{vit_forward.1} parent=1 // pred_check
      _
    $region51: #{vit_forward.1} parent=1 // pred_check_branch
      %71 = sbr.rel (0) target = $region53
    $region52: #{vit_forward.1} parent=1 // pred_region
      _
    $region53: #{vit_forward.1} parent=1 // pred_fallthru
      _
    // Predicated region
    $region54: #{vit_forward.1} parent=1 // pred_check
      _
    $region55: #{vit_forward.1} parent=1 // pred_check_branch
      %73 = sbr.rel (0) target = $region57
    $region56: #{vit_forward.1} parent=1 // pred_region
      _
    $region57: #{vit_forward.1} parent=1 // pred_fallthru
      _
    // Predicated region
    $region58: #{vit_forward.1} parent=1 // pred_check
      _
    $region59: #{vit_forward.1} parent=1 // pred_check_branch
      %75 = sbr.rel (0) target = $region61
    $region60: #{vit_forward.1} parent=1 // pred_region
      _
    $region61: #{vit_forward.1} parent=1 // pred_fallthru
      _
    // Predicated region
    $region62: #{vit_forward.1} parent=1 // pred_check
      _
    $region63: #{vit_forward.1} parent=1 // pred_check_branch
      %77 = sbr.rel (0) target = $region65
    $region64: #{vit_forward.1} parent=1 // pred_region
      _
    $region65: #{vit_forward.1} parent=1 // pred_fallthru
      _
    // Predicated region
    $region66: #{vit_forward.1} parent=1 // pred_check
      _
    $region67: #{vit_forward.1} parent=1 // pred_check_branch
      %79 = sbr.rel (0) target = $region69
    $region68: #{vit_forward.1} parent=1 // pred_region
      _
    $region69: #{vit_forward.1} parent=1 // pred_fallthru
      _
    // Predicated region
    $region70: #{vit_forward.1} parent=1 // pred_check
      _
    $region71: #{vit_forward.1} parent=1 // pred_check_branch
      %81 = sbr.rel (0) target = $region73
    $region72: #{vit_forward.1} parent=1 // pred_region
      _
    $region73: #{vit_forward.1} parent=1 // pred_fallthru
      _
    // Predicated region
    $region74: #{vit_forward.1} parent=1 // pred_check
      _
    $region75: #{vit_forward.1} parent=1 // pred_check_branch
      %83 = sbr.rel (0) target = $region77
    $region76: #{vit_forward.1} parent=1 // pred_region
      %84 = dma.done [#allocation4], 6144
    $region77: #{vit_forward.1} parent=1 // pred_fallthru
      _
    // Predicated region
    $region78: #{vit_forward.1} parent=1 // pred_check
      _
    $region79: #{vit_forward.1} parent=1 // pred_check_branch
      %86 = sbr.rel (0) target = $region81
    $region80: #{vit_forward.1} parent=1 // pred_region
      %87 = dma.done [#allocation7], 2048
    $region81: #{vit_forward.1} parent=1 // pred_fallthru
      _
    %v89 = vld [vmem:[%s0] sm:$0xff]
    %v90 = vld [vmem:[%s0 + $0x8] sm:$0xff]
    %v91 = vpack.c.bf16 %v89, %v89
    %v92 = vpack.c.bf16 %v90, %v90
    %v93 = vld [vmem:[%s3] sm:$0xf]
    %v94 = vld [vmem:[%s3 + $0x4] sm:$0xf]
    %v95 = vld [vmem:[%s3 + $0x8] sm:$0xf]
    %v96 = vld [vmem:[%s3 + $0xc] sm:$0xf]
    %v97 = vld [vmem:[%s3 + $0x10] sm:$0xf]
    %v98 = vld [vmem:[%s3 + $0x14] sm:$0xf]
    %v99 = vld [vmem:[%s3 + $0x18] sm:$0xf]
    %v100 = vld [vmem:[%s3 + $0x1c] sm:$0xf]
    %v101 = vld [vmem:[%s3 + $0x20] sm:$0xf]
    %v102 = vld [vmem:[%s3 + $0x24] sm:$0xf]
    %v103 = vld [vmem:[%s3 + $0x28] sm:$0xf]
    %v104 = vld [vmem:[%s3 + $0x2c] sm:$0xf]
    %v105 = vld [vmem:[%s3 + $0x30] sm:$0xf]
    %v106 = vld [vmem:[%s3 + $0x34] sm:$0xf]
    %v107 = vld [vmem:[%s3 + $0x38] sm:$0xf]
    %v108 = vld [vmem:[%s3 + $0x3c] sm:$0xf]
    %v109 = vld [vmem:[%s3 + $0x40] sm:$0xf]
    %v110 = vld [vmem:[%s3 + $0x44] sm:$0xf]
    %v111 = vld [vmem:[%s3 + $0x48] sm:$0xf]
    %v112 = vld [vmem:[%s3 + $0x4c] sm:$0xf]
    %v113 = vld [vmem:[%s3 + $0x50] sm:$0xf]
    %v114 = vld [vmem:[%s3 + $0x54] sm:$0xf]
    %v115 = vld [vmem:[%s3 + $0x58] sm:$0xf]
    %v116 = vld [vmem:[%s3 + $0x5c] sm:$0xf]
    %v117 = vld [vmem:[%s3 + $0x60] sm:$0xf]
    %v118 = vld [vmem:[%s3 + $0x64] sm:$0xf]
    %v119 = vld [vmem:[%s3 + $0x68] sm:$0xf]
    %v120 = vld [vmem:[%s3 + $0x6c] sm:$0xf]
    %v121 = vld [vmem:[%s3 + $0x70] sm:$0xf]
    %v122 = vld [vmem:[%s3 + $0x74] sm:$0xf]
    %v123 = vld [vmem:[%s3 + $0x78] sm:$0xf]
    %v124 = vld [vmem:[%s3 + $0x7c] sm:$0xf]
    %v125 = vld [vmem:[%s1] sm:$0xff]
    %v158 = vunpack.c.l.b16 %v93
    %v159 = vunpack.c.l.b16 %v94
    %v160 = vunpack.c.l.b16 %v95
    %v161 = vunpack.c.l.b16 %v96
    %v162 = vunpack.c.l.b16 %v97
    %v163 = vunpack.c.l.b16 %v98
    %v164 = vunpack.c.l.b16 %v99
    %v165 = vunpack.c.l.b16 %v100
    %v166 = vunpack.c.l.b16 %v101
    %v167 = vunpack.c.l.b16 %v102
    %v168 = vunpack.c.l.b16 %v103
    %v169 = vunpack.c.l.b16 %v104
    %v170 = vunpack.c.l.b16 %v105
    %v171 = vunpack.c.l.b16 %v106
    %v172 = vunpack.c.l.b16 %v107
    %v173 = vunpack.c.l.b16 %v108
    %v174 = vunpack.c.l.b16 %v109
    %v175 = vunpack.c.l.b16 %v110
    %v176 = vunpack.c.l.b16 %v111
    %v177 = vunpack.c.l.b16 %v112
    %v178 = vunpack.c.l.b16 %v113
    %v179 = vunpack.c.l.b16 %v114
    %v180 = vunpack.c.l.b16 %v115
    %v181 = vunpack.c.l.b16 %v116
    %v182 = vunpack.c.l.b16 %v117
    %v183 = vunpack.c.l.b16 %v118
    %v184 = vunpack.c.l.b16 %v119
    %v185 = vunpack.c.l.b16 %v120
    %v186 = vunpack.c.l.b16 %v121
    %v187 = vunpack.c.l.b16 %v122
    %v188 = vunpack.c.l.b16 %v123
    %v189 = vunpack.c.l.b16 %v124
    %v190 = vpack.c.b16 %v159, %v158
    %v191 = vpack.c.b16 %v161, %v160
    %v192 = vpack.c.b16 %v163, %v162
    %v193 = vpack.c.b16 %v165, %v164
    %v194 = vpack.c.b16 %v167, %v166
    %v195 = vpack.c.b16 %v169, %v168
    %v196 = vpack.c.b16 %v171, %v170
    %v197 = vpack.c.b16 %v173, %v172
    %v198 = vpack.c.b16 %v175, %v174
    %v199 = vpack.c.b16 %v177, %v176
    %v200 = vpack.c.b16 %v179, %v178
    %v201 = vpack.c.b16 %v181, %v180
    %v202 = vpack.c.b16 %v183, %v182
    %v203 = vpack.c.b16 %v185, %v184
    %v204 = vpack.c.b16 %v187, %v186
    %v205 = vpack.c.b16 %v189, %v188
    %222 = vmatprep.subr.bf16.mxu0 0
    %223 = vmatpush1.bf16.msra.mxu0 %v197
    %224 = vmatprep.subr.bf16.mxu0 0
    %225 = vmatpush1.bf16.msra.mxu0 %v196
    %226 = vmatprep.subr.bf16.mxu0 0
    %227 = vmatpush1.bf16.msra.mxu0 %v195
    %228 = vmatprep.subr.bf16.mxu0 0
    %229 = vmatpush1.bf16.msra.mxu0 %v194
    %230 = vmatprep.subr.bf16.mxu0 0
    %231 = vmatpush1.bf16.msra.mxu0 %v193
    %232 = vmatprep.subr.bf16.mxu0 0
    %233 = vmatpush1.bf16.msra.mxu0 %v192
    %234 = vmatprep.subr.bf16.mxu0 0
    %235 = vmatpush1.bf16.msra.mxu0 %v191
    %236 = vmatprep.subr.bf16.mxu0 0
    %237 = vmatpush1.bf16.msra.mxu0 %v190
    %238 = vmatprep.subr.bf16.mxu0 0
    %239 = vmatpush2.bf16.msra.mxu0 %v205
    %240 = vmatprep.subr.bf16.mxu0 0
    %241 = vmatpush2.bf16.msra.mxu0 %v204
    %242 = vmatprep.subr.bf16.mxu0 0
    %243 = vmatpush2.bf16.msra.mxu0 %v203
    %244 = vmatprep.subr.bf16.mxu0 0
    %245 = vmatpush2.bf16.msra.mxu0 %v202
    %246 = vmatprep.subr.bf16.mxu0 0
    %247 = vmatpush2.bf16.msra.mxu0 %v201
    %248 = vmatprep.subr.bf16.mxu0 0
    %249 = vmatpush2.bf16.msra.mxu0 %v200
    %250 = vmatprep.subr.bf16.mxu0 0
    %251 = vmatpush2.bf16.msra.mxu0 %v199
    %252 = vmatprep.subr.bf16.mxu0 0
    %253 = vmatpush2.bf16.msra.mxu0 %v198
    %254 = vmatprep.mubr.bf16.mxu0 %v92
    %255 = vmatmul.mubr.bf16.gmra.mxu0 %v91
    %v256 = vpop.f32.mrf.mxu0
    %v257 = vadd.f32 %v125, %v256
    %v258 = vpop.f32.mrf.mxu0
    %v259 = vpop.f32.mrf.mxu0
    %v260 = vpop.f32.mrf.mxu0
    %261 = vdwg.mxu0
    %v262 = vld [vmem:[%s2] sm:$0xff]
    %v263 = vld [vmem:[%s4] sm:$0x1]
    %v264 = vld [vmem:[%s5] sm:$0x1]
    %v265 = vld [vmem:[#allocation3] sm:$0xff]
    %v266 = vld [vmem:[#allocation3 + $0x8] sm:$0xf]
    %v267 = vld [vmem:[#allocation3 + $0xc] sm:$0xff]
    %v268 = vld [vmem:[#allocation3 + $0x14] sm:$0xf]
    %v269 = vld [vmem:[#allocation3 + $0x18] sm:$0xff]
    %v270 = vld [vmem:[#allocation3 + $0x20] sm:$0xf]
    %v271 = vld [vmem:[#allocation3 + $0x24] sm:$0xff]
    %v272 = vld [vmem:[#allocation3 + $0x2c] sm:$0xf]
    %v273 = vld [vmem:[#allocation3 + $0x30] sm:$0xff]
    %v274 = vld [vmem:[#allocation3 + $0x38] sm:$0xf]
    %v275 = vld [vmem:[#allocation3 + $0x3c] sm:$0xff]
    %v276 = vld [vmem:[#allocation3 + $0x44] sm:$0xf]
    %v277 = vld [vmem:[#allocation3 + $0x48] sm:$0xff]
    %v278 = vld [vmem:[#allocation3 + $0x50] sm:$0xf]
    %v279 = vld [vmem:[#allocation3 + $0x54] sm:$0xff]
    %v280 = vld [vmem:[#allocation3 + $0x5c] sm:$0xf]
    %v281 = vld [vmem:[#allocation3 + $0x60] sm:$0xff]
    %v282 = vld [vmem:[#allocation3 + $0x68] sm:$0xf]
    %v283 = vld [vmem:[#allocation3 + $0x6c] sm:$0xff]
    %v284 = vld [vmem:[#allocation3 + $0x74] sm:$0xf]
    %v285 = vld [vmem:[#allocation3 + $0x78] sm:$0xff]
    %v286 = vld [vmem:[#allocation3 + $0x80] sm:$0xf]
    %v287 = vld [vmem:[#allocation3 + $0x84] sm:$0xff]
    %v288 = vld [vmem:[#allocation3 + $0x8c] sm:$0xf]
    %v289 = vld [vmem:[#allocation3 + $0x90] sm:$0xff]
    %v290 = vld [vmem:[#allocation3 + $0x98] sm:$0xf]
    %v291 = vld [vmem:[#allocation3 + $0x9c] sm:$0xff]
    %v292 = vld [vmem:[#allocation3 + $0xa4] sm:$0xf]
    %v293 = vld [vmem:[#allocation3 + $0xa8] sm:$0xff]
    %v294 = vld [vmem:[#allocation3 + $0xb0] sm:$0xf]
    %v295 = vld [vmem:[#allocation3 + $0xb4] sm:$0xff]
    %v296 = vld [vmem:[#allocation3 + $0xbc] sm:$0xf]
    %v297 = vld [vmem:[%s7] sm:$0x7]
    %v298 = vld [vmem:[#allocation6] sm:$0xf]
    %v299 = vld [vmem:[#allocation6 + $0x4] sm:$0xf]
    %v300 = vld [vmem:[#allocation6 + $0x8] sm:$0xf]
    %v301 = vld [vmem:[#allocation6 + $0xc] sm:$0xf]
    %v302 = vld [vmem:[#allocation6 + $0x10] sm:$0xf]
    %v303 = vld [vmem:[#allocation6 + $0x14] sm:$0xf]
    %v304 = vld [vmem:[#allocation6 + $0x18] sm:$0xf]
    %v305 = vld [vmem:[#allocation6 + $0x1c] sm:$0xf]
    %v306 = vld [vmem:[#allocation6 + $0x20] sm:$0xf]
    %v307 = vld [vmem:[#allocation6 + $0x24] sm:$0xf]
    %v308 = vld [vmem:[#allocation6 + $0x28] sm:$0xf]
    %v309 = vld [vmem:[#allocation6 + $0x2c] sm:$0xf]
    %v310 = vld [vmem:[#allocation6 + $0x30] sm:$0xf]
    %v311 = vld [vmem:[#allocation6 + $0x34] sm:$0xf]
    %v312 = vld [vmem:[#allocation6 + $0x38] sm:$0xf]
    %v313 = vld [vmem:[#allocation6 + $0x3c] sm:$0xf]
    %v314 = vld [vmem:[%s9] sm:$0x1]
    %v315 = vld [vmem:[%s10] sm:$0x1]
    %v316 = vld [vmem:[%s11] sm:$0x1]
    %v317 = vld [vmem:[%s12] sm:$0xff]
    %v318 = vld [vmem:[%s12 + $0x8] sm:$0xff]
    %v319 = vld [vmem:[%s12 + $0x10] sm:$0xff]
    %v320 = vld [vmem:[%s12 + $0x18] sm:$0xff]
    %v321 = vld [vmem:[%s12 + $0x20] sm:$0xff]
    %v322 = vld [vmem:[%s12 + $0x28] sm:$0xff]
    %v323 = vld [vmem:[%s12 + $0x30] sm:$0xff]
    %v324 = vld [vmem:[%s12 + $0x38] sm:$0xff]
    %v325 = vld [vmem:[%s12 + $0x40] sm:$0xff]
    %v326 = vld [vmem:[%s12 + $0x48] sm:$0xff]
    %v327 = vld [vmem:[%s12 + $0x50] sm:$0xff]
    %v328 = vld [vmem:[%s12 + $0x58] sm:$0xff]
    %v329 = vld [vmem:[%s12 + $0x60] sm:$0xff]
    %v330 = vld [vmem:[%s12 + $0x68] sm:$0xff]
    %v331 = vld [vmem:[%s12 + $0x70] sm:$0xff]
    %v332 = vld [vmem:[%s12 + $0x78] sm:$0xff]
    %v333 = vld [vmem:[%s12 + $0x80] sm:$0xff]
    %v334 = vld [vmem:[%s12 + $0x88] sm:$0xff]
    %v335 = vld [vmem:[%s12 + $0x90] sm:$0xff]
    %v336 = vld [vmem:[%s12 + $0x98] sm:$0xff]
    %v337 = vld [vmem:[%s12 + $0xa0] sm:$0xff]
    %v338 = vld [vmem:[%s12 + $0xa8] sm:$0xff]
    %v339 = vld [vmem:[%s12 + $0xb0] sm:$0xff]
    %v340 = vld [vmem:[%s12 + $0xb8] sm:$0xff]
    %v341 = vld [vmem:[%s12 + $0xc0] sm:$0xff]
    %v342 = vld [vmem:[%s12 + $0xc8] sm:$0xff]
    %v343 = vld [vmem:[%s12 + $0xd0] sm:$0xff]
    %v344 = vld [vmem:[%s12 + $0xd8] sm:$0xff]
    %v345 = vld [vmem:[%s12 + $0xe0] sm:$0xff]
    %v346 = vld [vmem:[%s12 + $0xe8] sm:$0xff]
    %v347 = vld [vmem:[%s12 + $0xf0] sm:$0xff]
    %v348 = vld [vmem:[%s12 + $0xf8] sm:$0xff]
    %v349 = vld [vmem:[%s13] sm:$0xf]
    %v350 = vld [vmem:[%s14] sm:$0xf]
    %v351 = vld [vmem:[%s14 + $0x4] sm:$0xf]
    %v352 = vld [vmem:[%s14 + $0x8] sm:$0xf]
    %v353 = vld [vmem:[%s14 + $0xc] sm:$0xf]
    %v354 = vld [vmem:[%s14 + $0x10] sm:$0xf]
    %v355 = vld [vmem:[%s14 + $0x14] sm:$0xf]
    %v356 = vld [vmem:[%s14 + $0x18] sm:$0xf]
    %v357 = vld [vmem:[%s14 + $0x1c] sm:$0xf]
    %v358 = vld [vmem:[%s14 + $0x20] sm:$0xf]
    %v359 = vld [vmem:[%s14 + $0x24] sm:$0xf]
    %v360 = vld [vmem:[%s14 + $0x28] sm:$0xf]
    %v361 = vld [vmem:[%s14 + $0x2c] sm:$0xf]
    %v362 = vld [vmem:[%s14 + $0x30] sm:$0xf]
    %v363 = vld [vmem:[%s14 + $0x34] sm:$0xf]
    %v364 = vld [vmem:[%s14 + $0x38] sm:$0xf]
    %v365 = vld [vmem:[%s14 + $0x3c] sm:$0xf]
    %v366 = vld [vmem:[%s14 + $0x40] sm:$0xf]
    %v367 = vld [vmem:[%s14 + $0x44] sm:$0xf]
    %v368 = vld [vmem:[%s14 + $0x48] sm:$0xf]
    %v369 = vld [vmem:[%s14 + $0x4c] sm:$0xf]
    %v370 = vld [vmem:[%s14 + $0x50] sm:$0xf]
    %v371 = vld [vmem:[%s14 + $0x54] sm:$0xf]
    %v372 = vld [vmem:[%s14 + $0x58] sm:$0xf]
    %v373 = vld [vmem:[%s14 + $0x5c] sm:$0xf]
    %v374 = vld [vmem:[%s14 + $0x60] sm:$0xf]
    %v375 = vld [vmem:[%s14 + $0x64] sm:$0xf]
    %v376 = vld [vmem:[%s14 + $0x68] sm:$0xf]
    %v377 = vld [vmem:[%s14 + $0x6c] sm:$0xf]
    %v378 = vld [vmem:[%s14 + $0x70] sm:$0xf]
    %v379 = vld [vmem:[%s14 + $0x74] sm:$0xf]
    %v380 = vld [vmem:[%s14 + $0x78] sm:$0xf]
    %v381 = vld [vmem:[%s14 + $0x7c] sm:$0xf]
    %v382 = vld [vmem:[%s14 + $0x80] sm:$0xf]
    %v383 = vld [vmem:[%s14 + $0x84] sm:$0xf]
    %v384 = vld [vmem:[%s14 + $0x88] sm:$0xf]
    %v385 = vld [vmem:[%s14 + $0x8c] sm:$0xf]
    %v386 = vld [vmem:[%s14 + $0x90] sm:$0xf]
    %v387 = vld [vmem:[%s14 + $0x94] sm:$0xf]
    %v388 = vld [vmem:[%s14 + $0x98] sm:$0xf]
    %v389 = vld [vmem:[%s14 + $0x9c] sm:$0xf]
    %v390 = vld [vmem:[%s14 + $0xa0] sm:$0xf]
    %v391 = vld [vmem:[%s14 + $0xa4] sm:$0xf]
    %v392 = vld [vmem:[%s14 + $0xa8] sm:$0xf]
    %v393 = vld [vmem:[%s14 + $0xac] sm:$0xf]
    %v394 = vld [vmem:[%s14 + $0xb0] sm:$0xf]
    %v395 = vld [vmem:[%s14 + $0xb4] sm:$0xf]
    %v396 = vld [vmem:[%s14 + $0xb8] sm:$0xf]
    %v397 = vld [vmem:[%s14 + $0xbc] sm:$0xf]
    %v398 = vld [vmem:[%s14 + $0xc0] sm:$0xf]
    %v399 = vld [vmem:[%s14 + $0xc4] sm:$0xf]
    %v400 = vld [vmem:[%s14 + $0xc8] sm:$0xf]
    %v401 = vld [vmem:[%s14 + $0xcc] sm:$0xf]
    %v402 = vld [vmem:[%s14 + $0xd0] sm:$0xf]
    %v403 = vld [vmem:[%s14 + $0xd4] sm:$0xf]
    %v404 = vld [vmem:[%s14 + $0xd8] sm:$0xf]
    %v405 = vld [vmem:[%s14 + $0xdc] sm:$0xf]
    %v406 = vld [vmem:[%s14 + $0xe0] sm:$0xf]
    %v407 = vld [vmem:[%s14 + $0xe4] sm:$0xf]
    %v408 = vld [vmem:[%s14 + $0xe8] sm:$0xf]
    %v409 = vld [vmem:[%s14 + $0xec] sm:$0xf]
    %v410 = vld [vmem:[%s14 + $0xf0] sm:$0xf]
    %v411 = vld [vmem:[%s14 + $0xf4] sm:$0xf]
    %v412 = vld [vmem:[%s14 + $0xf8] sm:$0xf]
    %v413 = vld [vmem:[%s14 + $0xfc] sm:$0xf]
    %v414 = vld [vmem:[%s15] sm:$0x1]
    %415 = vadd.xlane.f32.xlu0 %v257
    %v416 = vpop.xlane.xlu0 %415
    %v417 = vrcp.pop 128.0
    %v418 = vmul.f32 %v416, %v417
    %v419 = vsub.f32 %v257, %v418
    %v420 = vmul.f32 %v419, %v419
    %421 = vadd.xlane.f32.xlu0 %v420
    %v422 = vpop.xlane.xlu0 %421
    %v423 = vmul.f32 %v422, %v417
    %v424 = vadd.f32 %v423, 1e-05
    %v425 = vrsqrt.pop %v424
    %v426 = vmul.f32 %v419, %v425
    %v428 = vlaneseq
    %v429 = vshrl.u32 %v428, 7
    %v430 = vsub.s32 0, %v429
    %v431 = vrot.slane %v263, %v430
    %v433 = vmul.f32 %v426, %v431
    %v435 = vlaneseq
    %v436 = vshrl.u32 %v435, 7
    %v437 = vsub.s32 0, %v436
    %v438 = vrot.slane %v264, %v437
    %v440 = vadd.f32 %v433, %v438
    %v441 = vpack.c.bf16 %v440, %v440
    %v443 = vlaneseq
    %v444 = vshrl.u32 %v443, 7
    %v445 = vsub.s32 0, %v444
    %v446 = vrot.slane %v297, %v445
    %v447 = vlaneseq
    %v448 = vshrl.u32 %v447, 7
    %v449 = vsub.s32 1, %v448
    %v450 = vrot.slane %v297, %v449
    %v451 = vlaneseq
    %v452 = vshrl.u32 %v451, 7
    %v453 = vsub.s32 2, %v452
    %v454 = vrot.slane %v297, %v453
    %v490 = vunpack.c.l.b16 %v265
    %v491 = vunpack.c.h.b16 %v265
    %v492 = vunpack.c.l.b16 %v266
    %v493 = vunpack.c.l.b16 %v267
    %v494 = vunpack.c.h.b16 %v267
    %v495 = vunpack.c.l.b16 %v268
    %v496 = vunpack.c.l.b16 %v269
    %v497 = vunpack.c.h.b16 %v269
    %v498 = vunpack.c.l.b16 %v270
    %v499 = vunpack.c.l.b16 %v271
    %v500 = vunpack.c.h.b16 %v271
    %v501 = vunpack.c.l.b16 %v272
    %v502 = vunpack.c.l.b16 %v273
    %v503 = vunpack.c.h.b16 %v273
    %v504 = vunpack.c.l.b16 %v274
    %v505 = vunpack.c.l.b16 %v275
    %v506 = vunpack.c.h.b16 %v275
    %v507 = vunpack.c.l.b16 %v276
    %v508 = vunpack.c.l.b16 %v277
    %v509 = vunpack.c.h.b16 %v277
    %v510 = vunpack.c.l.b16 %v278
    %v511 = vunpack.c.l.b16 %v279
    %v512 = vunpack.c.h.b16 %v279
    %v513 = vunpack.c.l.b16 %v280
    %v514 = vunpack.c.l.b16 %v281
    %v515 = vunpack.c.h.b16 %v281
    %v516 = vunpack.c.l.b16 %v282
    %v517 = vunpack.c.l.b16 %v283
    %v518 = vunpack.c.h.b16 %v283
    %v519 = vunpack.c.l.b16 %v284
    %v520 = vunpack.c.l.b16 %v285
    %v521 = vunpack.c.h.b16 %v285
    %v522 = vunpack.c.l.b16 %v286
    %v523 = vunpack.c.l.b16 %v287
    %v524 = vunpack.c.h.b16 %v287
    %v525 = vunpack.c.l.b16 %v288
    %v526 = vunpack.c.l.b16 %v289
    %v527 = vunpack.c.h.b16 %v289
    %v528 = vunpack.c.l.b16 %v290
    %v529 = vunpack.c.l.b16 %v291
    %v530 = vunpack.c.h.b16 %v291
    %v531 = vunpack.c.l.b16 %v292
    %v532 = vunpack.c.l.b16 %v293
    %v533 = vunpack.c.h.b16 %v293
    %v534 = vunpack.c.l.b16 %v294
    %v535 = vunpack.c.l.b16 %v295
    %v536 = vunpack.c.h.b16 %v295
    %v537 = vunpack.c.l.b16 %v296
    %v538 = vpack.c.b16 %v493, %v490
    %v539 = vpack.c.b16 %v494, %v491
    %v540 = vpack.c.b16 %v495, %v492
    %v541 = vpack.c.b16 %v499, %v496
    %v542 = vpack.c.b16 %v500, %v497
    %v543 = vpack.c.b16 %v501, %v498
    %v544 = vpack.c.b16 %v505, %v502
    %v545 = vpack.c.b16 %v506, %v503
    %v546 = vpack.c.b16 %v507, %v504
    %v547 = vpack.c.b16 %v511, %v508
    %v548 = vpack.c.b16 %v512, %v509
    %v549 = vpack.c.b16 %v513, %v510
    %v550 = vpack.c.b16 %v517, %v514
    %v551 = vpack.c.b16 %v518, %v515
    %v552 = vpack.c.b16 %v519, %v516
    %v553 = vpack.c.b16 %v523, %v520
    %v554 = vpack.c.b16 %v524, %v521
    %v555 = vpack.c.b16 %v525, %v522
    %v556 = vpack.c.b16 %v529, %v526
    %v557 = vpack.c.b16 %v530, %v527
    %v558 = vpack.c.b16 %v531, %v528
    %v559 = vpack.c.b16 %v535, %v532
    %v560 = vpack.c.b16 %v536, %v533
    %v561 = vpack.c.b16 %v537, %v534
    %586 = vmatprep.subr.bf16.mxu0 %v560
    %587 = vmatpush1.bf16.msra.mxu0 %v559
    %588 = vmatprep.subr.bf16.mxu0 %v557
    %589 = vmatpush1.bf16.msra.mxu0 %v556
    %590 = vmatprep.subr.bf16.mxu0 %v554
    %591 = vmatpush1.bf16.msra.mxu0 %v553
    %592 = vmatprep.subr.bf16.mxu0 %v551
    %593 = vmatpush1.bf16.msra.mxu0 %v550
    %594 = vmatprep.subr.bf16.mxu0 %v548
    %595 = vmatpush1.bf16.msra.mxu0 %v547
    %596 = vmatprep.subr.bf16.mxu0 %v545
    %597 = vmatpush1.bf16.msra.mxu0 %v544
    %598 = vmatprep.subr.bf16.mxu0 %v542
    %599 = vmatpush1.bf16.msra.mxu0 %v541
    %600 = vmatprep.subr.bf16.mxu0 %v539
    %601 = vmatpush1.bf16.msra.mxu0 %v538
    %602 = vmatprep.subr.bf16.mxu0 0
    %603 = vmatpush2.bf16.msra.mxu0 0
    %604 = vmatprep.subr.bf16.mxu0 0
    %605 = vmatpush2.bf16.msra.mxu0 0
    %606 = vmatprep.subr.bf16.mxu0 0
    %607 = vmatpush2.bf16.msra.mxu0 0
    %608 = vmatprep.subr.bf16.mxu0 0
    %609 = vmatpush2.bf16.msra.mxu0 0
    %610 = vmatprep.subr.bf16.mxu0 0
    %611 = vmatpush2.bf16.msra.mxu0 0
    %612 = vmatprep.subr.bf16.mxu0 0
    %613 = vmatpush2.bf16.msra.mxu0 0
    %614 = vmatprep.subr.bf16.mxu0 0
    %615 = vmatpush2.bf16.msra.mxu0 0
    %616 = vmatprep.subr.bf16.mxu0 0
    %617 = vmatpush2.bf16.msra.mxu0 0
    %618 = vmatprep.mubr.bf16.mxu0 0
    %619 = vmatmul.mubr.bf16.gmra.mxu0 %v441
    %v620 = vpop.f32.mrf.mxu0
    %v621 = vadd.f32 %v446, %v620
    %v622 = vpop.f32.mrf.mxu0
    %v623 = vadd.f32 %v450, %v622
    %v624 = vpop.f32.mrf.mxu0
    %v625 = vpop.f32.mrf.mxu0
    %626 = vdwg.mxu0
    %627 = vmatprep.subr.bf16.mxu0 0
    %628 = vmatpush1.bf16.msra.mxu0 %v561
    %629 = vmatprep.subr.bf16.mxu0 0
    %630 = vmatpush1.bf16.msra.mxu0 %v558
    %631 = vmatprep.subr.bf16.mxu0 0
    %632 = vmatpush1.bf16.msra.mxu0 %v555
    %633 = vmatprep.subr.bf16.mxu0 0
    %634 = vmatpush1.bf16.msra.mxu0 %v552
    %635 = vmatprep.subr.bf16.mxu0 0
    %636 = vmatpush1.bf16.msra.mxu0 %v549
    %637 = vmatprep.subr.bf16.mxu0 0
    %638 = vmatpush1.bf16.msra.mxu0 %v546
    %639 = vmatprep.subr.bf16.mxu0 0
    %640 = vmatpush1.bf16.msra.mxu0 %v543
    %641 = vmatprep.subr.bf16.mxu0 0
    %642 = vmatpush1.bf16.msra.mxu0 %v540
    %643 = vmatprep.subr.bf16.mxu0 0
    %644 = vmatpush2.bf16.msra.mxu0 0
    %645 = vmatprep.subr.bf16.mxu0 0
    %646 = vmatpush2.bf16.msra.mxu0 0
    %647 = vmatprep.subr.bf16.mxu0 0
    %648 = vmatpush2.bf16.msra.mxu0 0
    %649 = vmatprep.subr.bf16.mxu0 0
    %650 = vmatpush2.bf16.msra.mxu0 0
    %651 = vmatprep.subr.bf16.mxu0 0
    %652 = vmatpush2.bf16.msra.mxu0 0
    %653 = vmatprep.subr.bf16.mxu0 0
    %654 = vmatpush2.bf16.msra.mxu0 0
    %655 = vmatprep.subr.bf16.mxu0 0
    %656 = vmatpush2.bf16.msra.mxu0 0
    %657 = vmatprep.subr.bf16.mxu0 0
    %658 = vmatpush2.bf16.msra.mxu0 0
    %659 = vmatprep.mubr.bf16.mxu0 0
    %660 = vmatmul.mubr.bf16.gmra.mxu0 %v441
    %v661 = vpop.f32.mrf.mxu0
    %v662 = vadd.f32 %v454, %v661
    %v663 = vpop.f32.mrf.mxu0
    %v664 = vpop.f32.mrf.mxu0
    %v665 = vpop.f32.mrf.mxu0
    %666 = vdwg.mxu0
    %668 = vrot.lane.b32.xlu0 %v621, 96
    %v669 = vpop.permute.xlu0 %668
    %670 = vrot.lane.b32.xlu0 %v621, 64
    %v671 = vpop.permute.xlu0 %670
    %672 = vrot.lane.b32.xlu0 %v621, 32
    %v673 = vpop.permute.xlu0 %672
    %675 = vrot.lane.b32.xlu0 %v623, 96
    %v676 = vpop.permute.xlu0 %675
    %677 = vrot.lane.b32.xlu0 %v623, 64
    %v678 = vpop.permute.xlu0 %677
    %679 = vrot.lane.b32.xlu0 %v623, 32
    %v680 = vpop.permute.xlu0 %679
    %682 = vrot.lane.b32.xlu0 %v662, 96
    %v683 = vpop.permute.xlu0 %682
    %685 = vrot.lane.b32.xlu0 %v662, 64
    %v686 = vpop.permute.xlu0 %685
    %688 = vrot.lane.b32.xlu0 %v662, 32
    %v689 = vpop.permute.xlu0 %688
    %vm691 = vcmask 261120
    %v692 = vsel %vm691, %v621, 0
    %v694 = vsel %vm691, %v623, 0
    %696 = vmatprep.subr.mxu0 0.0
    %697 = vmatpush1.xpose.msra.mxu0 0.0
    %698 = vmatprep.subr.mxu0 0.0
    %699 = vmatpush1.xpose.msra.mxu0 0.0
    %700 = vmatprep.subr.mxu0 0.0
    %701 = vmatpush1.xpose.msra.mxu0 0.0
    %702 = vmatprep.subr.mxu0 0.0
    %703 = vmatpush1.xpose.msra.mxu0 0.0
    %704 = vmatprep.subr.mxu0 0.0
    %705 = vmatpush1.xpose.msra.mxu0 0.0
    %706 = vmatprep.subr.mxu0 0.0
    %707 = vmatpush1.xpose.msra.mxu0 0.0
    %708 = vmatprep.subr.mxu0 0.0
    %709 = vmatpush1.xpose.msra.mxu0 0.0
    %710 = vmatprep.subr.mxu0 0.0
    %711 = vmatpush1.xpose.msra.mxu0 0.0
    %712 = vmatprep.subr.mxu0 0.0
    %713 = vmatpush1.xpose.msra.mxu0 0.0
    %714 = vmatprep.subr.mxu0 0.0
    %715 = vmatpush1.xpose.msra.mxu0 0.0
    %716 = vmatprep.subr.mxu0 0.0
    %717 = vmatpush1.xpose.msra.mxu0 0.0
    %718 = vmatprep.subr.mxu0 0.0
    %719 = vmatpush1.xpose.msra.mxu0 0.0
    %720 = vmatprep.subr.mxu0 0.0
    %721 = vmatpush1.xpose.msra.mxu0 0.0
    %722 = vmatprep.subr.mxu0 0.0
    %723 = vmatpush1.xpose.msra.mxu0 0.0
    %724 = vmatprep.subr.mxu0 0.0
    %725 = vmatpush1.xpose.msra.mxu0 0.0
    %726 = vmatprep.subr.mxu0 0.0
    %727 = vmatpush1.xpose.msra.mxu0 %v694
    %728 = vmatprep.subr.mxu0 0.0
    %729 = vmatpush2.xpose.msra.mxu0 0.0
    %730 = vmatprep.subr.mxu0 0.0
    %731 = vmatpush2.xpose.msra.mxu0 0.0
    %732 = vmatprep.subr.mxu0 0.0
    %733 = vmatpush2.xpose.msra.mxu0 0.0
    %734 = vmatprep.subr.mxu0 0.0
    %735 = vmatpush2.xpose.msra.mxu0 0.0
    %736 = vmatprep.subr.mxu0 0.0
    %737 = vmatpush2.xpose.msra.mxu0 0.0
    %738 = vmatprep.subr.mxu0 0.0
    %739 = vmatpush2.xpose.msra.mxu0 0.0
    %740 = vmatprep.subr.mxu0 0.0
    %741 = vmatpush2.xpose.msra.mxu0 0.0
    %742 = vmatprep.subr.mxu0 0.0
    %743 = vmatpush2.xpose.msra.mxu0 0.0
    %744 = vmatprep.subr.mxu0 0.0
    %745 = vmatpush2.xpose.msra.mxu0 0.0
    %746 = vmatprep.subr.mxu0 0.0
    %747 = vmatpush2.xpose.msra.mxu0 0.0
    %748 = vmatprep.subr.mxu0 0.0
    %749 = vmatpush2.xpose.msra.mxu0 0.0
    %750 = vmatprep.subr.mxu0 0.0
    %751 = vmatpush2.xpose.msra.mxu0 0.0
    %752 = vmatprep.subr.mxu0 0.0
    %753 = vmatpush2.xpose.msra.mxu0 0.0
    %754 = vmatprep.subr.mxu0 0.0
    %755 = vmatpush2.xpose.msra.mxu0 0.0
    %756 = vmatprep.subr.mxu0 0.0
    %757 = vmatpush2.xpose.msra.mxu0 0.0
    %758 = vmatprep.subr.mxu0 0.0
    %759 = vmatpush2.xpose.msra.mxu0 0.0
    %760 = vmatprep.mubr.f32.mxu0 0.0
    %761 = vmatmul.mubr.f32.gmra.mxu0 %v692
    %v762 = vpop.f32.mrf.mxu0
    %v763 = vadd.f32 0.0, %v762
    %v764 = vpop.f32.mrf.mxu0
    %765 = vdwg.mxu0
    %v766 = vsel %vm691, %v669, 0
    %v768 = vsel %vm691, %v676, 0
    %770 = vmatprep.subr.mxu0 0.0
    %771 = vmatpush1.xpose.msra.mxu0 0.0
    %772 = vmatprep.subr.mxu0 0.0
    %773 = vmatpush1.xpose.msra.mxu0 0.0
    %774 = vmatprep.subr.mxu0 0.0
    %775 = vmatpush1.xpose.msra.mxu0 0.0
    %776 = vmatprep.subr.mxu0 0.0
    %777 = vmatpush1.xpose.msra.mxu0 0.0
    %778 = vmatprep.subr.mxu0 0.0
    %779 = vmatpush1.xpose.msra.mxu0 0.0
    %780 = vmatprep.subr.mxu0 0.0
    %781 = vmatpush1.xpose.msra.mxu0 0.0
    %782 = vmatprep.subr.mxu0 0.0
    %783 = vmatpush1.xpose.msra.mxu0 0.0
    %784 = vmatprep.subr.mxu0 0.0
    %785 = vmatpush1.xpose.msra.mxu0 0.0
    %786 = vmatprep.subr.mxu0 0.0
    %787 = vmatpush1.xpose.msra.mxu0 0.0
    %788 = vmatprep.subr.mxu0 0.0
    %789 = vmatpush1.xpose.msra.mxu0 0.0
    %790 = vmatprep.subr.mxu0 0.0
    %791 = vmatpush1.xpose.msra.mxu0 0.0
    %792 = vmatprep.subr.mxu0 0.0
    %793 = vmatpush1.xpose.msra.mxu0 0.0
    %794 = vmatprep.subr.mxu0 0.0
    %795 = vmatpush1.xpose.msra.mxu0 0.0
    %796 = vmatprep.subr.mxu0 0.0
    %797 = vmatpush1.xpose.msra.mxu0 0.0
    %798 = vmatprep.subr.mxu0 0.0
    %799 = vmatpush1.xpose.msra.mxu0 0.0
    %800 = vmatprep.subr.mxu0 0.0
    %801 = vmatpush1.xpose.msra.mxu0 %v768
    %802 = vmatprep.subr.mxu0 0.0
    %803 = vmatpush2.xpose.msra.mxu0 0.0
    %804 = vmatprep.subr.mxu0 0.0
    %805 = vmatpush2.xpose.msra.mxu0 0.0
    %806 = vmatprep.subr.mxu0 0.0
    %807 = vmatpush2.xpose.msra.mxu0 0.0
    %808 = vmatprep.subr.mxu0 0.0
    %809 = vmatpush2.xpose.msra.mxu0 0.0
    %810 = vmatprep.subr.mxu0 0.0
    %811 = vmatpush2.xpose.msra.mxu0 0.0
    %812 = vmatprep.subr.mxu0 0.0
    %813 = vmatpush2.xpose.msra.mxu0 0.0
    %814 = vmatprep.subr.mxu0 0.0
    %815 = vmatpush2.xpose.msra.mxu0 0.0
    %816 = vmatprep.subr.mxu0 0.0
    %817 = vmatpush2.xpose.msra.mxu0 0.0
    %818 = vmatprep.subr.mxu0 0.0
    %819 = vmatpush2.xpose.msra.mxu0 0.0
    %820 = vmatprep.subr.mxu0 0.0
    %821 = vmatpush2.xpose.msra.mxu0 0.0
    %822 = vmatprep.subr.mxu0 0.0
    %823 = vmatpush2.xpose.msra.mxu0 0.0
    %824 = vmatprep.subr.mxu0 0.0
    %825 = vmatpush2.xpose.msra.mxu0 0.0
    %826 = vmatprep.subr.mxu0 0.0
    %827 = vmatpush2.xpose.msra.mxu0 0.0
    %828 = vmatprep.subr.mxu0 0.0
    %829 = vmatpush2.xpose.msra.mxu0 0.0
    %830 = vmatprep.subr.mxu0 0.0
    %831 = vmatpush2.xpose.msra.mxu0 0.0
    %832 = vmatprep.subr.mxu0 0.0
    %833 = vmatpush2.xpose.msra.mxu0 0.0
    %834 = vmatprep.mubr.f32.mxu0 0.0
    %835 = vmatmul.mubr.f32.gmra.mxu0 %v766
    %v836 = vpop.f32.mrf.mxu0
    %v837 = vadd.f32 0.0, %v836
    %v838 = vpop.f32.mrf.mxu0
    %839 = vdwg.mxu0
    %v840 = vsel %vm691, %v671, 0
    %v842 = vsel %vm691, %v678, 0
    %844 = vmatprep.subr.mxu0 0.0
    %845 = vmatpush1.xpose.msra.mxu0 0.0
    %846 = vmatprep.subr.mxu0 0.0
    %847 = vmatpush1.xpose.msra.mxu0 0.0
    %848 = vmatprep.subr.mxu0 0.0
    %849 = vmatpush1.xpose.msra.mxu0 0.0
    %850 = vmatprep.subr.mxu0 0.0
    %851 = vmatpush1.xpose.msra.mxu0 0.0
    %852 = vmatprep.subr.mxu0 0.0
    %853 = vmatpush1.xpose.msra.mxu0 0.0
    %854 = vmatprep.subr.mxu0 0.0
    %855 = vmatpush1.xpose.msra.mxu0 0.0
    %856 = vmatprep.subr.mxu0 0.0
    %857 = vmatpush1.xpose.msra.mxu0 0.0
    %858 = vmatprep.subr.mxu0 0.0
    %859 = vmatpush1.xpose.msra.mxu0 0.0
    %860 = vmatprep.subr.mxu0 0.0
    %861 = vmatpush1.xpose.msra.mxu0 0.0
    %862 = vmatprep.subr.mxu0 0.0
    %863 = vmatpush1.xpose.msra.mxu0 0.0
    %864 = vmatprep.subr.mxu0 0.0
    %865 = vmatpush1.xpose.msra.mxu0 0.0
    %866 = vmatprep.subr.mxu0 0.0
    %867 = vmatpush1.xpose.msra.mxu0 0.0
    %868 = vmatprep.subr.mxu0 0.0
    %869 = vmatpush1.xpose.msra.mxu0 0.0
    %870 = vmatprep.subr.mxu0 0.0
    %871 = vmatpush1.xpose.msra.mxu0 0.0
    %872 = vmatprep.subr.mxu0 0.0
    %873 = vmatpush1.xpose.msra.mxu0 0.0
    %874 = vmatprep.subr.mxu0 0.0
    %875 = vmatpush1.xpose.msra.mxu0 %v842
    %876 = vmatprep.subr.mxu0 0.0
    %877 = vmatpush2.xpose.msra.mxu0 0.0
    %878 = vmatprep.subr.mxu0 0.0
    %879 = vmatpush2.xpose.msra.mxu0 0.0
    %880 = vmatprep.subr.mxu0 0.0
    %881 = vmatpush2.xpose.msra.mxu0 0.0
    %882 = vmatprep.subr.mxu0 0.0
    %883 = vmatpush2.xpose.msra.mxu0 0.0
    %884 = vmatprep.subr.mxu0 0.0
    %885 = vmatpush2.xpose.msra.mxu0 0.0
    %886 = vmatprep.subr.mxu0 0.0
    %887 = vmatpush2.xpose.msra.mxu0 0.0
    %888 = vmatprep.subr.mxu0 0.0
    %889 = vmatpush2.xpose.msra.mxu0 0.0
    %890 = vmatprep.subr.mxu0 0.0
    %891 = vmatpush2.xpose.msra.mxu0 0.0
    %892 = vmatprep.subr.mxu0 0.0
    %893 = vmatpush2.xpose.msra.mxu0 0.0
    %894 = vmatprep.subr.mxu0 0.0
    %895 = vmatpush2.xpose.msra.mxu0 0.0
    %896 = vmatprep.subr.mxu0 0.0
    %897 = vmatpush2.xpose.msra.mxu0 0.0
    %898 = vmatprep.subr.mxu0 0.0
    %899 = vmatpush2.xpose.msra.mxu0 0.0
    %900 = vmatprep.subr.mxu0 0.0
    %901 = vmatpush2.xpose.msra.mxu0 0.0
    %902 = vmatprep.subr.mxu0 0.0
    %903 = vmatpush2.xpose.msra.mxu0 0.0
    %904 = vmatprep.subr.mxu0 0.0
    %905 = vmatpush2.xpose.msra.mxu0 0.0
    %906 = vmatprep.subr.mxu0 0.0
    %907 = vmatpush2.xpose.msra.mxu0 0.0
    %908 = vmatprep.mubr.f32.mxu0 0.0
    %909 = vmatmul.mubr.f32.gmra.mxu0 %v840
    %v910 = vpop.f32.mrf.mxu0
    %v911 = vadd.f32 0.0, %v910
    %v912 = vpop.f32.mrf.mxu0
    %913 = vdwg.mxu0
    %v914 = vsel %vm691, %v673, 0
    %v916 = vsel %vm691, %v680, 0
    %918 = vmatprep.subr.mxu0 0.0
    %919 = vmatpush1.xpose.msra.mxu0 0.0
    %920 = vmatprep.subr.mxu0 0.0
    %921 = vmatpush1.xpose.msra.mxu0 0.0
    %922 = vmatprep.subr.mxu0 0.0
    %923 = vmatpush1.xpose.msra.mxu0 0.0
    %924 = vmatprep.subr.mxu0 0.0
    %925 = vmatpush1.xpose.msra.mxu0 0.0
    %926 = vmatprep.subr.mxu0 0.0
    %927 = vmatpush1.xpose.msra.mxu0 0.0
    %928 = vmatprep.subr.mxu0 0.0
    %929 = vmatpush1.xpose.msra.mxu0 0.0
    %930 = vmatprep.subr.mxu0 0.0
    %931 = vmatpush1.xpose.msra.mxu0 0.0
    %932 = vmatprep.subr.mxu0 0.0
    %933 = vmatpush1.xpose.msra.mxu0 0.0
    %934 = vmatprep.subr.mxu0 0.0
    %935 = vmatpush1.xpose.msra.mxu0 0.0
    %936 = vmatprep.subr.mxu0 0.0
    %937 = vmatpush1.xpose.msra.mxu0 0.0
    %938 = vmatprep.subr.mxu0 0.0
    %939 = vmatpush1.xpose.msra.mxu0 0.0
    %940 = vmatprep.subr.mxu0 0.0
    %941 = vmatpush1.xpose.msra.mxu0 0.0
    %942 = vmatprep.subr.mxu0 0.0
    %943 = vmatpush1.xpose.msra.mxu0 0.0
    %944 = vmatprep.subr.mxu0 0.0
    %945 = vmatpush1.xpose.msra.mxu0 0.0
    %946 = vmatprep.subr.mxu0 0.0
    %947 = vmatpush1.xpose.msra.mxu0 0.0
    %948 = vmatprep.subr.mxu0 0.0
    %949 = vmatpush1.xpose.msra.mxu0 %v916
    %950 = vmatprep.subr.mxu0 0.0
    %951 = vmatpush2.xpose.msra.mxu0 0.0
    %952 = vmatprep.subr.mxu0 0.0
    %953 = vmatpush2.xpose.msra.mxu0 0.0
    %954 = vmatprep.subr.mxu0 0.0
    %955 = vmatpush2.xpose.msra.mxu0 0.0
    %956 = vmatprep.subr.mxu0 0.0
    %957 = vmatpush2.xpose.msra.mxu0 0.0
    %958 = vmatprep.subr.mxu0 0.0
    %959 = vmatpush2.xpose.msra.mxu0 0.0
    %960 = vmatprep.subr.mxu0 0.0
    %961 = vmatpush2.xpose.msra.mxu0 0.0
    %962 = vmatprep.subr.mxu0 0.0
    %963 = vmatpush2.xpose.msra.mxu0 0.0
    %964 = vmatprep.subr.mxu0 0.0
    %965 = vmatpush2.xpose.msra.mxu0 0.0
    %966 = vmatprep.subr.mxu0 0.0
    %967 = vmatpush2.xpose.msra.mxu0 0.0
    %968 = vmatprep.subr.mxu0 0.0
    %969 = vmatpush2.xpose.msra.mxu0 0.0
    %970 = vmatprep.subr.mxu0 0.0
    %971 = vmatpush2.xpose.msra.mxu0 0.0
    %972 = vmatprep.subr.mxu0 0.0
    %973 = vmatpush2.xpose.msra.mxu0 0.0
    %974 = vmatprep.subr.mxu0 0.0
    %975 = vmatpush2.xpose.msra.mxu0 0.0
    %976 = vmatprep.subr.mxu0 0.0
    %977 = vmatpush2.xpose.msra.mxu0 0.0
    %978 = vmatprep.subr.mxu0 0.0
    %979 = vmatpush2.xpose.msra.mxu0 0.0
    %980 = vmatprep.subr.mxu0 0.0
    %981 = vmatpush2.xpose.msra.mxu0 0.0
    %982 = vmatprep.mubr.f32.mxu0 0.0
    %983 = vmatmul.mubr.f32.gmra.mxu0 %v914
    %v984 = vpop.f32.mrf.mxu0
    %v985 = vadd.f32 0.0, %v984
    %v986 = vpop.f32.mrf.mxu0
    %987 = vdwg.mxu0
    %v988 = vmul.f32 %v763, 0.17677669
    %v989 = vmul.f32 %v837, 0.17677669
    %v990 = vmul.f32 %v911, 0.17677669
    %v991 = vmul.f32 %v985, 0.17677669
    %v992 = vadd.f32 %v988, %v262
    %v993 = vadd.f32 %v989, %v262
    %v994 = vadd.f32 %v990, %v262
    %v995 = vadd.f32 %v991, %v262
    %vm996 = vcmask 64512
    %v997 = vsel %vm996, %v992, -inf
    %998 = vmax.xlane.f32.xlu0 %v997
    %v999 = vpop.xlane.xlu0 %998
    %v1000 = vsel %vm996, %v993, -inf
    %1001 = vmax.xlane.f32.xlu0 %v1000
    %v1002 = vpop.xlane.xlu0 %1001
    %v1003 = vsel %vm996, %v994, -inf
    %1004 = vmax.xlane.f32.xlu0 %v1003
    %v1005 = vpop.xlane.xlu0 %1004
    %v1006 = vsel %vm996, %v995, -inf
    %1007 = vmax.xlane.f32.xlu0 %v1006
    %v1008 = vpop.xlane.xlu0 %1007
    %v1009 = vsub.f32 %v992, %v999
    %v1010 = vsub.f32 %v993, %v1002
    %v1011 = vsub.f32 %v994, %v1005
    %v1012 = vsub.f32 %v995, %v1008
    %v1013 = vmul.f32 %v1009, 1.442695
    %v1014 = vpow.pop %v1013
    %v1015 = vmul.f32 %v1010, 1.442695
    %v1016 = vpow.pop %v1015
    %v1017 = vmul.f32 %v1011, 1.442695
    %v1018 = vpow.pop %v1017
    %v1019 = vmul.f32 %v1012, 1.442695
    %v1020 = vpow.pop %v1019
    %v1021 = vsel %vm996, %v1014, 0.0
    %1022 = vadd.xlane.f32.xlu0 %v1021
    %v1023 = vpop.xlane.xlu0 %1022
    %v1024 = vsel %vm996, %v1016, 0.0
    %1025 = vadd.xlane.f32.xlu0 %v1024
    %v1026 = vpop.xlane.xlu0 %1025
    %v1027 = vsel %vm996, %v1018, 0.0
    %1028 = vadd.xlane.f32.xlu0 %v1027
    %v1029 = vpop.xlane.xlu0 %1028
    %v1030 = vsel %vm996, %v1020, 0.0
    %1031 = vadd.xlane.f32.xlu0 %v1030
    %v1032 = vpop.xlane.xlu0 %1031
    %v1033 = vrcp.pop %v1023
    %v1034 = vrcp.pop %v1026
    %v1035 = vrcp.pop %v1029
    %v1036 = vrcp.pop %v1032
    %v1037 = vmul.f32 %v1014, %v1033
    %v1038 = vmul.f32 %v1016, %v1034
    %v1039 = vmul.f32 %v1018, %v1035
    %v1040 = vmul.f32 %v1020, %v1036
    %v1042 = vsel %vm996, %v1037, 0
    %1044 = vmatprep.subr.mxu0 0.0
    %1045 = vmatpush1.msra.mxu0 0.0
    %1046 = vmatprep.subr.mxu0 0.0
    %1047 = vmatpush1.msra.mxu0 0.0
    %1048 = vmatprep.subr.mxu0 0.0
    %1049 = vmatpush1.msra.mxu0 0.0
    %1050 = vmatprep.subr.mxu0 0.0
    %1051 = vmatpush1.msra.mxu0 0.0
    %1052 = vmatprep.subr.mxu0 0.0
    %1053 = vmatpush1.msra.mxu0 0.0
    %1054 = vmatprep.subr.mxu0 0.0
    %1055 = vmatpush1.msra.mxu0 0.0
    %1056 = vmatprep.subr.mxu0 0.0
    %1057 = vmatpush1.msra.mxu0 0.0
    %1058 = vmatprep.subr.mxu0 0.0
    %1059 = vmatpush1.msra.mxu0 0.0
    %1060 = vmatprep.subr.mxu0 0.0
    %1061 = vmatpush1.msra.mxu0 0.0
    %1062 = vmatprep.subr.mxu0 0.0
    %1063 = vmatpush1.msra.mxu0 0.0
    %1064 = vmatprep.subr.mxu0 0.0
    %1065 = vmatpush1.msra.mxu0 0.0
    %1066 = vmatprep.subr.mxu0 0.0
    %1067 = vmatpush1.msra.mxu0 0.0
    %1068 = vmatprep.subr.mxu0 0.0
    %1069 = vmatpush1.msra.mxu0 0.0
    %1070 = vmatprep.subr.mxu0 0.0
    %1071 = vmatpush1.msra.mxu0 0.0
    %1072 = vmatprep.subr.mxu0 0.0
    %1073 = vmatpush1.msra.mxu0 0.0
    %1074 = vmatprep.subr.mxu0 0.0
    %1075 = vmatpush1.msra.mxu0 %v662
    %1076 = vmatprep.subr.mxu0 0.0
    %1077 = vmatpush2.msra.mxu0 0.0
    %1078 = vmatprep.subr.mxu0 0.0
    %1079 = vmatpush2.msra.mxu0 0.0
    %1080 = vmatprep.subr.mxu0 0.0
    %1081 = vmatpush2.msra.mxu0 0.0
    %1082 = vmatprep.subr.mxu0 0.0
    %1083 = vmatpush2.msra.mxu0 0.0
    %1084 = vmatprep.subr.mxu0 0.0
    %1085 = vmatpush2.msra.mxu0 0.0
    %1086 = vmatprep.subr.mxu0 0.0
    %1087 = vmatpush2.msra.mxu0 0.0
    %1088 = vmatprep.subr.mxu0 0.0
    %1089 = vmatpush2.msra.mxu0 0.0
    %1090 = vmatprep.subr.mxu0 0.0
    %1091 = vmatpush2.msra.mxu0 0.0
    %1092 = vmatprep.subr.mxu0 0.0
    %1093 = vmatpush2.msra.mxu0 0.0
    %1094 = vmatprep.subr.mxu0 0.0
    %1095 = vmatpush2.msra.mxu0 0.0
    %1096 = vmatprep.subr.mxu0 0.0
    %1097 = vmatpush2.msra.mxu0 0.0
    %1098 = vmatprep.subr.mxu0 0.0
    %1099 = vmatpush2.msra.mxu0 0.0
    %1100 = vmatprep.subr.mxu0 0.0
    %1101 = vmatpush2.msra.mxu0 0.0
    %1102 = vmatprep.subr.mxu0 0.0
    %1103 = vmatpush2.msra.mxu0 0.0
    %1104 = vmatprep.subr.mxu0 0.0
    %1105 = vmatpush2.msra.mxu0 0.0
    %1106 = vmatprep.subr.mxu0 0.0
    %1107 = vmatpush2.msra.mxu0 0.0
    %1108 = vmatprep.mubr.f32.mxu0 0.0
    %1109 = vmatmul.mubr.f32.gmra.mxu0 %v1042
    %v1110 = vpop.f32.mrf.mxu0
    %v1111 = vadd.f32 0.0, %v1110
    %v1112 = vpop.f32.mrf.mxu0
    %1113 = vdwg.mxu0
    %v1115 = vsel %vm996, %v1038, 0
    %1117 = vmatprep.subr.mxu0 0.0
    %1118 = vmatpush1.msra.mxu0 0.0
    %1119 = vmatprep.subr.mxu0 0.0
    %1120 = vmatpush1.msra.mxu0 0.0
    %1121 = vmatprep.subr.mxu0 0.0
    %1122 = vmatpush1.msra.mxu0 0.0
    %1123 = vmatprep.subr.mxu0 0.0
    %1124 = vmatpush1.msra.mxu0 0.0
    %1125 = vmatprep.subr.mxu0 0.0
    %1126 = vmatpush1.msra.mxu0 0.0
    %1127 = vmatprep.subr.mxu0 0.0
    %1128 = vmatpush1.msra.mxu0 0.0
    %1129 = vmatprep.subr.mxu0 0.0
    %1130 = vmatpush1.msra.mxu0 0.0
    %1131 = vmatprep.subr.mxu0 0.0
    %1132 = vmatpush1.msra.mxu0 0.0
    %1133 = vmatprep.subr.mxu0 0.0
    %1134 = vmatpush1.msra.mxu0 0.0
    %1135 = vmatprep.subr.mxu0 0.0
    %1136 = vmatpush1.msra.mxu0 0.0
    %1137 = vmatprep.subr.mxu0 0.0
    %1138 = vmatpush1.msra.mxu0 0.0
    %1139 = vmatprep.subr.mxu0 0.0
    %1140 = vmatpush1.msra.mxu0 0.0
    %1141 = vmatprep.subr.mxu0 0.0
    %1142 = vmatpush1.msra.mxu0 0.0
    %1143 = vmatprep.subr.mxu0 0.0
    %1144 = vmatpush1.msra.mxu0 0.0
    %1145 = vmatprep.subr.mxu0 0.0
    %1146 = vmatpush1.msra.mxu0 0.0
    %1147 = vmatprep.subr.mxu0 0.0
    %1148 = vmatpush1.msra.mxu0 %v683
    %1149 = vmatprep.subr.mxu0 0.0
    %1150 = vmatpush2.msra.mxu0 0.0
    %1151 = vmatprep.subr.mxu0 0.0
    %1152 = vmatpush2.msra.mxu0 0.0
    %1153 = vmatprep.subr.mxu0 0.0
    %1154 = vmatpush2.msra.mxu0 0.0
    %1155 = vmatprep.subr.mxu0 0.0
    %1156 = vmatpush2.msra.mxu0 0.0
    %1157 = vmatprep.subr.mxu0 0.0
    %1158 = vmatpush2.msra.mxu0 0.0
    %1159 = vmatprep.subr.mxu0 0.0
    %1160 = vmatpush2.msra.mxu0 0.0
    %1161 = vmatprep.subr.mxu0 0.0
    %1162 = vmatpush2.msra.mxu0 0.0
    %1163 = vmatprep.subr.mxu0 0.0
    %1164 = vmatpush2.msra.mxu0 0.0
    %1165 = vmatprep.subr.mxu0 0.0
    %1166 = vmatpush2.msra.mxu0 0.0
    %1167 = vmatprep.subr.mxu0 0.0
    %1168 = vmatpush2.msra.mxu0 0.0
    %1169 = vmatprep.subr.mxu0 0.0
    %1170 = vmatpush2.msra.mxu0 0.0
    %1171 = vmatprep.subr.mxu0 0.0
    %1172 = vmatpush2.msra.mxu0 0.0
    %1173 = vmatprep.subr.mxu0 0.0
    %1174 = vmatpush2.msra.mxu0 0.0
    %1175 = vmatprep.subr.mxu0 0.0
    %1176 = vmatpush2.msra.mxu0 0.0
    %1177 = vmatprep.subr.mxu0 0.0
    %1178 = vmatpush2.msra.mxu0 0.0
    %1179 = vmatprep.subr.mxu0 0.0
    %1180 = vmatpush2.msra.mxu0 0.0
    %1181 = vmatprep.mubr.f32.mxu0 0.0
    %1182 = vmatmul.mubr.f32.gmra.mxu0 %v1115
    %v1183 = vpop.f32.mrf.mxu0
    %v1184 = vadd.f32 0.0, %v1183
    %v1185 = vpop.f32.mrf.mxu0
    %1186 = vdwg.mxu0
    %v1188 = vsel %vm996, %v1039, 0
    %1190 = vmatprep.subr.mxu0 0.0
    %1191 = vmatpush1.msra.mxu0 0.0
    %1192 = vmatprep.subr.mxu0 0.0
    %1193 = vmatpush1.msra.mxu0 0.0
    %1194 = vmatprep.subr.mxu0 0.0
    %1195 = vmatpush1.msra.mxu0 0.0
    %1196 = vmatprep.subr.mxu0 0.0
    %1197 = vmatpush1.msra.mxu0 0.0
    %1198 = vmatprep.subr.mxu0 0.0
    %1199 = vmatpush1.msra.mxu0 0.0
    %1200 = vmatprep.subr.mxu0 0.0
    %1201 = vmatpush1.msra.mxu0 0.0
    %1202 = vmatprep.subr.mxu0 0.0
    %1203 = vmatpush1.msra.mxu0 0.0
    %1204 = vmatprep.subr.mxu0 0.0
    %1205 = vmatpush1.msra.mxu0 0.0
    %1206 = vmatprep.subr.mxu0 0.0
    %1207 = vmatpush1.msra.mxu0 0.0
    %1208 = vmatprep.subr.mxu0 0.0
    %1209 = vmatpush1.msra.mxu0 0.0
    %1210 = vmatprep.subr.mxu0 0.0
    %1211 = vmatpush1.msra.mxu0 0.0
    %1212 = vmatprep.subr.mxu0 0.0
    %1213 = vmatpush1.msra.mxu0 0.0
    %1214 = vmatprep.subr.mxu0 0.0
    %1215 = vmatpush1.msra.mxu0 0.0
    %1216 = vmatprep.subr.mxu0 0.0
    %1217 = vmatpush1.msra.mxu0 0.0
    %1218 = vmatprep.subr.mxu0 0.0
    %1219 = vmatpush1.msra.mxu0 0.0
    %1220 = vmatprep.subr.mxu0 0.0
    %1221 = vmatpush1.msra.mxu0 %v686
    %1222 = vmatprep.subr.mxu0 0.0
    %1223 = vmatpush2.msra.mxu0 0.0
    %1224 = vmatprep.subr.mxu0 0.0
    %1225 = vmatpush2.msra.mxu0 0.0
    %1226 = vmatprep.subr.mxu0 0.0
    %1227 = vmatpush2.msra.mxu0 0.0
    %1228 = vmatprep.subr.mxu0 0.0
    %1229 = vmatpush2.msra.mxu0 0.0
    %1230 = vmatprep.subr.mxu0 0.0
    %1231 = vmatpush2.msra.mxu0 0.0
    %1232 = vmatprep.subr.mxu0 0.0
    %1233 = vmatpush2.msra.mxu0 0.0
    %1234 = vmatprep.subr.mxu0 0.0
    %1235 = vmatpush2.msra.mxu0 0.0
    %1236 = vmatprep.subr.mxu0 0.0
    %1237 = vmatpush2.msra.mxu0 0.0
    %1238 = vmatprep.subr.mxu0 0.0
    %1239 = vmatpush2.msra.mxu0 0.0
    %1240 = vmatprep.subr.mxu0 0.0
    %1241 = vmatpush2.msra.mxu0 0.0
    %1242 = vmatprep.subr.mxu0 0.0
    %1243 = vmatpush2.msra.mxu0 0.0
    %1244 = vmatprep.subr.mxu0 0.0
    %1245 = vmatpush2.msra.mxu0 0.0
    %1246 = vmatprep.subr.mxu0 0.0
    %1247 = vmatpush2.msra.mxu0 0.0
    %1248 = vmatprep.subr.mxu0 0.0
    %1249 = vmatpush2.msra.mxu0 0.0
    %1250 = vmatprep.subr.mxu0 0.0
    %1251 = vmatpush2.msra.mxu0 0.0
    %1252 = vmatprep.subr.mxu0 0.0
    %1253 = vmatpush2.msra.mxu0 0.0
    %1254 = vmatprep.mubr.f32.mxu0 0.0
    %1255 = vmatmul.mubr.f32.gmra.mxu0 %v1188
    %v1256 = vpop.f32.mrf.mxu0
    %v1257 = vadd.f32 0.0, %v1256
    %v1258 = vpop.f32.mrf.mxu0
    %1259 = vdwg.mxu0
    %v1261 = vsel %vm996, %v1040, 0
    %1263 = vmatprep.subr.mxu0 0.0
    %1264 = vmatpush1.msra.mxu0 0.0
    %1265 = vmatprep.subr.mxu0 0.0
    %1266 = vmatpush1.msra.mxu0 0.0
    %1267 = vmatprep.subr.mxu0 0.0
    %1268 = vmatpush1.msra.mxu0 0.0
    %1269 = vmatprep.subr.mxu0 0.0
    %1270 = vmatpush1.msra.mxu0 0.0
    %1271 = vmatprep.subr.mxu0 0.0
    %1272 = vmatpush1.msra.mxu0 0.0
    %1273 = vmatprep.subr.mxu0 0.0
    %1274 = vmatpush1.msra.mxu0 0.0
    %1275 = vmatprep.subr.mxu0 0.0
    %1276 = vmatpush1.msra.mxu0 0.0
    %1277 = vmatprep.subr.mxu0 0.0
    %1278 = vmatpush1.msra.mxu0 0.0
    %1279 = vmatprep.subr.mxu0 0.0
    %1280 = vmatpush1.msra.mxu0 0.0
    %1281 = vmatprep.subr.mxu0 0.0
    %1282 = vmatpush1.msra.mxu0 0.0
    %1283 = vmatprep.subr.mxu0 0.0
    %1284 = vmatpush1.msra.mxu0 0.0
    %1285 = vmatprep.subr.mxu0 0.0
    %1286 = vmatpush1.msra.mxu0 0.0
    %1287 = vmatprep.subr.mxu0 0.0
    %1288 = vmatpush1.msra.mxu0 0.0
    %1289 = vmatprep.subr.mxu0 0.0
    %1290 = vmatpush1.msra.mxu0 0.0
    %1291 = vmatprep.subr.mxu0 0.0
    %1292 = vmatpush1.msra.mxu0 0.0
    %1293 = vmatprep.subr.mxu0 0.0
    %1294 = vmatpush1.msra.mxu0 %v689
    %1295 = vmatprep.subr.mxu0 0.0
    %1296 = vmatpush2.msra.mxu0 0.0
    %1297 = vmatprep.subr.mxu0 0.0
    %1298 = vmatpush2.msra.mxu0 0.0
    %1299 = vmatprep.subr.mxu0 0.0
    %1300 = vmatpush2.msra.mxu0 0.0
    %1301 = vmatprep.subr.mxu0 0.0
    %1302 = vmatpush2.msra.mxu0 0.0
    %1303 = vmatprep.subr.mxu0 0.0
    %1304 = vmatpush2.msra.mxu0 0.0
    %1305 = vmatprep.subr.mxu0 0.0
    %1306 = vmatpush2.msra.mxu0 0.0
    %1307 = vmatprep.subr.mxu0 0.0
    %1308 = vmatpush2.msra.mxu0 0.0
    %1309 = vmatprep.subr.mxu0 0.0
    %1310 = vmatpush2.msra.mxu0 0.0
    %1311 = vmatprep.subr.mxu0 0.0
    %1312 = vmatpush2.msra.mxu0 0.0
    %1313 = vmatprep.subr.mxu0 0.0
    %1314 = vmatpush2.msra.mxu0 0.0
    %1315 = vmatprep.subr.mxu0 0.0
    %1316 = vmatpush2.msra.mxu0 0.0
    %1317 = vmatprep.subr.mxu0 0.0
    %1318 = vmatpush2.msra.mxu0 0.0
    %1319 = vmatprep.subr.mxu0 0.0
    %1320 = vmatpush2.msra.mxu0 0.0
    %1321 = vmatprep.subr.mxu0 0.0
    %1322 = vmatpush2.msra.mxu0 0.0
    %1323 = vmatprep.subr.mxu0 0.0
    %1324 = vmatpush2.msra.mxu0 0.0
    %1325 = vmatprep.subr.mxu0 0.0
    %1326 = vmatpush2.msra.mxu0 0.0
    %1327 = vmatprep.mubr.f32.mxu0 0.0
    %1328 = vmatmul.mubr.f32.gmra.mxu0 %v1261
    %v1329 = vpop.f32.mrf.mxu0
    %v1330 = vadd.f32 0.0, %v1329
    %v1331 = vpop.f32.mrf.mxu0
    %1332 = vdwg.mxu0
    %1333 = vst.msk [vmem:[#allocation2] sm:$0xff] %vm691, %v1111
    %1335 = vrot.lane.b32.xlu0 %v1184, 32
    %v1336 = vpop.permute.xlu0 %1335
    %vm1338 = vcmask 523520
    %1339 = vst.msk [vmem:[#allocation2] sm:$0xff] %vm1338, %v1336
    %1341 = vrot.lane.b32.xlu0 %v1257, 64
    %v1342 = vpop.permute.xlu0 %1341
    %vm1344 = vcmask 785920
    %1345 = vst.msk [vmem:[#allocation2] sm:$0xff] %vm1344, %v1342
    %1347 = vrot.lane.b32.xlu0 %v1330, 96
    %v1348 = vpop.permute.xlu0 %1347
    %vm1350 = vcmask 1048320
    %1351 = vst.msk [vmem:[#allocation2] sm:$0xff] %vm1350, %v1348
    %v1352 = vld [vmem:[#allocation2] sm:$0xff]
    %v1353 = vpack.c.bf16 %v1352, %v1352
    %v1355 = vlaneseq
    %v1356 = vshrl.u32 %v1355, 7
    %v1357 = vsub.s32 0, %v1356
    %v1358 = vrot.slane %v314, %v1357
    %v1376 = vunpack.c.l.b16 %v298
    %v1377 = vunpack.c.l.b16 %v299
    %v1378 = vunpack.c.l.b16 %v300
    %v1379 = vunpack.c.l.b16 %v301
    %v1380 = vunpack.c.l.b16 %v302
    %v1381 = vunpack.c.l.b16 %v303
    %v1382 = vunpack.c.l.b16 %v304
    %v1383 = vunpack.c.l.b16 %v305
    %v1384 = vunpack.c.l.b16 %v306
    %v1385 = vunpack.c.l.b16 %v307
    %v1386 = vunpack.c.l.b16 %v308
    %v1387 = vunpack.c.l.b16 %v309
    %v1388 = vunpack.c.l.b16 %v310
    %v1389 = vunpack.c.l.b16 %v311
    %v1390 = vunpack.c.l.b16 %v312
    %v1391 = vunpack.c.l.b16 %v313
    %v1392 = vpack.c.b16 %v1377, %v1376
    %v1393 = vpack.c.b16 %v1379, %v1378
    %v1394 = vpack.c.b16 %v1381, %v1380
    %v1395 = vpack.c.b16 %v1383, %v1382
    %v1396 = vpack.c.b16 %v1385, %v1384
    %v1397 = vpack.c.b16 %v1387, %v1386
    %v1398 = vpack.c.b16 %v1389, %v1388
    %v1399 = vpack.c.b16 %v1391, %v1390
    %1408 = vmatprep.subr.bf16.mxu0 0
    %1409 = vmatpush1.bf16.msra.mxu0 %v1399
    %1410 = vmatprep.subr.bf16.mxu0 0
    %1411 = vmatpush1.bf16.msra.mxu0 %v1398
    %1412 = vmatprep.subr.bf16.mxu0 0
    %1413 = vmatpush1.bf16.msra.mxu0 %v1397
    %1414 = vmatprep.subr.bf16.mxu0 0
    %1415 = vmatpush1.bf16.msra.mxu0 %v1396
    %1416 = vmatprep.subr.bf16.mxu0 0
    %1417 = vmatpush1.bf16.msra.mxu0 %v1395
    %1418 = vmatprep.subr.bf16.mxu0 0
    %1419 = vmatpush1.bf16.msra.mxu0 %v1394
    %1420 = vmatprep.subr.bf16.mxu0 0
    %1421 = vmatpush1.bf16.msra.mxu0 %v1393
    %1422 = vmatprep.subr.bf16.mxu0 0
    %1423 = vmatpush1.bf16.msra.mxu0 %v1392
    %1424 = vmatprep.subr.bf16.mxu0 0
    %1425 = vmatpush2.bf16.msra.mxu0 0
    %1426 = vmatprep.subr.bf16.mxu0 0
    %1427 = vmatpush2.bf16.msra.mxu0 0
    %1428 = vmatprep.subr.bf16.mxu0 0
    %1429 = vmatpush2.bf16.msra.mxu0 0
    %1430 = vmatprep.subr.bf16.mxu0 0
    %1431 = vmatpush2.bf16.msra.mxu0 0
    %1432 = vmatprep.subr.bf16.mxu0 0
    %1433 = vmatpush2.bf16.msra.mxu0 0
    %1434 = vmatprep.subr.bf16.mxu0 0
    %1435 = vmatpush2.bf16.msra.mxu0 0
    %1436 = vmatprep.subr.bf16.mxu0 0
    %1437 = vmatpush2.bf16.msra.mxu0 0
    %1438 = vmatprep.subr.bf16.mxu0 0
    %1439 = vmatpush2.bf16.msra.mxu0 0
    %1440 = vmatprep.mubr.bf16.mxu0 0
    %1441 = vmatmul.mubr.bf16.gmra.mxu0 %v1353
    %v1442 = vpop.f32.mrf.mxu0
    %v1443 = vadd.f32 %v1358, %v1442
    %v1444 = vpop.f32.mrf.mxu0
    %v1445 = vpop.f32.mrf.mxu0
    %v1446 = vpop.f32.mrf.mxu0
    %1447 = vdwg.mxu0
    %v1448 = vadd.f32 %v257, %v1443
    %1449 = vadd.xlane.f32.xlu0 %v1448
    %v1450 = vpop.xlane.xlu0 %1449
    %v1451 = vmul.f32 %v1450, %v417
    %v1452 = vsub.f32 %v1448, %v1451
    %v1453 = vmul.f32 %v1452, %v1452
    %1454 = vadd.xlane.f32.xlu0 %v1453
    %v1455 = vpop.xlane.xlu0 %1454
    %v1456 = vmul.f32 %v1455, %v417
    %v1457 = vadd.f32 %v1456, 1e-05
    %v1458 = vrsqrt.pop %v1457
    %v1459 = vmul.f32 %v1452, %v1458
    %v1461 = vlaneseq
    %v1462 = vshrl.u32 %v1461, 7
    %v1463 = vsub.s32 0, %v1462
    %v1464 = vrot.slane %v315, %v1463
    %v1466 = vmul.f32 %v1459, %v1464
    %v1468 = vlaneseq
    %v1469 = vshrl.u32 %v1468, 7
    %v1470 = vsub.s32 0, %v1469
    %v1471 = vrot.slane %v316, %v1470
    %v1473 = vadd.f32 %v1466, %v1471
    %v1474 = vpack.c.bf16 %v1473, %v1473
    %v1476 = vlaneseq
    %v1477 = vshrl.u32 %v1476, 7
    %v1478 = vsub.s32 0, %v1477
    %v1479 = vrot.slane %v349, %v1478
    %v1480 = vlaneseq
    %v1481 = vshrl.u32 %v1480, 7
    %v1482 = vsub.s32 1, %v1481
    %v1483 = vrot.slane %v349, %v1482
    %v1484 = vlaneseq
    %v1485 = vshrl.u32 %v1484, 7
    %v1486 = vsub.s32 2, %v1485
    %v1487 = vrot.slane %v349, %v1486
    %v1488 = vlaneseq
    %v1489 = vshrl.u32 %v1488, 7
    %v1490 = vsub.s32 3, %v1489
    %v1491 = vrot.slane %v349, %v1490
    %v1528 = vunpack.c.l.b16 %v317
    %v1529 = vunpack.c.h.b16 %v317
    %v1530 = vunpack.c.l.b16 %v318
    %v1531 = vunpack.c.h.b16 %v318
    %v1532 = vunpack.c.l.b16 %v319
    %v1533 = vunpack.c.h.b16 %v319
    %v1534 = vunpack.c.l.b16 %v320
    %v1535 = vunpack.c.h.b16 %v320
    %v1536 = vunpack.c.l.b16 %v321
    %v1537 = vunpack.c.h.b16 %v321
    %v1538 = vunpack.c.l.b16 %v322
    %v1539 = vunpack.c.h.b16 %v322
    %v1540 = vunpack.c.l.b16 %v323
    %v1541 = vunpack.c.h.b16 %v323
    %v1542 = vunpack.c.l.b16 %v324
    %v1543 = vunpack.c.h.b16 %v324
    %v1544 = vunpack.c.l.b16 %v325
    %v1545 = vunpack.c.h.b16 %v325
    %v1546 = vunpack.c.l.b16 %v326
    %v1547 = vunpack.c.h.b16 %v326
    %v1548 = vunpack.c.l.b16 %v327
    %v1549 = vunpack.c.h.b16 %v327
    %v1550 = vunpack.c.l.b16 %v328
    %v1551 = vunpack.c.h.b16 %v328
    %v1552 = vunpack.c.l.b16 %v329
    %v1553 = vunpack.c.h.b16 %v329
    %v1554 = vunpack.c.l.b16 %v330
    %v1555 = vunpack.c.h.b16 %v330
    %v1556 = vunpack.c.l.b16 %v331
    %v1557 = vunpack.c.h.b16 %v331
    %v1558 = vunpack.c.l.b16 %v332
    %v1559 = vunpack.c.h.b16 %v332
    %v1560 = vunpack.c.l.b16 %v333
    %v1561 = vunpack.c.h.b16 %v333
    %v1562 = vunpack.c.l.b16 %v334
    %v1563 = vunpack.c.h.b16 %v334
    %v1564 = vunpack.c.l.b16 %v335
    %v1565 = vunpack.c.h.b16 %v335
    %v1566 = vunpack.c.l.b16 %v336
    %v1567 = vunpack.c.h.b16 %v336
    %v1568 = vunpack.c.l.b16 %v337
    %v1569 = vunpack.c.h.b16 %v337
    %v1570 = vunpack.c.l.b16 %v338
    %v1571 = vunpack.c.h.b16 %v338
    %v1572 = vunpack.c.l.b16 %v339
    %v1573 = vunpack.c.h.b16 %v339
    %v1574 = vunpack.c.l.b16 %v340
    %v1575 = vunpack.c.h.b16 %v340
    %v1576 = vunpack.c.l.b16 %v341
    %v1577 = vunpack.c.h.b16 %v341
    %v1578 = vunpack.c.l.b16 %v342
    %v1579 = vunpack.c.h.b16 %v342
    %v1580 = vunpack.c.l.b16 %v343
    %v1581 = vunpack.c.h.b16 %v343
    %v1582 = vunpack.c.l.b16 %v344
    %v1583 = vunpack.c.h.b16 %v344
    %v1584 = vunpack.c.l.b16 %v345
    %v1585 = vunpack.c.h.b16 %v345
    %v1586 = vunpack.c.l.b16 %v346
    %v1587 = vunpack.c.h.b16 %v346
    %v1588 = vunpack.c.l.b16 %v347
    %v1589 = vunpack.c.h.b16 %v347
    %v1590 = vunpack.c.l.b16 %v348
    %v1591 = vunpack.c.h.b16 %v348
    %v1592 = vpack.c.b16 %v1532, %v1528
    %v1593 = vpack.c.b16 %v1533, %v1529
    %v1594 = vpack.c.b16 %v1534, %v1530
    %v1595 = vpack.c.b16 %v1535, %v1531
    %v1596 = vpack.c.b16 %v1540, %v1536
    %v1597 = vpack.c.b16 %v1541, %v1537
    %v1598 = vpack.c.b16 %v1542, %v1538
    %v1599 = vpack.c.b16 %v1543, %v1539
    %v1600 = vpack.c.b16 %v1548, %v1544
    %v1601 = vpack.c.b16 %v1549, %v1545
    %v1602 = vpack.c.b16 %v1550, %v1546
    %v1603 = vpack.c.b16 %v1551, %v1547
    %v1604 = vpack.c.b16 %v1556, %v1552
    %v1605 = vpack.c.b16 %v1557, %v1553
    %v1606 = vpack.c.b16 %v1558, %v1554
    %v1607 = vpack.c.b16 %v1559, %v1555
    %v1608 = vpack.c.b16 %v1564, %v1560
    %v1609 = vpack.c.b16 %v1565, %v1561
    %v1610 = vpack.c.b16 %v1566, %v1562
    %v1611 = vpack.c.b16 %v1567, %v1563
    %v1612 = vpack.c.b16 %v1572, %v1568
    %v1613 = vpack.c.b16 %v1573, %v1569
    %v1614 = vpack.c.b16 %v1574, %v1570
    %v1615 = vpack.c.b16 %v1575, %v1571
    %v1616 = vpack.c.b16 %v1580, %v1576
    %v1617 = vpack.c.b16 %v1581, %v1577
    %v1618 = vpack.c.b16 %v1582, %v1578
    %v1619 = vpack.c.b16 %v1583, %v1579
    %v1620 = vpack.c.b16 %v1588, %v1584
    %v1621 = vpack.c.b16 %v1589, %v1585
    %v1622 = vpack.c.b16 %v1590, %v1586
    %v1623 = vpack.c.b16 %v1591, %v1587
    %1656 = vmatprep.subr.bf16.mxu0 %v1621
    %1657 = vmatpush1.bf16.msra.mxu0 %v1620
    %1658 = vmatprep.subr.bf16.mxu0 %v1617
    %1659 = vmatpush1.bf16.msra.mxu0 %v1616
    %1660 = vmatprep.subr.bf16.mxu0 %v1613
    %1661 = vmatpush1.bf16.msra.mxu0 %v1612
    %1662 = vmatprep.subr.bf16.mxu0 %v1609
    %1663 = vmatpush1.bf16.msra.mxu0 %v1608
    %1664 = vmatprep.subr.bf16.mxu0 %v1605
    %1665 = vmatpush1.bf16.msra.mxu0 %v1604
    %1666 = vmatprep.subr.bf16.mxu0 %v1601
    %1667 = vmatpush1.bf16.msra.mxu0 %v1600
    %1668 = vmatprep.subr.bf16.mxu0 %v1597
    %1669 = vmatpush1.bf16.msra.mxu0 %v1596
    %1670 = vmatprep.subr.bf16.mxu0 %v1593
    %1671 = vmatpush1.bf16.msra.mxu0 %v1592
    %1672 = vmatprep.subr.bf16.mxu0 0
    %1673 = vmatpush2.bf16.msra.mxu0 0
    %1674 = vmatprep.subr.bf16.mxu0 0
    %1675 = vmatpush2.bf16.msra.mxu0 0
    %1676 = vmatprep.subr.bf16.mxu0 0
    %1677 = vmatpush2.bf16.msra.mxu0 0
    %1678 = vmatprep.subr.bf16.mxu0 0
    %1679 = vmatpush2.bf16.msra.mxu0 0
    %1680 = vmatprep.subr.bf16.mxu0 0
    %1681 = vmatpush2.bf16.msra.mxu0 0
    %1682 = vmatprep.subr.bf16.mxu0 0
    %1683 = vmatpush2.bf16.msra.mxu0 0
    %1684 = vmatprep.subr.bf16.mxu0 0
    %1685 = vmatpush2.bf16.msra.mxu0 0
    %1686 = vmatprep.subr.bf16.mxu0 0
    %1687 = vmatpush2.bf16.msra.mxu0 0
    %1688 = vmatprep.mubr.bf16.mxu0 0
    %1689 = vmatmul.mubr.bf16.gmra.mxu0 %v1474
    %v1690 = vpop.f32.mrf.mxu0
    %v1691 = vadd.f32 %v1479, %v1690
    %v1692 = vpop.f32.mrf.mxu0
    %v1693 = vadd.f32 %v1483, %v1692
    %v1694 = vpop.f32.mrf.mxu0
    %v1695 = vpop.f32.mrf.mxu0
    %1696 = vdwg.mxu0
    %1697 = vmatprep.subr.bf16.mxu0 %v1623
    %1698 = vmatpush1.bf16.msra.mxu0 %v1622
    %1699 = vmatprep.subr.bf16.mxu0 %v1619
    %1700 = vmatpush1.bf16.msra.mxu0 %v1618
    %1701 = vmatprep.subr.bf16.mxu0 %v1615
    %1702 = vmatpush1.bf16.msra.mxu0 %v1614
    %1703 = vmatprep.subr.bf16.mxu0 %v1611
    %1704 = vmatpush1.bf16.msra.mxu0 %v1610
    %1705 = vmatprep.subr.bf16.mxu0 %v1607
    %1706 = vmatpush1.bf16.msra.mxu0 %v1606
    %1707 = vmatprep.subr.bf16.mxu0 %v1603
    %1708 = vmatpush1.bf16.msra.mxu0 %v1602
    %1709 = vmatprep.subr.bf16.mxu0 %v1599
    %1710 = vmatpush1.bf16.msra.mxu0 %v1598
    %1711 = vmatprep.subr.bf16.mxu0 %v1595
    %1712 = vmatpush1.bf16.msra.mxu0 %v1594
    %1713 = vmatprep.subr.bf16.mxu0 0
    %1714 = vmatpush2.bf16.msra.mxu0 0
    %1715 = vmatprep.subr.bf16.mxu0 0
    %1716 = vmatpush2.bf16.msra.mxu0 0
    %1717 = vmatprep.subr.bf16.mxu0 0
    %1718 = vmatpush2.bf16.msra.mxu0 0
    %1719 = vmatprep.subr.bf16.mxu0 0
    %1720 = vmatpush2.bf16.msra.mxu0 0
    %1721 = vmatprep.subr.bf16.mxu0 0
    %1722 = vmatpush2.bf16.msra.mxu0 0
    %1723 = vmatprep.subr.bf16.mxu0 0
    %1724 = vmatpush2.bf16.msra.mxu0 0
    %1725 = vmatprep.subr.bf16.mxu0 0
    %1726 = vmatpush2.bf16.msra.mxu0 0
    %1727 = vmatprep.subr.bf16.mxu0 0
    %1728 = vmatpush2.bf16.msra.mxu0 0
    %1729 = vmatprep.mubr.bf16.mxu0 0
    %1730 = vmatmul.mubr.bf16.gmra.mxu0 %v1474
    %v1731 = vpop.f32.mrf.mxu0
    %v1732 = vadd.f32 %v1487, %v1731
    %v1733 = vpop.f32.mrf.mxu0
    %v1734 = vadd.f32 %v1491, %v1733
    %v1735 = vpop.f32.mrf.mxu0
    %v1736 = vpop.f32.mrf.mxu0
    %1737 = vdwg.mxu0
    %v1738 = vmul.f32 %v1691, %v1691
    %v1739 = vmul.f32 %v1693, %v1693
    %v1740 = vmul.f32 %v1732, %v1732
    %v1741 = vmul.f32 %v1734, %v1734
    %v1742 = vmul.f32 %v1691, %v1738
    %v1743 = vmul.f32 %v1693, %v1739
    %v1744 = vmul.f32 %v1732, %v1740
    %v1745 = vmul.f32 %v1734, %v1741
    %v1746 = vmul.f32 %v1742, 0.044715
    %v1747 = vmul.f32 %v1743, 0.044715
    %v1748 = vmul.f32 %v1744, 0.044715
    %v1749 = vmul.f32 %v1745, 0.044715
    %v1750 = vadd.f32 %v1691, %v1746
    %v1751 = vadd.f32 %v1693, %v1747
    %v1752 = vadd.f32 %v1732, %v1748
    %v1753 = vadd.f32 %v1734, %v1749
    %v1754 = vmul.f32 %v1750, 0.7978846
    %v1755 = vmul.f32 %v1751, 0.7978846
    %v1756 = vmul.f32 %v1752, 0.7978846
    %v1757 = vmul.f32 %v1753, 0.7978846
    %v1758 = vtanh.pop %v1754
    %v1759 = vtanh.pop %v1755
    %v1760 = vtanh.pop %v1756
    %v1761 = vtanh.pop %v1757
    %v1762 = vadd.f32 %v1758, 1.0
    %v1763 = vadd.f32 %v1759, 1.0
    %v1764 = vadd.f32 %v1760, 1.0
    %v1765 = vadd.f32 %v1761, 1.0
    %v1766 = vmul.f32 %v1762, 0.5
    %v1767 = vmul.f32 %v1763, 0.5
    %v1768 = vmul.f32 %v1764, 0.5
    %v1769 = vmul.f32 %v1765, 0.5
    %v1770 = vmul.f32 %v1691, %v1766
    %v1771 = vmul.f32 %v1693, %v1767
    %v1772 = vmul.f32 %v1732, %v1768
    %v1773 = vmul.f32 %v1734, %v1769
    %v1774 = vpack.c.bf16 %v1770, %v1770
    %v1775 = vpack.c.bf16 %v1771, %v1771
    %v1776 = vpack.c.bf16 %v1772, %v1772
    %v1777 = vpack.c.bf16 %v1773, %v1773
    %v1779 = vlaneseq
    %v1780 = vshrl.u32 %v1779, 7
    %v1781 = vsub.s32 0, %v1780
    %v1782 = vrot.slane %v414, %v1781
    %v1848 = vunpack.c.l.b16 %v350
    %v1849 = vunpack.c.l.b16 %v351
    %v1850 = vunpack.c.l.b16 %v352
    %v1851 = vunpack.c.l.b16 %v353
    %v1852 = vunpack.c.l.b16 %v354
    %v1853 = vunpack.c.l.b16 %v355
    %v1854 = vunpack.c.l.b16 %v356
    %v1855 = vunpack.c.l.b16 %v357
    %v1856 = vunpack.c.l.b16 %v358
    %v1857 = vunpack.c.l.b16 %v359
    %v1858 = vunpack.c.l.b16 %v360
    %v1859 = vunpack.c.l.b16 %v361
    %v1860 = vunpack.c.l.b16 %v362
    %v1861 = vunpack.c.l.b16 %v363
    %v1862 = vunpack.c.l.b16 %v364
    %v1863 = vunpack.c.l.b16 %v365
    %v1864 = vunpack.c.l.b16 %v366
    %v1865 = vunpack.c.l.b16 %v367
    %v1866 = vunpack.c.l.b16 %v368
    %v1867 = vunpack.c.l.b16 %v369
    %v1868 = vunpack.c.l.b16 %v370
    %v1869 = vunpack.c.l.b16 %v371
    %v1870 = vunpack.c.l.b16 %v372
    %v1871 = vunpack.c.l.b16 %v373
    %v1872 = vunpack.c.l.b16 %v374
    %v1873 = vunpack.c.l.b16 %v375
    %v1874 = vunpack.c.l.b16 %v376
    %v1875 = vunpack.c.l.b16 %v377
    %v1876 = vunpack.c.l.b16 %v378
    %v1877 = vunpack.c.l.b16 %v379
    %v1878 = vunpack.c.l.b16 %v380
    %v1879 = vunpack.c.l.b16 %v381
    %v1880 = vunpack.c.l.b16 %v382
    %v1881 = vunpack.c.l.b16 %v383
    %v1882 = vunpack.c.l.b16 %v384
    %v1883 = vunpack.c.l.b16 %v385
    %v1884 = vunpack.c.l.b16 %v386
    %v1885 = vunpack.c.l.b16 %v387
    %v1886 = vunpack.c.l.b16 %v388
    %v1887 = vunpack.c.l.b16 %v389
    %v1888 = vunpack.c.l.b16 %v390
    %v1889 = vunpack.c.l.b16 %v391
    %v1890 = vunpack.c.l.b16 %v392
    %v1891 = vunpack.c.l.b16 %v393
    %v1892 = vunpack.c.l.b16 %v394
    %v1893 = vunpack.c.l.b16 %v395
    %v1894 = vunpack.c.l.b16 %v396
    %v1895 = vunpack.c.l.b16 %v397
    %v1896 = vunpack.c.l.b16 %v398
    %v1897 = vunpack.c.l.b16 %v399
    %v1898 = vunpack.c.l.b16 %v400
    %v1899 = vunpack.c.l.b16 %v401
    %v1900 = vunpack.c.l.b16 %v402
    %v1901 = vunpack.c.l.b16 %v403
    %v1902 = vunpack.c.l.b16 %v404
    %v1903 = vunpack.c.l.b16 %v405
    %v1904 = vunpack.c.l.b16 %v406
    %v1905 = vunpack.c.l.b16 %v407
    %v1906 = vunpack.c.l.b16 %v408
    %v1907 = vunpack.c.l.b16 %v409
    %v1908 = vunpack.c.l.b16 %v410
    %v1909 = vunpack.c.l.b16 %v411
    %v1910 = vunpack.c.l.b16 %v412
    %v1911 = vunpack.c.l.b16 %v413
    %v1912 = vpack.c.b16 %v1849, %v1848
    %v1913 = vpack.c.b16 %v1851, %v1850
    %v1914 = vpack.c.b16 %v1853, %v1852
    %v1915 = vpack.c.b16 %v1855, %v1854
    %v1916 = vpack.c.b16 %v1857, %v1856
    %v1917 = vpack.c.b16 %v1859, %v1858
    %v1918 = vpack.c.b16 %v1861, %v1860
    %v1919 = vpack.c.b16 %v1863, %v1862
    %v1920 = vpack.c.b16 %v1865, %v1864
    %v1921 = vpack.c.b16 %v1867, %v1866
    %v1922 = vpack.c.b16 %v1869, %v1868
    %v1923 = vpack.c.b16 %v1871, %v1870
    %v1924 = vpack.c.b16 %v1873, %v1872
    %v1925 = vpack.c.b16 %v1875, %v1874
    %v1926 = vpack.c.b16 %v1877, %v1876
    %v1927 = vpack.c.b16 %v1879, %v1878
    %v1928 = vpack.c.b16 %v1881, %v1880
    %v1929 = vpack.c.b16 %v1883, %v1882
    %v1930 = vpack.c.b16 %v1885, %v1884
    %v1931 = vpack.c.b16 %v1887, %v1886
    %v1932 = vpack.c.b16 %v1889, %v1888
    %v1933 = vpack.c.b16 %v1891, %v1890
    %v1934 = vpack.c.b16 %v1893, %v1892
    %v1935 = vpack.c.b16 %v1895, %v1894
    %v1936 = vpack.c.b16 %v1897, %v1896
    %v1937 = vpack.c.b16 %v1899, %v1898
    %v1938 = vpack.c.b16 %v1901, %v1900
    %v1939 = vpack.c.b16 %v1903, %v1902
    %v1940 = vpack.c.b16 %v1905, %v1904
    %v1941 = vpack.c.b16 %v1907, %v1906
    %v1942 = vpack.c.b16 %v1909, %v1908
    %v1943 = vpack.c.b16 %v1911, %v1910
    %1976 = vmatprep.subr.bf16.mxu0 0
    %1977 = vmatpush1.bf16.msra.mxu0 %v1919
    %1978 = vmatprep.subr.bf16.mxu0 0
    %1979 = vmatpush1.bf16.msra.mxu0 %v1918
    %1980 = vmatprep.subr.bf16.mxu0 0
    %1981 = vmatpush1.bf16.msra.mxu0 %v1917
    %1982 = vmatprep.subr.bf16.mxu0 0
    %1983 = vmatpush1.bf16.msra.mxu0 %v1916
    %1984 = vmatprep.subr.bf16.mxu0 0
    %1985 = vmatpush1.bf16.msra.mxu0 %v1915
    %1986 = vmatprep.subr.bf16.mxu0 0
    %1987 = vmatpush1.bf16.msra.mxu0 %v1914
    %1988 = vmatprep.subr.bf16.mxu0 0
    %1989 = vmatpush1.bf16.msra.mxu0 %v1913
    %1990 = vmatprep.subr.bf16.mxu0 0
    %1991 = vmatpush1.bf16.msra.mxu0 %v1912
    %1992 = vmatprep.subr.bf16.mxu0 0
    %1993 = vmatpush2.bf16.msra.mxu0 %v1927
    %1994 = vmatprep.subr.bf16.mxu0 0
    %1995 = vmatpush2.bf16.msra.mxu0 %v1926
    %1996 = vmatprep.subr.bf16.mxu0 0
    %1997 = vmatpush2.bf16.msra.mxu0 %v1925
    %1998 = vmatprep.subr.bf16.mxu0 0
    %1999 = vmatpush2.bf16.msra.mxu0 %v1924
    %2000 = vmatprep.subr.bf16.mxu0 0
    %2001 = vmatpush2.bf16.msra.mxu0 %v1923
    %2002 = vmatprep.subr.bf16.mxu0 0
    %2003 = vmatpush2.bf16.msra.mxu0 %v1922
    %2004 = vmatprep.subr.bf16.mxu0 0
    %2005 = vmatpush2.bf16.msra.mxu0 %v1921
    %2006 = vmatprep.subr.bf16.mxu0 0
    %2007 = vmatpush2.bf16.msra.mxu0 %v1920
    %2008 = vmatprep.mubr.bf16.mxu0 %v1775
    %2009 = vmatmul.mubr.bf16.gmra.mxu0 %v1774
    %v2010 = vpop.f32.mrf.mxu0
    %v2011 = vadd.f32 %v1782, %v2010
    %v2012 = vpop.f32.mrf.mxu0
    %v2013 = vpop.f32.mrf.mxu0
    %v2014 = vpop.f32.mrf.mxu0
    %2015 = vdwg.mxu0
    %2016 = vmatprep.subr.bf16.mxu0 0
    %2017 = vmatpush1.bf16.msra.mxu0 %v1935
    %2018 = vmatprep.subr.bf16.mxu0 0
    %2019 = vmatpush1.bf16.msra.mxu0 %v1934
    %2020 = vmatprep.subr.bf16.mxu0 0
    %2021 = vmatpush1.bf16.msra.mxu0 %v1933
    %2022 = vmatprep.subr.bf16.mxu0 0
    %2023 = vmatpush1.bf16.msra.mxu0 %v1932
    %2024 = vmatprep.subr.bf16.mxu0 0
    %2025 = vmatpush1.bf16.msra.mxu0 %v1931
    %2026 = vmatprep.subr.bf16.mxu0 0
    %2027 = vmatpush1.bf16.msra.mxu0 %v1930
    %2028 = vmatprep.subr.bf16.mxu0 0
    %2029 = vmatpush1.bf16.msra.mxu0 %v1929
    %2030 = vmatprep.subr.bf16.mxu0 0
    %2031 = vmatpush1.bf16.msra.mxu0 %v1928
    %2032 = vmatprep.subr.bf16.mxu0 0
    %2033 = vmatpush2.bf16.msra.mxu0 %v1943
    %2034 = vmatprep.subr.bf16.mxu0 0
    %2035 = vmatpush2.bf16.msra.mxu0 %v1942
    %2036 = vmatprep.subr.bf16.mxu0 0
    %2037 = vmatpush2.bf16.msra.mxu0 %v1941
    %2038 = vmatprep.subr.bf16.mxu0 0
    %2039 = vmatpush2.bf16.msra.mxu0 %v1940
    %2040 = vmatprep.subr.bf16.mxu0 0
    %2041 = vmatpush2.bf16.msra.mxu0 %v1939
    %2042 = vmatprep.subr.bf16.mxu0 0
    %2043 = vmatpush2.bf16.msra.mxu0 %v1938
    %2044 = vmatprep.subr.bf16.mxu0 0
    %2045 = vmatpush2.bf16.msra.mxu0 %v1937
    %2046 = vmatprep.subr.bf16.mxu0 0
    %2047 = vmatpush2.bf16.msra.mxu0 %v1936
    %2048 = vmatprep.mubr.bf16.mxu0 %v1777
    %2049 = vmatmul.mubr.bf16.gmra.mxu0 %v1776
    %v2050 = vpop.f32.mrf.mxu0
    %v2051 = vadd.f32 %v2011, %v2050
    %v2052 = vpop.f32.mrf.mxu0
    %v2053 = vpop.f32.mrf.mxu0
    %v2054 = vpop.f32.mrf.mxu0
    %2055 = vdwg.mxu0
    %v2056 = vadd.f32 %v1448, %v2051
    %s2057 = scalar_lea.vmem %s4, 1
    %v2058 = vld [vmem:[%s2057] sm:$0x1]
    %s2059 = scalar_lea.vmem %s5, 1
    %v2060 = vld [vmem:[%s2059] sm:$0x1]
    %s2061 = scalar_lea.vmem [#allocation3], 192
    %v2062 = vld [vmem:[%s2061] sm:$0xff]
    %v2063 = vld [vmem:[%s2061 + $0x8] sm:$0xf]
    %v2064 = vld [vmem:[%s2061 + $0xc] sm:$0xff]
    %v2065 = vld [vmem:[%s2061 + $0x14] sm:$0xf]
    %v2066 = vld [vmem:[%s2061 + $0x18] sm:$0xff]
    %v2067 = vld [vmem:[%s2061 + $0x20] sm:$0xf]
    %v2068 = vld [vmem:[%s2061 + $0x24] sm:$0xff]
    %v2069 = vld [vmem:[%s2061 + $0x2c] sm:$0xf]
    %v2070 = vld [vmem:[%s2061 + $0x30] sm:$0xff]
    %v2071 = vld [vmem:[%s2061 + $0x38] sm:$0xf]
    %v2072 = vld [vmem:[%s2061 + $0x3c] sm:$0xff]
    %v2073 = vld [vmem:[%s2061 + $0x44] sm:$0xf]
    %v2074 = vld [vmem:[%s2061 + $0x48] sm:$0xff]
    %v2075 = vld [vmem:[%s2061 + $0x50] sm:$0xf]
    %v2076 = vld [vmem:[%s2061 + $0x54] sm:$0xff]
    %v2077 = vld [vmem:[%s2061 + $0x5c] sm:$0xf]
    %v2078 = vld [vmem:[%s2061 + $0x60] sm:$0xff]
    %v2079 = vld [vmem:[%s2061 + $0x68] sm:$0xf]
    %v2080 = vld [vmem:[%s2061 + $0x6c] sm:$0xff]
    %v2081 = vld [vmem:[%s2061 + $0x74] sm:$0xf]
    %v2082 = vld [vmem:[%s2061 + $0x78] sm:$0xff]
    %v2083 = vld [vmem:[%s2061 + $0x80] sm:$0xf]
    %v2084 = vld [vmem:[%s2061 + $0x84] sm:$0xff]
    %v2085 = vld [vmem:[%s2061 + $0x8c] sm:$0xf]
    %v2086 = vld [vmem:[%s2061 + $0x90] sm:$0xff]
    %v2087 = vld [vmem:[%s2061 + $0x98] sm:$0xf]
    %v2088 = vld [vmem:[%s2061 + $0x9c] sm:$0xff]
    %v2089 = vld [vmem:[%s2061 + $0xa4] sm:$0xf]
    %v2090 = vld [vmem:[%s2061 + $0xa8] sm:$0xff]
    %v2091 = vld [vmem:[%s2061 + $0xb0] sm:$0xf]
    %v2092 = vld [vmem:[%s2061 + $0xb4] sm:$0xff]
    %v2093 = vld [vmem:[%s2061 + $0xbc] sm:$0xf]
    %s2094 = scalar_lea.vmem %s7, 3
    %v2095 = vld [vmem:[%s2094] sm:$0x7]
    %s2096 = scalar_lea.vmem [#allocation6], 64
    %v2097 = vld [vmem:[%s2096] sm:$0xf]
    %v2098 = vld [vmem:[%s2096 + $0x4] sm:$0xf]
    %v2099 = vld [vmem:[%s2096 + $0x8] sm:$0xf]
    %v2100 = vld [vmem:[%s2096 + $0xc] sm:$0xf]
    %v2101 = vld [vmem:[%s2096 + $0x10] sm:$0xf]
    %v2102 = vld [vmem:[%s2096 + $0x14] sm:$0xf]
    %v2103 = vld [vmem:[%s2096 + $0x18] sm:$0xf]
    %v2104 = vld [vmem:[%s2096 + $0x1c] sm:$0xf]
    %v2105 = vld [vmem:[%s2096 + $0x20] sm:$0xf]
    %v2106 = vld [vmem:[%s2096 + $0x24] sm:$0xf]
    %v2107 = vld [vmem:[%s2096 + $0x28] sm:$0xf]
    %v2108 = vld [vmem:[%s2096 + $0x2c] sm:$0xf]
    %v2109 = vld [vmem:[%s2096 + $0x30] sm:$0xf]
    %v2110 = vld [vmem:[%s2096 + $0x34] sm:$0xf]
    %v2111 = vld [vmem:[%s2096 + $0x38] sm:$0xf]
    %v2112 = vld [vmem:[%s2096 + $0x3c] sm:$0xf]
    %s2113 = scalar_lea.vmem %s9, 1
    %v2114 = vld [vmem:[%s2113] sm:$0x1]
    %s2115 = scalar_lea.vmem %s10, 1
    %v2116 = vld [vmem:[%s2115] sm:$0x1]
    %s2117 = scalar_lea.vmem %s11, 1
    %v2118 = vld [vmem:[%s2117] sm:$0x1]
    %s2119 = scalar_lea.vmem %s12, 256
    %v2120 = vld [vmem:[%s2119] sm:$0xff]
    %v2121 = vld [vmem:[%s2119 + $0x8] sm:$0xff]
    %v2122 = vld [vmem:[%s2119 + $0x10] sm:$0xff]
    %v2123 = vld [vmem:[%s2119 + $0x18] sm:$0xff]
    %v2124 = vld [vmem:[%s2119 + $0x20] sm:$0xff]
    %v2125 = vld [vmem:[%s2119 + $0x28] sm:$0xff]
    %v2126 = vld [vmem:[%s2119 + $0x30] sm:$0xff]
    %v2127 = vld [vmem:[%s2119 + $0x38] sm:$0xff]
    %v2128 = vld [vmem:[%s2119 + $0x40] sm:$0xff]
    %v2129 = vld [vmem:[%s2119 + $0x48] sm:$0xff]
    %v2130 = vld [vmem:[%s2119 + $0x50] sm:$0xff]
    %v2131 = vld [vmem:[%s2119 + $0x58] sm:$0xff]
    %v2132 = vld [vmem:[%s2119 + $0x60] sm:$0xff]
    %v2133 = vld [vmem:[%s2119 + $0x68] sm:$0xff]
    %v2134 = vld [vmem:[%s2119 + $0x70] sm:$0xff]
    %v2135 = vld [vmem:[%s2119 + $0x78] sm:$0xff]
    %v2136 = vld [vmem:[%s2119 + $0x80] sm:$0xff]
    %v2137 = vld [vmem:[%s2119 + $0x88] sm:$0xff]
    %v2138 = vld [vmem:[%s2119 + $0x90] sm:$0xff]
    %v2139 = vld [vmem:[%s2119 + $0x98] sm:$0xff]
    %v2140 = vld [vmem:[%s2119 + $0xa0] sm:$0xff]
    %v2141 = vld [vmem:[%s2119 + $0xa8] sm:$0xff]
    %v2142 = vld [vmem:[%s2119 + $0xb0] sm:$0xff]
    %v2143 = vld [vmem:[%s2119 + $0xb8] sm:$0xff]
    %v2144 = vld [vmem:[%s2119 + $0xc0] sm:$0xff]
    %v2145 = vld [vmem:[%s2119 + $0xc8] sm:$0xff]
    %v2146 = vld [vmem:[%s2119 + $0xd0] sm:$0xff]
    %v2147 = vld [vmem:[%s2119 + $0xd8] sm:$0xff]
    %v2148 = vld [vmem:[%s2119 + $0xe0] sm:$0xff]
    %v2149 = vld [vmem:[%s2119 + $0xe8] sm:$0xff]
    %v2150 = vld [vmem:[%s2119 + $0xf0] sm:$0xff]
    %v2151 = vld [vmem:[%s2119 + $0xf8] sm:$0xff]
    %s2152 = scalar_lea.vmem %s13, 4
    %v2153 = vld [vmem:[%s2152] sm:$0xf]
    %s2154 = scalar_lea.vmem %s14, 256
    %v2155 = vld [vmem:[%s2154] sm:$0xf]
    %v2156 = vld [vmem:[%s2154 + $0x4] sm:$0xf]
    %v2157 = vld [vmem:[%s2154 + $0x8] sm:$0xf]
    %v2158 = vld [vmem:[%s2154 + $0xc] sm:$0xf]
    %v2159 = vld [vmem:[%s2154 + $0x10] sm:$0xf]
    %v2160 = vld [vmem:[%s2154 + $0x14] sm:$0xf]
    %v2161 = vld [vmem:[%s2154 + $0x18] sm:$0xf]
    %v2162 = vld [vmem:[%s2154 + $0x1c] sm:$0xf]
    %v2163 = vld [vmem:[%s2154 + $0x20] sm:$0xf]
    %v2164 = vld [vmem:[%s2154 + $0x24] sm:$0xf]
    %v2165 = vld [vmem:[%s2154 + $0x28] sm:$0xf]
    %v2166 = vld [vmem:[%s2154 + $0x2c] sm:$0xf]
    %v2167 = vld [vmem:[%s2154 + $0x30] sm:$0xf]
    %v2168 = vld [vmem:[%s2154 + $0x34] sm:$0xf]
    %v2169 = vld [vmem:[%s2154 + $0x38] sm:$0xf]
    %v2170 = vld [vmem:[%s2154 + $0x3c] sm:$0xf]
    %v2171 = vld [vmem:[%s2154 + $0x40] sm:$0xf]
    %v2172 = vld [vmem:[%s2154 + $0x44] sm:$0xf]
    %v2173 = vld [vmem:[%s2154 + $0x48] sm:$0xf]
    %v2174 = vld [vmem:[%s2154 + $0x4c] sm:$0xf]
    %v2175 = vld [vmem:[%s2154 + $0x50] sm:$0xf]
    %v2176 = vld [vmem:[%s2154 + $0x54] sm:$0xf]
    %v2177 = vld [vmem:[%s2154 + $0x58] sm:$0xf]
    %v2178 = vld [vmem:[%s2154 + $0x5c] sm:$0xf]
    %v2179 = vld [vmem:[%s2154 + $0x60] sm:$0xf]
    %v2180 = vld [vmem:[%s2154 + $0x64] sm:$0xf]
    %v2181 = vld [vmem:[%s2154 + $0x68] sm:$0xf]
    %v2182 = vld [vmem:[%s2154 + $0x6c] sm:$0xf]
    %v2183 = vld [vmem:[%s2154 + $0x70] sm:$0xf]
    %v2184 = vld [vmem:[%s2154 + $0x74] sm:$0xf]
    %v2185 = vld [vmem:[%s2154 + $0x78] sm:$0xf]
    %v2186 = vld [vmem:[%s2154 + $0x7c] sm:$0xf]
    %v2187 = vld [vmem:[%s2154 + $0x80] sm:$0xf]
    %v2188 = vld [vmem:[%s2154 + $0x84] sm:$0xf]
    %v2189 = vld [vmem:[%s2154 + $0x88] sm:$0xf]
    %v2190 = vld [vmem:[%s2154 + $0x8c] sm:$0xf]
    %v2191 = vld [vmem:[%s2154 + $0x90] sm:$0xf]
    %v2192 = vld [vmem:[%s2154 + $0x94] sm:$0xf]
    %v2193 = vld [vmem:[%s2154 + $0x98] sm:$0xf]
    %v2194 = vld [vmem:[%s2154 + $0x9c] sm:$0xf]
    %v2195 = vld [vmem:[%s2154 + $0xa0] sm:$0xf]
    %v2196 = vld [vmem:[%s2154 + $0xa4] sm:$0xf]
    %v2197 = vld [vmem:[%s2154 + $0xa8] sm:$0xf]
    %v2198 = vld [vmem:[%s2154 + $0xac] sm:$0xf]
    %v2199 = vld [vmem:[%s2154 + $0xb0] sm:$0xf]
    %v2200 = vld [vmem:[%s2154 + $0xb4] sm:$0xf]
    %v2201 = vld [vmem:[%s2154 + $0xb8] sm:$0xf]
    %v2202 = vld [vmem:[%s2154 + $0xbc] sm:$0xf]
    %v2203 = vld [vmem:[%s2154 + $0xc0] sm:$0xf]
    %v2204 = vld [vmem:[%s2154 + $0xc4] sm:$0xf]
    %v2205 = vld [vmem:[%s2154 + $0xc8] sm:$0xf]
    %v2206 = vld [vmem:[%s2154 + $0xcc] sm:$0xf]
    %v2207 = vld [vmem:[%s2154 + $0xd0] sm:$0xf]
    %v2208 = vld [vmem:[%s2154 + $0xd4] sm:$0xf]
    %v2209 = vld [vmem:[%s2154 + $0xd8] sm:$0xf]
    %v2210 = vld [vmem:[%s2154 + $0xdc] sm:$0xf]
    %v2211 = vld [vmem:[%s2154 + $0xe0] sm:$0xf]
    %v2212 = vld [vmem:[%s2154 + $0xe4] sm:$0xf]
    %v2213 = vld [vmem:[%s2154 + $0xe8] sm:$0xf]
    %v2214 = vld [vmem:[%s2154 + $0xec] sm:$0xf]
    %v2215 = vld [vmem:[%s2154 + $0xf0] sm:$0xf]
    %v2216 = vld [vmem:[%s2154 + $0xf4] sm:$0xf]
    %v2217 = vld [vmem:[%s2154 + $0xf8] sm:$0xf]
    %v2218 = vld [vmem:[%s2154 + $0xfc] sm:$0xf]
    %s2219 = scalar_lea.vmem %s15, 1
    %v2220 = vld [vmem:[%s2219] sm:$0x1]
    %2221 = vadd.xlane.f32.xlu0 %v2056
    %v2222 = vpop.xlane.xlu0 %2221
    %v2223 = vmul.f32 %v2222, %v417
    %v2224 = vsub.f32 %v2056, %v2223
    %v2225 = vmul.f32 %v2224, %v2224
    %2226 = vadd.xlane.f32.xlu0 %v2225
    %v2227 = vpop.xlane.xlu0 %2226
    %v2228 = vmul.f32 %v2227, %v417
    %v2229 = vadd.f32 %v2228, 1e-05
    %v2230 = vrsqrt.pop %v2229
    %v2231 = vmul.f32 %v2224, %v2230
    %v2233 = vlaneseq
    %v2234 = vshrl.u32 %v2233, 7
    %v2235 = vsub.s32 0, %v2234
    %v2236 = vrot.slane %v2058, %v2235
    %v2238 = vmul.f32 %v2231, %v2236
    %v2240 = vlaneseq
    %v2241 = vshrl.u32 %v2240, 7
    %v2242 = vsub.s32 0, %v2241
    %v2243 = vrot.slane %v2060, %v2242
    %v2245 = vadd.f32 %v2238, %v2243
    %v2246 = vpack.c.bf16 %v2245, %v2245
    %v2248 = vlaneseq
    %v2249 = vshrl.u32 %v2248, 7
    %v2250 = vsub.s32 0, %v2249
    %v2251 = vrot.slane %v2095, %v2250
    %v2252 = vlaneseq
    %v2253 = vshrl.u32 %v2252, 7
    %v2254 = vsub.s32 1, %v2253
    %v2255 = vrot.slane %v2095, %v2254
    %v2256 = vlaneseq
    %v2257 = vshrl.u32 %v2256, 7
    %v2258 = vsub.s32 2, %v2257
    %v2259 = vrot.slane %v2095, %v2258
    %v2295 = vunpack.c.l.b16 %v2062
    %v2296 = vunpack.c.h.b16 %v2062
    %v2297 = vunpack.c.l.b16 %v2063
    %v2298 = vunpack.c.l.b16 %v2064
    %v2299 = vunpack.c.h.b16 %v2064
    %v2300 = vunpack.c.l.b16 %v2065
    %v2301 = vunpack.c.l.b16 %v2066
    %v2302 = vunpack.c.h.b16 %v2066
    %v2303 = vunpack.c.l.b16 %v2067
    %v2304 = vunpack.c.l.b16 %v2068
    %v2305 = vunpack.c.h.b16 %v2068
    %v2306 = vunpack.c.l.b16 %v2069
    %v2307 = vunpack.c.l.b16 %v2070
    %v2308 = vunpack.c.h.b16 %v2070
    %v2309 = vunpack.c.l.b16 %v2071
    %v2310 = vunpack.c.l.b16 %v2072
    %v2311 = vunpack.c.h.b16 %v2072
    %v2312 = vunpack.c.l.b16 %v2073
    %v2313 = vunpack.c.l.b16 %v2074
    %v2314 = vunpack.c.h.b16 %v2074
    %v2315 = vunpack.c.l.b16 %v2075
    %v2316 = vunpack.c.l.b16 %v2076
    %v2317 = vunpack.c.h.b16 %v2076
    %v2318 = vunpack.c.l.b16 %v2077
    %v2319 = vunpack.c.l.b16 %v2078
    %v2320 = vunpack.c.h.b16 %v2078
    %v2321 = vunpack.c.l.b16 %v2079
    %v2322 = vunpack.c.l.b16 %v2080
    %v2323 = vunpack.c.h.b16 %v2080
    %v2324 = vunpack.c.l.b16 %v2081
    %v2325 = vunpack.c.l.b16 %v2082
    %v2326 = vunpack.c.h.b16 %v2082
    %v2327 = vunpack.c.l.b16 %v2083
    %v2328 = vunpack.c.l.b16 %v2084
    %v2329 = vunpack.c.h.b16 %v2084
    %v2330 = vunpack.c.l.b16 %v2085
    %v2331 = vunpack.c.l.b16 %v2086
    %v2332 = vunpack.c.h.b16 %v2086
    %v2333 = vunpack.c.l.b16 %v2087
    %v2334 = vunpack.c.l.b16 %v2088
    %v2335 = vunpack.c.h.b16 %v2088
    %v2336 = vunpack.c.l.b16 %v2089
    %v2337 = vunpack.c.l.b16 %v2090
    %v2338 = vunpack.c.h.b16 %v2090
    %v2339 = vunpack.c.l.b16 %v2091
    %v2340 = vunpack.c.l.b16 %v2092
    %v2341 = vunpack.c.h.b16 %v2092
    %v2342 = vunpack.c.l.b16 %v2093
    %v2343 = vpack.c.b16 %v2298, %v2295
    %v2344 = vpack.c.b16 %v2299, %v2296
    %v2345 = vpack.c.b16 %v2300, %v2297
    %v2346 = vpack.c.b16 %v2304, %v2301
    %v2347 = vpack.c.b16 %v2305, %v2302
    %v2348 = vpack.c.b16 %v2306, %v2303
    %v2349 = vpack.c.b16 %v2310, %v2307
    %v2350 = vpack.c.b16 %v2311, %v2308
    %v2351 = vpack.c.b16 %v2312, %v2309
    %v2352 = vpack.c.b16 %v2316, %v2313
    %v2353 = vpack.c.b16 %v2317, %v2314
    %v2354 = vpack.c.b16 %v2318, %v2315
    %v2355 = vpack.c.b16 %v2322, %v2319
    %v2356 = vpack.c.b16 %v2323, %v2320
    %v2357 = vpack.c.b16 %v2324, %v2321
    %v2358 = vpack.c.b16 %v2328, %v2325
    %v2359 = vpack.c.b16 %v2329, %v2326
    %v2360 = vpack.c.b16 %v2330, %v2327
    %v2361 = vpack.c.b16 %v2334, %v2331
    %v2362 = vpack.c.b16 %v2335, %v2332
    %v2363 = vpack.c.b16 %v2336, %v2333
    %v2364 = vpack.c.b16 %v2340, %v2337
    %v2365 = vpack.c.b16 %v2341, %v2338
    %v2366 = vpack.c.b16 %v2342, %v2339
    %2391 = vmatprep.subr.bf16.mxu0 %v2365
    %2392 = vmatpush1.bf16.msra.mxu0 %v2364
    %2393 = vmatprep.subr.bf16.mxu0 %v2362
    %2394 = vmatpush1.bf16.msra.mxu0 %v2361
    %2395 = vmatprep.subr.bf16.mxu0 %v2359
    %2396 = vmatpush1.bf16.msra.mxu0 %v2358
    %2397 = vmatprep.subr.bf16.mxu0 %v2356
    %2398 = vmatpush1.bf16.msra.mxu0 %v2355
    %2399 = vmatprep.subr.bf16.mxu0 %v2353
    %2400 = vmatpush1.bf16.msra.mxu0 %v2352
    %2401 = vmatprep.subr.bf16.mxu0 %v2350
    %2402 = vmatpush1.bf16.msra.mxu0 %v2349
    %2403 = vmatprep.subr.bf16.mxu0 %v2347
    %2404 = vmatpush1.bf16.msra.mxu0 %v2346
    %2405 = vmatprep.subr.bf16.mxu0 %v2344
    %2406 = vmatpush1.bf16.msra.mxu0 %v2343
    %2407 = vmatprep.subr.bf16.mxu0 0
    %2408 = vmatpush2.bf16.msra.mxu0 0
    %2409 = vmatprep.subr.bf16.mxu0 0
    %2410 = vmatpush2.bf16.msra.mxu0 0
    %2411 = vmatprep.subr.bf16.mxu0 0
    %2412 = vmatpush2.bf16.msra.mxu0 0
    %2413 = vmatprep.subr.bf16.mxu0 0
    %2414 = vmatpush2.bf16.msra.mxu0 0
    %2415 = vmatprep.subr.bf16.mxu0 0
    %2416 = vmatpush2.bf16.msra.mxu0 0
    %2417 = vmatprep.subr.bf16.mxu0 0
    %2418 = vmatpush2.bf16.msra.mxu0 0
    %2419 = vmatprep.subr.bf16.mxu0 0
    %2420 = vmatpush2.bf16.msra.mxu0 0
    %2421 = vmatprep.subr.bf16.mxu0 0
    %2422 = vmatpush2.bf16.msra.mxu0 0
    %2423 = vmatprep.mubr.bf16.mxu0 0
    %2424 = vmatmul.mubr.bf16.gmra.mxu0 %v2246
    %v2425 = vpop.f32.mrf.mxu0
    %v2426 = vadd.f32 %v2251, %v2425
    %v2427 = vpop.f32.mrf.mxu0
    %v2428 = vadd.f32 %v2255, %v2427
    %v2429 = vpop.f32.mrf.mxu0
    %v2430 = vpop.f32.mrf.mxu0
    %2431 = vdwg.mxu0
    %2432 = vmatprep.subr.bf16.mxu0 0
    %2433 = vmatpush1.bf16.msra.mxu0 %v2366
    %2434 = vmatprep.subr.bf16.mxu0 0
    %2435 = vmatpush1.bf16.msra.mxu0 %v2363
    %2436 = vmatprep.subr.bf16.mxu0 0
    %2437 = vmatpush1.bf16.msra.mxu0 %v2360
    %2438 = vmatprep.subr.bf16.mxu0 0
    %2439 = vmatpush1.bf16.msra.mxu0 %v2357
    %2440 = vmatprep.subr.bf16.mxu0 0
    %2441 = vmatpush1.bf16.msra.mxu0 %v2354
    %2442 = vmatprep.subr.bf16.mxu0 0
    %2443 = vmatpush1.bf16.msra.mxu0 %v2351
    %2444 = vmatprep.subr.bf16.mxu0 0
    %2445 = vmatpush1.bf16.msra.mxu0 %v2348
    %2446 = vmatprep.subr.bf16.mxu0 0
    %2447 = vmatpush1.bf16.msra.mxu0 %v2345
    %2448 = vmatprep.subr.bf16.mxu0 0
    %2449 = vmatpush2.bf16.msra.mxu0 0
    %2450 = vmatprep.subr.bf16.mxu0 0
    %2451 = vmatpush2.bf16.msra.mxu0 0
    %2452 = vmatprep.subr.bf16.mxu0 0
    %2453 = vmatpush2.bf16.msra.mxu0 0
    %2454 = vmatprep.subr.bf16.mxu0 0
    %2455 = vmatpush2.bf16.msra.mxu0 0
    %2456 = vmatprep.subr.bf16.mxu0 0
    %2457 = vmatpush2.bf16.msra.mxu0 0
    %2458 = vmatprep.subr.bf16.mxu0 0
    %2459 = vmatpush2.bf16.msra.mxu0 0
    %2460 = vmatprep.subr.bf16.mxu0 0
    %2461 = vmatpush2.bf16.msra.mxu0 0
    %2462 = vmatprep.subr.bf16.mxu0 0
    %2463 = vmatpush2.bf16.msra.mxu0 0
    %2464 = vmatprep.mubr.bf16.mxu0 0
    %2465 = vmatmul.mubr.bf16.gmra.mxu0 %v2246
    %v2466 = vpop.f32.mrf.mxu0
    %v2467 = vadd.f32 %v2259, %v2466
    %v2468 = vpop.f32.mrf.mxu0
    %v2469 = vpop.f32.mrf.mxu0
    %v2470 = vpop.f32.mrf.mxu0
    %2471 = vdwg.mxu0
    %2473 = vrot.lane.b32.xlu0 %v2426, 96
    %v2474 = vpop.permute.xlu0 %2473
    %2475 = vrot.lane.b32.xlu0 %v2426, 64
    %v2476 = vpop.permute.xlu0 %2475
    %2477 = vrot.lane.b32.xlu0 %v2426, 32
    %v2478 = vpop.permute.xlu0 %2477
    %2480 = vrot.lane.b32.xlu0 %v2428, 96
    %v2481 = vpop.permute.xlu0 %2480
    %2482 = vrot.lane.b32.xlu0 %v2428, 64
    %v2483 = vpop.permute.xlu0 %2482
    %2484 = vrot.lane.b32.xlu0 %v2428, 32
    %v2485 = vpop.permute.xlu0 %2484
    %2487 = vrot.lane.b32.xlu0 %v2467, 96
    %v2488 = vpop.permute.xlu0 %2487
    %2490 = vrot.lane.b32.xlu0 %v2467, 64
    %v2491 = vpop.permute.xlu0 %2490
    %2493 = vrot.lane.b32.xlu0 %v2467, 32
    %v2494 = vpop.permute.xlu0 %2493
    %v2496 = vsel %vm691, %v2426, 0
    %v2498 = vsel %vm691, %v2428, 0
    %2500 = vmatprep.subr.mxu0 0.0
    %2501 = vmatpush1.xpose.msra.mxu0 0.0
    %2502 = vmatprep.subr.mxu0 0.0
    %2503 = vmatpush1.xpose.msra.mxu0 0.0
    %2504 = vmatprep.subr.mxu0 0.0
    %2505 = vmatpush1.xpose.msra.mxu0 0.0
    %2506 = vmatprep.subr.mxu0 0.0
    %2507 = vmatpush1.xpose.msra.mxu0 0.0
    %2508 = vmatprep.subr.mxu0 0.0
    %2509 = vmatpush1.xpose.msra.mxu0 0.0
    %2510 = vmatprep.subr.mxu0 0.0
    %2511 = vmatpush1.xpose.msra.mxu0 0.0
    %2512 = vmatprep.subr.mxu0 0.0
    %2513 = vmatpush1.xpose.msra.mxu0 0.0
    %2514 = vmatprep.subr.mxu0 0.0
    %2515 = vmatpush1.xpose.msra.mxu0 0.0
    %2516 = vmatprep.subr.mxu0 0.0
    %2517 = vmatpush1.xpose.msra.mxu0 0.0
    %2518 = vmatprep.subr.mxu0 0.0
    %2519 = vmatpush1.xpose.msra.mxu0 0.0
    %2520 = vmatprep.subr.mxu0 0.0
    %2521 = vmatpush1.xpose.msra.mxu0 0.0
    %2522 = vmatprep.subr.mxu0 0.0
    %2523 = vmatpush1.xpose.msra.mxu0 0.0
    %2524 = vmatprep.subr.mxu0 0.0
    %2525 = vmatpush1.xpose.msra.mxu0 0.0
    %2526 = vmatprep.subr.mxu0 0.0
    %2527 = vmatpush1.xpose.msra.mxu0 0.0
    %2528 = vmatprep.subr.mxu0 0.0
    %2529 = vmatpush1.xpose.msra.mxu0 0.0
    %2530 = vmatprep.subr.mxu0 0.0
    %2531 = vmatpush1.xpose.msra.mxu0 %v2498
    %2532 = vmatprep.subr.mxu0 0.0
    %2533 = vmatpush2.xpose.msra.mxu0 0.0
    %2534 = vmatprep.subr.mxu0 0.0
    %2535 = vmatpush2.xpose.msra.mxu0 0.0
    %2536 = vmatprep.subr.mxu0 0.0
    %2537 = vmatpush2.xpose.msra.mxu0 0.0
    %2538 = vmatprep.subr.mxu0 0.0
    %2539 = vmatpush2.xpose.msra.mxu0 0.0
    %2540 = vmatprep.subr.mxu0 0.0
    %2541 = vmatpush2.xpose.msra.mxu0 0.0
    %2542 = vmatprep.subr.mxu0 0.0
    %2543 = vmatpush2.xpose.msra.mxu0 0.0
    %2544 = vmatprep.subr.mxu0 0.0
    %2545 = vmatpush2.xpose.msra.mxu0 0.0
    %2546 = vmatprep.subr.mxu0 0.0
    %2547 = vmatpush2.xpose.msra.mxu0 0.0
    %2548 = vmatprep.subr.mxu0 0.0
    %2549 = vmatpush2.xpose.msra.mxu0 0.0
    %2550 = vmatprep.subr.mxu0 0.0
    %2551 = vmatpush2.xpose.msra.mxu0 0.0
    %2552 = vmatprep.subr.mxu0 0.0
    %2553 = vmatpush2.xpose.msra.mxu0 0.0
    %2554 = vmatprep.subr.mxu0 0.0
    %2555 = vmatpush2.xpose.msra.mxu0 0.0
    %2556 = vmatprep.subr.mxu0 0.0
    %2557 = vmatpush2.xpose.msra.mxu0 0.0
    %2558 = vmatprep.subr.mxu0 0.0
    %2559 = vmatpush2.xpose.msra.mxu0 0.0
    %2560 = vmatprep.subr.mxu0 0.0
    %2561 = vmatpush2.xpose.msra.mxu0 0.0
    %2562 = vmatprep.subr.mxu0 0.0
    %2563 = vmatpush2.xpose.msra.mxu0 0.0
    %2564 = vmatprep.mubr.f32.mxu0 0.0
    %2565 = vmatmul.mubr.f32.gmra.mxu0 %v2496
    %v2566 = vpop.f32.mrf.mxu0
    %v2567 = vadd.f32 0.0, %v2566
    %v2568 = vpop.f32.mrf.mxu0
    %2569 = vdwg.mxu0
    %v2570 = vsel %vm691, %v2474, 0
    %v2572 = vsel %vm691, %v2481, 0
    %2574 = vmatprep.subr.mxu0 0.0
    %2575 = vmatpush1.xpose.msra.mxu0 0.0
    %2576 = vmatprep.subr.mxu0 0.0
    %2577 = vmatpush1.xpose.msra.mxu0 0.0
    %2578 = vmatprep.subr.mxu0 0.0
    %2579 = vmatpush1.xpose.msra.mxu0 0.0
    %2580 = vmatprep.subr.mxu0 0.0
    %2581 = vmatpush1.xpose.msra.mxu0 0.0
    %2582 = vmatprep.subr.mxu0 0.0
    %2583 = vmatpush1.xpose.msra.mxu0 0.0
    %2584 = vmatprep.subr.mxu0 0.0
    %2585 = vmatpush1.xpose.msra.mxu0 0.0
    %2586 = vmatprep.subr.mxu0 0.0
    %2587 = vmatpush1.xpose.msra.mxu0 0.0
    %2588 = vmatprep.subr.mxu0 0.0
    %2589 = vmatpush1.xpose.msra.mxu0 0.0
    %2590 = vmatprep.subr.mxu0 0.0
    %2591 = vmatpush1.xpose.msra.mxu0 0.0
    %2592 = vmatprep.subr.mxu0 0.0
    %2593 = vmatpush1.xpose.msra.mxu0 0.0
    %2594 = vmatprep.subr.mxu0 0.0
    %2595 = vmatpush1.xpose.msra.mxu0 0.0
    %2596 = vmatprep.subr.mxu0 0.0
    %2597 = vmatpush1.xpose.msra.mxu0 0.0
    %2598 = vmatprep.subr.mxu0 0.0
    %2599 = vmatpush1.xpose.msra.mxu0 0.0
    %2600 = vmatprep.subr.mxu0 0.0
    %2601 = vmatpush1.xpose.msra.mxu0 0.0
    %2602 = vmatprep.subr.mxu0 0.0
    %2603 = vmatpush1.xpose.msra.mxu0 0.0
    %2604 = vmatprep.subr.mxu0 0.0
    %2605 = vmatpush1.xpose.msra.mxu0 %v2572
    %2606 = vmatprep.subr.mxu0 0.0
    %2607 = vmatpush2.xpose.msra.mxu0 0.0
    %2608 = vmatprep.subr.mxu0 0.0
    %2609 = vmatpush2.xpose.msra.mxu0 0.0
    %2610 = vmatprep.subr.mxu0 0.0
    %2611 = vmatpush2.xpose.msra.mxu0 0.0
    %2612 = vmatprep.subr.mxu0 0.0
    %2613 = vmatpush2.xpose.msra.mxu0 0.0
    %2614 = vmatprep.subr.mxu0 0.0
    %2615 = vmatpush2.xpose.msra.mxu0 0.0
    %2616 = vmatprep.subr.mxu0 0.0
    %2617 = vmatpush2.xpose.msra.mxu0 0.0
    %2618 = vmatprep.subr.mxu0 0.0
    %2619 = vmatpush2.xpose.msra.mxu0 0.0
    %2620 = vmatprep.subr.mxu0 0.0
    %2621 = vmatpush2.xpose.msra.mxu0 0.0
    %2622 = vmatprep.subr.mxu0 0.0
    %2623 = vmatpush2.xpose.msra.mxu0 0.0
    %2624 = vmatprep.subr.mxu0 0.0
    %2625 = vmatpush2.xpose.msra.mxu0 0.0
    %2626 = vmatprep.subr.mxu0 0.0
    %2627 = vmatpush2.xpose.msra.mxu0 0.0
    %2628 = vmatprep.subr.mxu0 0.0
    %2629 = vmatpush2.xpose.msra.mxu0 0.0
    %2630 = vmatprep.subr.mxu0 0.0
    %2631 = vmatpush2.xpose.msra.mxu0 0.0
    %2632 = vmatprep.subr.mxu0 0.0
    %2633 = vmatpush2.xpose.msra.mxu0 0.0
    %2634 = vmatprep.subr.mxu0 0.0
    %2635 = vmatpush2.xpose.msra.mxu0 0.0
    %2636 = vmatprep.subr.mxu0 0.0
    %2637 = vmatpush2.xpose.msra.mxu0 0.0
    %2638 = vmatprep.mubr.f32.mxu0 0.0
    %2639 = vmatmul.mubr.f32.gmra.mxu0 %v2570
    %v2640 = vpop.f32.mrf.mxu0
    %v2641 = vadd.f32 0.0, %v2640
    %v2642 = vpop.f32.mrf.mxu0
    %2643 = vdwg.mxu0
    %v2644 = vsel %vm691, %v2476, 0
    %v2646 = vsel %vm691, %v2483, 0
    %2648 = vmatprep.subr.mxu0 0.0
    %2649 = vmatpush1.xpose.msra.mxu0 0.0
    %2650 = vmatprep.subr.mxu0 0.0
    %2651 = vmatpush1.xpose.msra.mxu0 0.0
    %2652 = vmatprep.subr.mxu0 0.0
    %2653 = vmatpush1.xpose.msra.mxu0 0.0
    %2654 = vmatprep.subr.mxu0 0.0
    %2655 = vmatpush1.xpose.msra.mxu0 0.0
    %2656 = vmatprep.subr.mxu0 0.0
    %2657 = vmatpush1.xpose.msra.mxu0 0.0
    %2658 = vmatprep.subr.mxu0 0.0
    %2659 = vmatpush1.xpose.msra.mxu0 0.0
    %2660 = vmatprep.subr.mxu0 0.0
    %2661 = vmatpush1.xpose.msra.mxu0 0.0
    %2662 = vmatprep.subr.mxu0 0.0
    %2663 = vmatpush1.xpose.msra.mxu0 0.0
    %2664 = vmatprep.subr.mxu0 0.0
    %2665 = vmatpush1.xpose.msra.mxu0 0.0
    %2666 = vmatprep.subr.mxu0 0.0
    %2667 = vmatpush1.xpose.msra.mxu0 0.0
    %2668 = vmatprep.subr.mxu0 0.0
    %2669 = vmatpush1.xpose.msra.mxu0 0.0
    %2670 = vmatprep.subr.mxu0 0.0
    %2671 = vmatpush1.xpose.msra.mxu0 0.0
    %2672 = vmatprep.subr.mxu0 0.0
    %2673 = vmatpush1.xpose.msra.mxu0 0.0
    %2674 = vmatprep.subr.mxu0 0.0
    %2675 = vmatpush1.xpose.msra.mxu0 0.0
    %2676 = vmatprep.subr.mxu0 0.0
    %2677 = vmatpush1.xpose.msra.mxu0 0.0
    %2678 = vmatprep.subr.mxu0 0.0
    %2679 = vmatpush1.xpose.msra.mxu0 %v2646
    %2680 = vmatprep.subr.mxu0 0.0
    %2681 = vmatpush2.xpose.msra.mxu0 0.0
    %2682 = vmatprep.subr.mxu0 0.0
    %2683 = vmatpush2.xpose.msra.mxu0 0.0
    %2684 = vmatprep.subr.mxu0 0.0
    %2685 = vmatpush2.xpose.msra.mxu0 0.0
    %2686 = vmatprep.subr.mxu0 0.0
    %2687 = vmatpush2.xpose.msra.mxu0 0.0
    %2688 = vmatprep.subr.mxu0 0.0
    %2689 = vmatpush2.xpose.msra.mxu0 0.0
    %2690 = vmatprep.subr.mxu0 0.0
    %2691 = vmatpush2.xpose.msra.mxu0 0.0
    %2692 = vmatprep.subr.mxu0 0.0
    %2693 = vmatpush2.xpose.msra.mxu0 0.0
    %2694 = vmatprep.subr.mxu0 0.0
    %2695 = vmatpush2.xpose.msra.mxu0 0.0
    %2696 = vmatprep.subr.mxu0 0.0
    %2697 = vmatpush2.xpose.msra.mxu0 0.0
    %2698 = vmatprep.subr.mxu0 0.0
    %2699 = vmatpush2.xpose.msra.mxu0 0.0
    %2700 = vmatprep.subr.mxu0 0.0
    %2701 = vmatpush2.xpose.msra.mxu0 0.0
    %2702 = vmatprep.subr.mxu0 0.0
    %2703 = vmatpush2.xpose.msra.mxu0 0.0
    %2704 = vmatprep.subr.mxu0 0.0
    %2705 = vmatpush2.xpose.msra.mxu0 0.0
    %2706 = vmatprep.subr.mxu0 0.0
    %2707 = vmatpush2.xpose.msra.mxu0 0.0
    %2708 = vmatprep.subr.mxu0 0.0
    %2709 = vmatpush2.xpose.msra.mxu0 0.0
    %2710 = vmatprep.subr.mxu0 0.0
    %2711 = vmatpush2.xpose.msra.mxu0 0.0
    %2712 = vmatprep.mubr.f32.mxu0 0.0
    %2713 = vmatmul.mubr.f32.gmra.mxu0 %v2644
    %v2714 = vpop.f32.mrf.mxu0
    %v2715 = vadd.f32 0.0, %v2714
    %v2716 = vpop.f32.mrf.mxu0
    %2717 = vdwg.mxu0
    %v2718 = vsel %vm691, %v2478, 0
    %v2720 = vsel %vm691, %v2485, 0
    %2722 = vmatprep.subr.mxu0 0.0
    %2723 = vmatpush1.xpose.msra.mxu0 0.0
    %2724 = vmatprep.subr.mxu0 0.0
    %2725 = vmatpush1.xpose.msra.mxu0 0.0
    %2726 = vmatprep.subr.mxu0 0.0
    %2727 = vmatpush1.xpose.msra.mxu0 0.0
    %2728 = vmatprep.subr.mxu0 0.0
    %2729 = vmatpush1.xpose.msra.mxu0 0.0
    %2730 = vmatprep.subr.mxu0 0.0
    %2731 = vmatpush1.xpose.msra.mxu0 0.0
    %2732 = vmatprep.subr.mxu0 0.0
    %2733 = vmatpush1.xpose.msra.mxu0 0.0
    %2734 = vmatprep.subr.mxu0 0.0
    %2735 = vmatpush1.xpose.msra.mxu0 0.0
    %2736 = vmatprep.subr.mxu0 0.0
    %2737 = vmatpush1.xpose.msra.mxu0 0.0
    %2738 = vmatprep.subr.mxu0 0.0
    %2739 = vmatpush1.xpose.msra.mxu0 0.0
    %2740 = vmatprep.subr.mxu0 0.0
    %2741 = vmatpush1.xpose.msra.mxu0 0.0
    %2742 = vmatprep.subr.mxu0 0.0
    %2743 = vmatpush1.xpose.msra.mxu0 0.0
    %2744 = vmatprep.subr.mxu0 0.0
    %2745 = vmatpush1.xpose.msra.mxu0 0.0
    %2746 = vmatprep.subr.mxu0 0.0
    %2747 = vmatpush1.xpose.msra.mxu0 0.0
    %2748 = vmatprep.subr.mxu0 0.0
    %2749 = vmatpush1.xpose.msra.mxu0 0.0
    %2750 = vmatprep.subr.mxu0 0.0
    %2751 = vmatpush1.xpose.msra.mxu0 0.0
    %2752 = vmatprep.subr.mxu0 0.0
    %2753 = vmatpush1.xpose.msra.mxu0 %v2720
    %2754 = vmatprep.subr.mxu0 0.0
    %2755 = vmatpush2.xpose.msra.mxu0 0.0
    %2756 = vmatprep.subr.mxu0 0.0
    %2757 = vmatpush2.xpose.msra.mxu0 0.0
    %2758 = vmatprep.subr.mxu0 0.0
    %2759 = vmatpush2.xpose.msra.mxu0 0.0
    %2760 = vmatprep.subr.mxu0 0.0
    %2761 = vmatpush2.xpose.msra.mxu0 0.0
    %2762 = vmatprep.subr.mxu0 0.0
    %2763 = vmatpush2.xpose.msra.mxu0 0.0
    %2764 = vmatprep.subr.mxu0 0.0
    %2765 = vmatpush2.xpose.msra.mxu0 0.0
    %2766 = vmatprep.subr.mxu0 0.0
    %2767 = vmatpush2.xpose.msra.mxu0 0.0
    %2768 = vmatprep.subr.mxu0 0.0
    %2769 = vmatpush2.xpose.msra.mxu0 0.0
    %2770 = vmatprep.subr.mxu0 0.0
    %2771 = vmatpush2.xpose.msra.mxu0 0.0
    %2772 = vmatprep.subr.mxu0 0.0
    %2773 = vmatpush2.xpose.msra.mxu0 0.0
    %2774 = vmatprep.subr.mxu0 0.0
    %2775 = vmatpush2.xpose.msra.mxu0 0.0
    %2776 = vmatprep.subr.mxu0 0.0
    %2777 = vmatpush2.xpose.msra.mxu0 0.0
    %2778 = vmatprep.subr.mxu0 0.0
    %2779 = vmatpush2.xpose.msra.mxu0 0.0
    %2780 = vmatprep.subr.mxu0 0.0
    %2781 = vmatpush2.xpose.msra.mxu0 0.0
    %2782 = vmatprep.subr.mxu0 0.0
    %2783 = vmatpush2.xpose.msra.mxu0 0.0
    %2784 = vmatprep.subr.mxu0 0.0
    %2785 = vmatpush2.xpose.msra.mxu0 0.0
    %2786 = vmatprep.mubr.f32.mxu0 0.0
    %2787 = vmatmul.mubr.f32.gmra.mxu0 %v2718
    %v2788 = vpop.f32.mrf.mxu0
    %v2789 = vadd.f32 0.0, %v2788
    %v2790 = vpop.f32.mrf.mxu0
    %2791 = vdwg.mxu0
    %v2792 = vmul.f32 %v2567, 0.17677669
    %v2793 = vmul.f32 %v2641, 0.17677669
    %v2794 = vmul.f32 %v2715, 0.17677669
    %v2795 = vmul.f32 %v2789, 0.17677669
    %v2796 = vadd.f32 %v2792, %v262
    %v2797 = vadd.f32 %v2793, %v262
    %v2798 = vadd.f32 %v2794, %v262
    %v2799 = vadd.f32 %v2795, %v262
    %v2800 = vsel %vm996, %v2796, -inf
    %2801 = vmax.xlane.f32.xlu0 %v2800
    %v2802 = vpop.xlane.xlu0 %2801
    %v2803 = vsel %vm996, %v2797, -inf
    %2804 = vmax.xlane.f32.xlu0 %v2803
    %v2805 = vpop.xlane.xlu0 %2804
    %v2806 = vsel %vm996, %v2798, -inf
    %2807 = vmax.xlane.f32.xlu0 %v2806
    %v2808 = vpop.xlane.xlu0 %2807
    %v2809 = vsel %vm996, %v2799, -inf
    %2810 = vmax.xlane.f32.xlu0 %v2809
    %v2811 = vpop.xlane.xlu0 %2810
    %v2812 = vsub.f32 %v2796, %v2802
    %v2813 = vsub.f32 %v2797, %v2805
    %v2814 = vsub.f32 %v2798, %v2808
    %v2815 = vsub.f32 %v2799, %v2811
    %v2816 = vmul.f32 %v2812, 1.442695
    %v2817 = vpow.pop %v2816
    %v2818 = vmul.f32 %v2813, 1.442695
    %v2819 = vpow.pop %v2818
    %v2820 = vmul.f32 %v2814, 1.442695
    %v2821 = vpow.pop %v2820
    %v2822 = vmul.f32 %v2815, 1.442695
    %v2823 = vpow.pop %v2822
    %v2824 = vsel %vm996, %v2817, 0.0
    %2825 = vadd.xlane.f32.xlu0 %v2824
    %v2826 = vpop.xlane.xlu0 %2825
    %v2827 = vsel %vm996, %v2819, 0.0
    %2828 = vadd.xlane.f32.xlu0 %v2827
    %v2829 = vpop.xlane.xlu0 %2828
    %v2830 = vsel %vm996, %v2821, 0.0
    %2831 = vadd.xlane.f32.xlu0 %v2830
    %v2832 = vpop.xlane.xlu0 %2831
    %v2833 = vsel %vm996, %v2823, 0.0
    %2834 = vadd.xlane.f32.xlu0 %v2833
    %v2835 = vpop.xlane.xlu0 %2834
    %v2836 = vrcp.pop %v2826
    %v2837 = vrcp.pop %v2829
    %v2838 = vrcp.pop %v2832
    %v2839 = vrcp.pop %v2835
    %v2840 = vmul.f32 %v2817, %v2836
    %v2841 = vmul.f32 %v2819, %v2837
    %v2842 = vmul.f32 %v2821, %v2838
    %v2843 = vmul.f32 %v2823, %v2839
    %v2845 = vsel %vm996, %v2840, 0
    %2847 = vmatprep.subr.mxu0 0.0
    %2848 = vmatpush1.msra.mxu0 0.0
    %2849 = vmatprep.subr.mxu0 0.0
    %2850 = vmatpush1.msra.mxu0 0.0
    %2851 = vmatprep.subr.mxu0 0.0
    %2852 = vmatpush1.msra.mxu0 0.0
    %2853 = vmatprep.subr.mxu0 0.0
    %2854 = vmatpush1.msra.mxu0 0.0
    %2855 = vmatprep.subr.mxu0 0.0
    %2856 = vmatpush1.msra.mxu0 0.0
    %2857 = vmatprep.subr.mxu0 0.0
    %2858 = vmatpush1.msra.mxu0 0.0
    %2859 = vmatprep.subr.mxu0 0.0
    %2860 = vmatpush1.msra.mxu0 0.0
    %2861 = vmatprep.subr.mxu0 0.0
    %2862 = vmatpush1.msra.mxu0 0.0
    %2863 = vmatprep.subr.mxu0 0.0
    %2864 = vmatpush1.msra.mxu0 0.0
    %2865 = vmatprep.subr.mxu0 0.0
    %2866 = vmatpush1.msra.mxu0 0.0
    %2867 = vmatprep.subr.mxu0 0.0
    %2868 = vmatpush1.msra.mxu0 0.0
    %2869 = vmatprep.subr.mxu0 0.0
    %2870 = vmatpush1.msra.mxu0 0.0
    %2871 = vmatprep.subr.mxu0 0.0
    %2872 = vmatpush1.msra.mxu0 0.0
    %2873 = vmatprep.subr.mxu0 0.0
    %2874 = vmatpush1.msra.mxu0 0.0
    %2875 = vmatprep.subr.mxu0 0.0
    %2876 = vmatpush1.msra.mxu0 0.0
    %2877 = vmatprep.subr.mxu0 0.0
    %2878 = vmatpush1.msra.mxu0 %v2467
    %2879 = vmatprep.subr.mxu0 0.0
    %2880 = vmatpush2.msra.mxu0 0.0
    %2881 = vmatprep.subr.mxu0 0.0
    %2882 = vmatpush2.msra.mxu0 0.0
    %2883 = vmatprep.subr.mxu0 0.0
    %2884 = vmatpush2.msra.mxu0 0.0
    %2885 = vmatprep.subr.mxu0 0.0
    %2886 = vmatpush2.msra.mxu0 0.0
    %2887 = vmatprep.subr.mxu0 0.0
    %2888 = vmatpush2.msra.mxu0 0.0
    %2889 = vmatprep.subr.mxu0 0.0
    %2890 = vmatpush2.msra.mxu0 0.0
    %2891 = vmatprep.subr.mxu0 0.0
    %2892 = vmatpush2.msra.mxu0 0.0
    %2893 = vmatprep.subr.mxu0 0.0
    %2894 = vmatpush2.msra.mxu0 0.0
    %2895 = vmatprep.subr.mxu0 0.0
    %2896 = vmatpush2.msra.mxu0 0.0
    %2897 = vmatprep.subr.mxu0 0.0
    %2898 = vmatpush2.msra.mxu0 0.0
    %2899 = vmatprep.subr.mxu0 0.0
    %2900 = vmatpush2.msra.mxu0 0.0
    %2901 = vmatprep.subr.mxu0 0.0
    %2902 = vmatpush2.msra.mxu0 0.0
    %2903 = vmatprep.subr.mxu0 0.0
    %2904 = vmatpush2.msra.mxu0 0.0
    %2905 = vmatprep.subr.mxu0 0.0
    %2906 = vmatpush2.msra.mxu0 0.0
    %2907 = vmatprep.subr.mxu0 0.0
    %2908 = vmatpush2.msra.mxu0 0.0
    %2909 = vmatprep.subr.mxu0 0.0
    %2910 = vmatpush2.msra.mxu0 0.0
    %2911 = vmatprep.mubr.f32.mxu0 0.0
    %2912 = vmatmul.mubr.f32.gmra.mxu0 %v2845
    %v2913 = vpop.f32.mrf.mxu0
    %v2914 = vadd.f32 0.0, %v2913
    %v2915 = vpop.f32.mrf.mxu0
    %2916 = vdwg.mxu0
    %v2918 = vsel %vm996, %v2841, 0
    %2920 = vmatprep.subr.mxu0 0.0
    %2921 = vmatpush1.msra.mxu0 0.0
    %2922 = vmatprep.subr.mxu0 0.0
    %2923 = vmatpush1.msra.mxu0 0.0
    %2924 = vmatprep.subr.mxu0 0.0
    %2925 = vmatpush1.msra.mxu0 0.0
    %2926 = vmatprep.subr.mxu0 0.0
    %2927 = vmatpush1.msra.mxu0 0.0
    %2928 = vmatprep.subr.mxu0 0.0
    %2929 = vmatpush1.msra.mxu0 0.0
    %2930 = vmatprep.subr.mxu0 0.0
    %2931 = vmatpush1.msra.mxu0 0.0
    %2932 = vmatprep.subr.mxu0 0.0
    %2933 = vmatpush1.msra.mxu0 0.0
    %2934 = vmatprep.subr.mxu0 0.0
    %2935 = vmatpush1.msra.mxu0 0.0
    %2936 = vmatprep.subr.mxu0 0.0
    %2937 = vmatpush1.msra.mxu0 0.0
    %2938 = vmatprep.subr.mxu0 0.0
    %2939 = vmatpush1.msra.mxu0 0.0
    %2940 = vmatprep.subr.mxu0 0.0
    %2941 = vmatpush1.msra.mxu0 0.0
    %2942 = vmatprep.subr.mxu0 0.0
    %2943 = vmatpush1.msra.mxu0 0.0
    %2944 = vmatprep.subr.mxu0 0.0
    %2945 = vmatpush1.msra.mxu0 0.0
    %2946 = vmatprep.subr.mxu0 0.0
    %2947 = vmatpush1.msra.mxu0 0.0
    %2948 = vmatprep.subr.mxu0 0.0
    %2949 = vmatpush1.msra.mxu0 0.0
    %2950 = vmatprep.subr.mxu0 0.0
    %2951 = vmatpush1.msra.mxu0 %v2488
    %2952 = vmatprep.subr.mxu0 0.0
    %2953 = vmatpush2.msra.mxu0 0.0
    %2954 = vmatprep.subr.mxu0 0.0
    %2955 = vmatpush2.msra.mxu0 0.0
    %2956 = vmatprep.subr.mxu0 0.0
    %2957 = vmatpush2.msra.mxu0 0.0
    %2958 = vmatprep.subr.mxu0 0.0
    %2959 = vmatpush2.msra.mxu0 0.0
    %2960 = vmatprep.subr.mxu0 0.0
    %2961 = vmatpush2.msra.mxu0 0.0
    %2962 = vmatprep.subr.mxu0 0.0
    %2963 = vmatpush2.msra.mxu0 0.0
    %2964 = vmatprep.subr.mxu0 0.0
    %2965 = vmatpush2.msra.mxu0 0.0
    %2966 = vmatprep.subr.mxu0 0.0
    %2967 = vmatpush2.msra.mxu0 0.0
    %2968 = vmatprep.subr.mxu0 0.0
    %2969 = vmatpush2.msra.mxu0 0.0
    %2970 = vmatprep.subr.mxu0 0.0
    %2971 = vmatpush2.msra.mxu0 0.0
    %2972 = vmatprep.subr.mxu0 0.0
    %2973 = vmatpush2.msra.mxu0 0.0
    %2974 = vmatprep.subr.mxu0 0.0
    %2975 = vmatpush2.msra.mxu0 0.0
    %2976 = vmatprep.subr.mxu0 0.0
    %2977 = vmatpush2.msra.mxu0 0.0
    %2978 = vmatprep.subr.mxu0 0.0
    %2979 = vmatpush2.msra.mxu0 0.0
    %2980 = vmatprep.subr.mxu0 0.0
    %2981 = vmatpush2.msra.mxu0 0.0
    %2982 = vmatprep.subr.mxu0 0.0
    %2983 = vmatpush2.msra.mxu0 0.0
    %2984 = vmatprep.mubr.f32.mxu0 0.0
    %2985 = vmatmul.mubr.f32.gmra.mxu0 %v2918
    %v2986 = vpop.f32.mrf.mxu0
    %v2987 = vadd.f32 0.0, %v2986
    %v2988 = vpop.f32.mrf.mxu0
    %2989 = vdwg.mxu0
    %v2991 = vsel %vm996, %v2842, 0
    %2993 = vmatprep.subr.mxu0 0.0
    %2994 = vmatpush1.msra.mxu0 0.0
    %2995 = vmatprep.subr.mxu0 0.0
    %2996 = vmatpush1.msra.mxu0 0.0
    %2997 = vmatprep.subr.mxu0 0.0
    %2998 = vmatpush1.msra.mxu0 0.0
    %2999 = vmatprep.subr.mxu0 0.0
    %3000 = vmatpush1.msra.mxu0 0.0
    %3001 = vmatprep.subr.mxu0 0.0
    %3002 = vmatpush1.msra.mxu0 0.0
    %3003 = vmatprep.subr.mxu0 0.0
    %3004 = vmatpush1.msra.mxu0 0.0
    %3005 = vmatprep.subr.mxu0 0.0
    %3006 = vmatpush1.msra.mxu0 0.0
    %3007 = vmatprep.subr.mxu0 0.0
    %3008 = vmatpush1.msra.mxu0 0.0
    %3009 = vmatprep.subr.mxu0 0.0
    %3010 = vmatpush1.msra.mxu0 0.0
    %3011 = vmatprep.subr.mxu0 0.0
    %3012 = vmatpush1.msra.mxu0 0.0
    %3013 = vmatprep.subr.mxu0 0.0
    %3014 = vmatpush1.msra.mxu0 0.0
    %3015 = vmatprep.subr.mxu0 0.0
    %3016 = vmatpush1.msra.mxu0 0.0
    %3017 = vmatprep.subr.mxu0 0.0
    %3018 = vmatpush1.msra.mxu0 0.0
    %3019 = vmatprep.subr.mxu0 0.0
    %3020 = vmatpush1.msra.mxu0 0.0
    %3021 = vmatprep.subr.mxu0 0.0
    %3022 = vmatpush1.msra.mxu0 0.0
    %3023 = vmatprep.subr.mxu0 0.0
    %3024 = vmatpush1.msra.mxu0 %v2491
    %3025 = vmatprep.subr.mxu0 0.0
    %3026 = vmatpush2.msra.mxu0 0.0
    %3027 = vmatprep.subr.mxu0 0.0
    %3028 = vmatpush2.msra.mxu0 0.0
    %3029 = vmatprep.subr.mxu0 0.0
    %3030 = vmatpush2.msra.mxu0 0.0
    %3031 = vmatprep.subr.mxu0 0.0
    %3032 = vmatpush2.msra.mxu0 0.0
    %3033 = vmatprep.subr.mxu0 0.0
    %3034 = vmatpush2.msra.mxu0 0.0
    %3035 = vmatprep.subr.mxu0 0.0
    %3036 = vmatpush2.msra.mxu0 0.0
    %3037 = vmatprep.subr.mxu0 0.0
    %3038 = vmatpush2.msra.mxu0 0.0
    %3039 = vmatprep.subr.mxu0 0.0
    %3040 = vmatpush2.msra.mxu0 0.0
    %3041 = vmatprep.subr.mxu0 0.0
    %3042 = vmatpush2.msra.mxu0 0.0
    %3043 = vmatprep.subr.mxu0 0.0
    %3044 = vmatpush2.msra.mxu0 0.0
    %3045 = vmatprep.subr.mxu0 0.0
    %3046 = vmatpush2.msra.mxu0 0.0
    %3047 = vmatprep.subr.mxu0 0.0
    %3048 = vmatpush2.msra.mxu0 0.0
    %3049 = vmatprep.subr.mxu0 0.0
    %3050 = vmatpush2.msra.mxu0 0.0
    %3051 = vmatprep.subr.mxu0 0.0
    %3052 = vmatpush2.msra.mxu0 0.0
    %3053 = vmatprep.subr.mxu0 0.0
    %3054 = vmatpush2.msra.mxu0 0.0
    %3055 = vmatprep.subr.mxu0 0.0
    %3056 = vmatpush2.msra.mxu0 0.0
    %3057 = vmatprep.mubr.f32.mxu0 0.0
    %3058 = vmatmul.mubr.f32.gmra.mxu0 %v2991
    %v3059 = vpop.f32.mrf.mxu0
    %v3060 = vadd.f32 0.0, %v3059
    %v3061 = vpop.f32.mrf.mxu0
    %3062 = vdwg.mxu0
    %v3064 = vsel %vm996, %v2843, 0
    %3066 = vmatprep.subr.mxu0 0.0
    %3067 = vmatpush1.msra.mxu0 0.0
    %3068 = vmatprep.subr.mxu0 0.0
    %3069 = vmatpush1.msra.mxu0 0.0
    %3070 = vmatprep.subr.mxu0 0.0
    %3071 = vmatpush1.msra.mxu0 0.0
    %3072 = vmatprep.subr.mxu0 0.0
    %3073 = vmatpush1.msra.mxu0 0.0
    %3074 = vmatprep.subr.mxu0 0.0
    %3075 = vmatpush1.msra.mxu0 0.0
    %3076 = vmatprep.subr.mxu0 0.0
    %3077 = vmatpush1.msra.mxu0 0.0
    %3078 = vmatprep.subr.mxu0 0.0
    %3079 = vmatpush1.msra.mxu0 0.0
    %3080 = vmatprep.subr.mxu0 0.0
    %3081 = vmatpush1.msra.mxu0 0.0
    %3082 = vmatprep.subr.mxu0 0.0
    %3083 = vmatpush1.msra.mxu0 0.0
    %3084 = vmatprep.subr.mxu0 0.0
    %3085 = vmatpush1.msra.mxu0 0.0
    %3086 = vmatprep.subr.mxu0 0.0
    %3087 = vmatpush1.msra.mxu0 0.0
    %3088 = vmatprep.subr.mxu0 0.0
    %3089 = vmatpush1.msra.mxu0 0.0
    %3090 = vmatprep.subr.mxu0 0.0
    %3091 = vmatpush1.msra.mxu0 0.0
    %3092 = vmatprep.subr.mxu0 0.0
    %3093 = vmatpush1.msra.mxu0 0.0
    %3094 = vmatprep.subr.mxu0 0.0
    %3095 = vmatpush1.msra.mxu0 0.0
    %3096 = vmatprep.subr.mxu0 0.0
    %3097 = vmatpush1.msra.mxu0 %v2494
    %3098 = vmatprep.subr.mxu0 0.0
    %3099 = vmatpush2.msra.mxu0 0.0
    %3100 = vmatprep.subr.mxu0 0.0
    %3101 = vmatpush2.msra.mxu0 0.0
    %3102 = vmatprep.subr.mxu0 0.0
    %3103 = vmatpush2.msra.mxu0 0.0
    %3104 = vmatprep.subr.mxu0 0.0
    %3105 = vmatpush2.msra.mxu0 0.0
    %3106 = vmatprep.subr.mxu0 0.0
    %3107 = vmatpush2.msra.mxu0 0.0
    %3108 = vmatprep.subr.mxu0 0.0
    %3109 = vmatpush2.msra.mxu0 0.0
    %3110 = vmatprep.subr.mxu0 0.0
    %3111 = vmatpush2.msra.mxu0 0.0
    %3112 = vmatprep.subr.mxu0 0.0
    %3113 = vmatpush2.msra.mxu0 0.0
    %3114 = vmatprep.subr.mxu0 0.0
    %3115 = vmatpush2.msra.mxu0 0.0
    %3116 = vmatprep.subr.mxu0 0.0
    %3117 = vmatpush2.msra.mxu0 0.0
    %3118 = vmatprep.subr.mxu0 0.0
    %3119 = vmatpush2.msra.mxu0 0.0
    %3120 = vmatprep.subr.mxu0 0.0
    %3121 = vmatpush2.msra.mxu0 0.0
    %3122 = vmatprep.subr.mxu0 0.0
    %3123 = vmatpush2.msra.mxu0 0.0
    %3124 = vmatprep.subr.mxu0 0.0
    %3125 = vmatpush2.msra.mxu0 0.0
    %3126 = vmatprep.subr.mxu0 0.0
    %3127 = vmatpush2.msra.mxu0 0.0
    %3128 = vmatprep.subr.mxu0 0.0
    %3129 = vmatpush2.msra.mxu0 0.0
    %3130 = vmatprep.mubr.f32.mxu0 0.0
    %3131 = vmatmul.mubr.f32.gmra.mxu0 %v3064
    %v3132 = vpop.f32.mrf.mxu0
    %v3133 = vadd.f32 0.0, %v3132
    %v3134 = vpop.f32.mrf.mxu0
    %3135 = vdwg.mxu0
    %3136 = vst.msk [vmem:[#allocation2] sm:$0xff] %vm691, %v2914
    %3138 = vrot.lane.b32.xlu0 %v2987, 32
    %v3139 = vpop.permute.xlu0 %3138
    %3141 = vst.msk [vmem:[#allocation2] sm:$0xff] %vm1338, %v3139
    %3143 = vrot.lane.b32.xlu0 %v3060, 64
    %v3144 = vpop.permute.xlu0 %3143
    %3146 = vst.msk [vmem:[#allocation2] sm:$0xff] %vm1344, %v3144
    %3148 = vrot.lane.b32.xlu0 %v3133, 96
    %v3149 = vpop.permute.xlu0 %3148
    %3151 = vst.msk [vmem:[#allocation2] sm:$0xff] %vm1350, %v3149
    %v3152 = vld [vmem:[#allocation2] sm:$0xff]
    %v3153 = vpack.c.bf16 %v3152, %v3152
    %v3155 = vlaneseq
    %v3156 = vshrl.u32 %v3155, 7
    %v3157 = vsub.s32 0, %v3156
    %v3158 = vrot.slane %v2114, %v3157
    %v3176 = vunpack.c.l.b16 %v2097
    %v3177 = vunpack.c.l.b16 %v2098
    %v3178 = vunpack.c.l.b16 %v2099
    %v3179 = vunpack.c.l.b16 %v2100
    %v3180 = vunpack.c.l.b16 %v2101
    %v3181 = vunpack.c.l.b16 %v2102
    %v3182 = vunpack.c.l.b16 %v2103
    %v3183 = vunpack.c.l.b16 %v2104
    %v3184 = vunpack.c.l.b16 %v2105
    %v3185 = vunpack.c.l.b16 %v2106
    %v3186 = vunpack.c.l.b16 %v2107
    %v3187 = vunpack.c.l.b16 %v2108
    %v3188 = vunpack.c.l.b16 %v2109
    %v3189 = vunpack.c.l.b16 %v2110
    %v3190 = vunpack.c.l.b16 %v2111
    %v3191 = vunpack.c.l.b16 %v2112
    %v3192 = vpack.c.b16 %v3177, %v3176
    %v3193 = vpack.c.b16 %v3179, %v3178
    %v3194 = vpack.c.b16 %v3181, %v3180
    %v3195 = vpack.c.b16 %v3183, %v3182
    %v3196 = vpack.c.b16 %v3185, %v3184
    %v3197 = vpack.c.b16 %v3187, %v3186
    %v3198 = vpack.c.b16 %v3189, %v3188
    %v3199 = vpack.c.b16 %v3191, %v3190
    %3208 = vmatprep.subr.bf16.mxu0 0
    %3209 = vmatpush1.bf16.msra.mxu0 %v3199
    %3210 = vmatprep.subr.bf16.mxu0 0
    %3211 = vmatpush1.bf16.msra.mxu0 %v3198
    %3212 = vmatprep.subr.bf16.mxu0 0
    %3213 = vmatpush1.bf16.msra.mxu0 %v3197
    %3214 = vmatprep.subr.bf16.mxu0 0
    %3215 = vmatpush1.bf16.msra.mxu0 %v3196
    %3216 = vmatprep.subr.bf16.mxu0 0
    %3217 = vmatpush1.bf16.msra.mxu0 %v3195
    %3218 = vmatprep.subr.bf16.mxu0 0
    %3219 = vmatpush1.bf16.msra.mxu0 %v3194
    %3220 = vmatprep.subr.bf16.mxu0 0
    %3221 = vmatpush1.bf16.msra.mxu0 %v3193
    %3222 = vmatprep.subr.bf16.mxu0 0
    %3223 = vmatpush1.bf16.msra.mxu0 %v3192
    %3224 = vmatprep.subr.bf16.mxu0 0
    %3225 = vmatpush2.bf16.msra.mxu0 0
    %3226 = vmatprep.subr.bf16.mxu0 0
    %3227 = vmatpush2.bf16.msra.mxu0 0
    %3228 = vmatprep.subr.bf16.mxu0 0
    %3229 = vmatpush2.bf16.msra.mxu0 0
    %3230 = vmatprep.subr.bf16.mxu0 0
    %3231 = vmatpush2.bf16.msra.mxu0 0
    %3232 = vmatprep.subr.bf16.mxu0 0
    %3233 = vmatpush2.bf16.msra.mxu0 0
    %3234 = vmatprep.subr.bf16.mxu0 0
    %3235 = vmatpush2.bf16.msra.mxu0 0
    %3236 = vmatprep.subr.bf16.mxu0 0
    %3237 = vmatpush2.bf16.msra.mxu0 0
    %3238 = vmatprep.subr.bf16.mxu0 0
    %3239 = vmatpush2.bf16.msra.mxu0 0
    %3240 = vmatprep.mubr.bf16.mxu0 0
    %3241 = vmatmul.mubr.bf16.gmra.mxu0 %v3153
    %v3242 = vpop.f32.mrf.mxu0
    %v3243 = vadd.f32 %v3158, %v3242
    %v3244 = vpop.f32.mrf.mxu0
    %v3245 = vpop.f32.mrf.mxu0
    %v3246 = vpop.f32.mrf.mxu0
    %3247 = vdwg.mxu0
    %v3248 = vadd.f32 %v2056, %v3243
    %3249 = vadd.xlane.f32.xlu0 %v3248
    %v3250 = vpop.xlane.xlu0 %3249
    %v3251 = vmul.f32 %v3250, %v417
    %v3252 = vsub.f32 %v3248, %v3251
    %v3253 = vmul.f32 %v3252, %v3252
    %3254 = vadd.xlane.f32.xlu0 %v3253
    %v3255 = vpop.xlane.xlu0 %3254
    %v3256 = vmul.f32 %v3255, %v417
    %v3257 = vadd.f32 %v3256, 1e-05
    %v3258 = vrsqrt.pop %v3257
    %v3259 = vmul.f32 %v3252, %v3258
    %v3261 = vlaneseq
    %v3262 = vshrl.u32 %v3261, 7
    %v3263 = vsub.s32 0, %v3262
    %v3264 = vrot.slane %v2116, %v3263
    %v3266 = vmul.f32 %v3259, %v3264
    %v3268 = vlaneseq
    %v3269 = vshrl.u32 %v3268, 7
    %v3270 = vsub.s32 0, %v3269
    %v3271 = vrot.slane %v2118, %v3270
    %v3273 = vadd.f32 %v3266, %v3271
    %v3274 = vpack.c.bf16 %v3273, %v3273
    %v3276 = vlaneseq
    %v3277 = vshrl.u32 %v3276, 7
    %v3278 = vsub.s32 0, %v3277
    %v3279 = vrot.slane %v2153, %v3278
    %v3280 = vlaneseq
    %v3281 = vshrl.u32 %v3280, 7
    %v3282 = vsub.s32 1, %v3281
    %v3283 = vrot.slane %v2153, %v3282
    %v3284 = vlaneseq
    %v3285 = vshrl.u32 %v3284, 7
    %v3286 = vsub.s32 2, %v3285
    %v3287 = vrot.slane %v2153, %v3286
    %v3288 = vlaneseq
    %v3289 = vshrl.u32 %v3288, 7
    %v3290 = vsub.s32 3, %v3289
    %v3291 = vrot.slane %v2153, %v3290
    %v3328 = vunpack.c.l.b16 %v2120
    %v3329 = vunpack.c.h.b16 %v2120
    %v3330 = vunpack.c.l.b16 %v2121
    %v3331 = vunpack.c.h.b16 %v2121
    %v3332 = vunpack.c.l.b16 %v2122
    %v3333 = vunpack.c.h.b16 %v2122
    %v3334 = vunpack.c.l.b16 %v2123
    %v3335 = vunpack.c.h.b16 %v2123
    %v3336 = vunpack.c.l.b16 %v2124
    %v3337 = vunpack.c.h.b16 %v2124
    %v3338 = vunpack.c.l.b16 %v2125
    %v3339 = vunpack.c.h.b16 %v2125
    %v3340 = vunpack.c.l.b16 %v2126
    %v3341 = vunpack.c.h.b16 %v2126
    %v3342 = vunpack.c.l.b16 %v2127
    %v3343 = vunpack.c.h.b16 %v2127
    %v3344 = vunpack.c.l.b16 %v2128
    %v3345 = vunpack.c.h.b16 %v2128
    %v3346 = vunpack.c.l.b16 %v2129
    %v3347 = vunpack.c.h.b16 %v2129
    %v3348 = vunpack.c.l.b16 %v2130
    %v3349 = vunpack.c.h.b16 %v2130
    %v3350 = vunpack.c.l.b16 %v2131
    %v3351 = vunpack.c.h.b16 %v2131
    %v3352 = vunpack.c.l.b16 %v2132
    %v3353 = vunpack.c.h.b16 %v2132
    %v3354 = vunpack.c.l.b16 %v2133
    %v3355 = vunpack.c.h.b16 %v2133
    %v3356 = vunpack.c.l.b16 %v2134
    %v3357 = vunpack.c.h.b16 %v2134
    %v3358 = vunpack.c.l.b16 %v2135
    %v3359 = vunpack.c.h.b16 %v2135
    %v3360 = vunpack.c.l.b16 %v2136
    %v3361 = vunpack.c.h.b16 %v2136
    %v3362 = vunpack.c.l.b16 %v2137
    %v3363 = vunpack.c.h.b16 %v2137
    %v3364 = vunpack.c.l.b16 %v2138
    %v3365 = vunpack.c.h.b16 %v2138
    %v3366 = vunpack.c.l.b16 %v2139
    %v3367 = vunpack.c.h.b16 %v2139
    %v3368 = vunpack.c.l.b16 %v2140
    %v3369 = vunpack.c.h.b16 %v2140
    %v3370 = vunpack.c.l.b16 %v2141
    %v3371 = vunpack.c.h.b16 %v2141
    %v3372 = vunpack.c.l.b16 %v2142
    %v3373 = vunpack.c.h.b16 %v2142
    %v3374 = vunpack.c.l.b16 %v2143
    %v3375 = vunpack.c.h.b16 %v2143
    %v3376 = vunpack.c.l.b16 %v2144
    %v3377 = vunpack.c.h.b16 %v2144
    %v3378 = vunpack.c.l.b16 %v2145
    %v3379 = vunpack.c.h.b16 %v2145
    %v3380 = vunpack.c.l.b16 %v2146
    %v3381 = vunpack.c.h.b16 %v2146
    %v3382 = vunpack.c.l.b16 %v2147
    %v3383 = vunpack.c.h.b16 %v2147
    %v3384 = vunpack.c.l.b16 %v2148
    %v3385 = vunpack.c.h.b16 %v2148
    %v3386 = vunpack.c.l.b16 %v2149
    %v3387 = vunpack.c.h.b16 %v2149
    %v3388 = vunpack.c.l.b16 %v2150
    %v3389 = vunpack.c.h.b16 %v2150
    %v3390 = vunpack.c.l.b16 %v2151
    %v3391 = vunpack.c.h.b16 %v2151
    %v3392 = vpack.c.b16 %v3332, %v3328
    %v3393 = vpack.c.b16 %v3333, %v3329
    %v3394 = vpack.c.b16 %v3334, %v3330
    %v3395 = vpack.c.b16 %v3335, %v3331
    %v3396 = vpack.c.b16 %v3340, %v3336
    %v3397 = vpack.c.b16 %v3341, %v3337
    %v3398 = vpack.c.b16 %v3342, %v3338
    %v3399 = vpack.c.b16 %v3343, %v3339
    %v3400 = vpack.c.b16 %v3348, %v3344
    %v3401 = vpack.c.b16 %v3349, %v3345
    %v3402 = vpack.c.b16 %v3350, %v3346
    %v3403 = vpack.c.b16 %v3351, %v3347
    %v3404 = vpack.c.b16 %v3356, %v3352
    %v3405 = vpack.c.b16 %v3357, %v3353
    %v3406 = vpack.c.b16 %v3358, %v3354
    %v3407 = vpack.c.b16 %v3359, %v3355
    %v3408 = vpack.c.b16 %v3364, %v3360
    %v3409 = vpack.c.b16 %v3365, %v3361
    %v3410 = vpack.c.b16 %v3366, %v3362
    %v3411 = vpack.c.b16 %v3367, %v3363
    %v3412 = vpack.c.b16 %v3372, %v3368
    %v3413 = vpack.c.b16 %v3373, %v3369
    %v3414 = vpack.c.b16 %v3374, %v3370
    %v3415 = vpack.c.b16 %v3375, %v3371
    %v3416 = vpack.c.b16 %v3380, %v3376
    %v3417 = vpack.c.b16 %v3381, %v3377
    %v3418 = vpack.c.b16 %v3382, %v3378
    %v3419 = vpack.c.b16 %v3383, %v3379
    %v3420 = vpack.c.b16 %v3388, %v3384
    %v3421 = vpack.c.b16 %v3389, %v3385
    %v3422 = vpack.c.b16 %v3390, %v3386
    %v3423 = vpack.c.b16 %v3391, %v3387
    %3456 = vmatprep.subr.bf16.mxu0 %v3421
    %3457 = vmatpush1.bf16.msra.mxu0 %v3420
    %3458 = vmatprep.subr.bf16.mxu0 %v3417
    %3459 = vmatpush1.bf16.msra.mxu0 %v3416
    %3460 = vmatprep.subr.bf16.mxu0 %v3413
    %3461 = vmatpush1.bf16.msra.mxu0 %v3412
    %3462 = vmatprep.subr.bf16.mxu0 %v3409
    %3463 = vmatpush1.bf16.msra.mxu0 %v3408
    %3464 = vmatprep.subr.bf16.mxu0 %v3405
    %3465 = vmatpush1.bf16.msra.mxu0 %v3404
    %3466 = vmatprep.subr.bf16.mxu0 %v3401
    %3467 = vmatpush1.bf16.msra.mxu0 %v3400
    %3468 = vmatprep.subr.bf16.mxu0 %v3397
    %3469 = vmatpush1.bf16.msra.mxu0 %v3396
    %3470 = vmatprep.subr.bf16.mxu0 %v3393
    %3471 = vmatpush1.bf16.msra.mxu0 %v3392
    %3472 = vmatprep.subr.bf16.mxu0 0
    %3473 = vmatpush2.bf16.msra.mxu0 0
    %3474 = vmatprep.subr.bf16.mxu0 0
    %3475 = vmatpush2.bf16.msra.mxu0 0
    %3476 = vmatprep.subr.bf16.mxu0 0
    %3477 = vmatpush2.bf16.msra.mxu0 0
    %3478 = vmatprep.subr.bf16.mxu0 0
    %3479 = vmatpush2.bf16.msra.mxu0 0
    %3480 = vmatprep.subr.bf16.mxu0 0
    %3481 = vmatpush2.bf16.msra.mxu0 0
    %3482 = vmatprep.subr.bf16.mxu0 0
    %3483 = vmatpush2.bf16.msra.mxu0 0
    %3484 = vmatprep.subr.bf16.mxu0 0
    %3485 = vmatpush2.bf16.msra.mxu0 0
    %3486 = vmatprep.subr.bf16.mxu0 0
    %3487 = vmatpush2.bf16.msra.mxu0 0
    %3488 = vmatprep.mubr.bf16.mxu0 0
    %3489 = vmatmul.mubr.bf16.gmra.mxu0 %v3274
    %v3490 = vpop.f32.mrf.mxu0
    %v3491 = vadd.f32 %v3279, %v3490
    %v3492 = vpop.f32.mrf.mxu0
    %v3493 = vadd.f32 %v3283, %v3492
    %v3494 = vpop.f32.mrf.mxu0
    %v3495 = vpop.f32.mrf.mxu0
    %3496 = vdwg.mxu0
    %3497 = vmatprep.subr.bf16.mxu0 %v3423
    %3498 = vmatpush1.bf16.msra.mxu0 %v3422
    %3499 = vmatprep.subr.bf16.mxu0 %v3419
    %3500 = vmatpush1.bf16.msra.mxu0 %v3418
    %3501 = vmatprep.subr.bf16.mxu0 %v3415
    %3502 = vmatpush1.bf16.msra.mxu0 %v3414
    %3503 = vmatprep.subr.bf16.mxu0 %v3411
    %3504 = vmatpush1.bf16.msra.mxu0 %v3410
    %3505 = vmatprep.subr.bf16.mxu0 %v3407
    %3506 = vmatpush1.bf16.msra.mxu0 %v3406
    %3507 = vmatprep.subr.bf16.mxu0 %v3403
    %3508 = vmatpush1.bf16.msra.mxu0 %v3402
    %3509 = vmatprep.subr.bf16.mxu0 %v3399
    %3510 = vmatpush1.bf16.msra.mxu0 %v3398
    %3511 = vmatprep.subr.bf16.mxu0 %v3395
    %3512 = vmatpush1.bf16.msra.mxu0 %v3394
    %3513 = vmatprep.subr.bf16.mxu0 0
    %3514 = vmatpush2.bf16.msra.mxu0 0
    %3515 = vmatprep.subr.bf16.mxu0 0
    %3516 = vmatpush2.bf16.msra.mxu0 0
    %3517 = vmatprep.subr.bf16.mxu0 0
    %3518 = vmatpush2.bf16.msra.mxu0 0
    %3519 = vmatprep.subr.bf16.mxu0 0
    %3520 = vmatpush2.bf16.msra.mxu0 0
    %3521 = vmatprep.subr.bf16.mxu0 0
    %3522 = vmatpush2.bf16.msra.mxu0 0
    %3523 = vmatprep.subr.bf16.mxu0 0
    %3524 = vmatpush2.bf16.msra.mxu0 0
    %3525 = vmatprep.subr.bf16.mxu0 0
    %3526 = vmatpush2.bf16.msra.mxu0 0
    %3527 = vmatprep.subr.bf16.mxu0 0
    %3528 = vmatpush2.bf16.msra.mxu0 0
    %3529 = vmatprep.mubr.bf16.mxu0 0
    %3530 = vmatmul.mubr.bf16.gmra.mxu0 %v3274
    %v3531 = vpop.f32.mrf.mxu0
    %v3532 = vadd.f32 %v3287, %v3531
    %v3533 = vpop.f32.mrf.mxu0
    %v3534 = vadd.f32 %v3291, %v3533
    %v3535 = vpop.f32.mrf.mxu0
    %v3536 = vpop.f32.mrf.mxu0
    %3537 = vdwg.mxu0
    %v3538 = vmul.f32 %v3491, %v3491
    %v3539 = vmul.f32 %v3493, %v3493
    %v3540 = vmul.f32 %v3532, %v3532
    %v3541 = vmul.f32 %v3534, %v3534
    %v3542 = vmul.f32 %v3491, %v3538
    %v3543 = vmul.f32 %v3493, %v3539
    %v3544 = vmul.f32 %v3532, %v3540
    %v3545 = vmul.f32 %v3534, %v3541
    %v3546 = vmul.f32 %v3542, 0.044715
    %v3547 = vmul.f32 %v3543, 0.044715
    %v3548 = vmul.f32 %v3544, 0.044715
    %v3549 = vmul.f32 %v3545, 0.044715
    %v3550 = vadd.f32 %v3491, %v3546
    %v3551 = vadd.f32 %v3493, %v3547
    %v3552 = vadd.f32 %v3532, %v3548
    %v3553 = vadd.f32 %v3534, %v3549
    %v3554 = vmul.f32 %v3550, 0.7978846
    %v3555 = vmul.f32 %v3551, 0.7978846
    %v3556 = vmul.f32 %v3552, 0.7978846
    %v3557 = vmul.f32 %v3553, 0.7978846
    %v3558 = vtanh.pop %v3554
    %v3559 = vtanh.pop %v3555
    %v3560 = vtanh.pop %v3556
    %v3561 = vtanh.pop %v3557
    %v3562 = vadd.f32 %v3558, 1.0
    %v3563 = vadd.f32 %v3559, 1.0
    %v3564 = vadd.f32 %v3560, 1.0
    %v3565 = vadd.f32 %v3561, 1.0
    %v3566 = vmul.f32 %v3562, 0.5
    %v3567 = vmul.f32 %v3563, 0.5
    %v3568 = vmul.f32 %v3564, 0.5
    %v3569 = vmul.f32 %v3565, 0.5
    %v3570 = vmul.f32 %v3491, %v3566
    %v3571 = vmul.f32 %v3493, %v3567
    %v3572 = vmul.f32 %v3532, %v3568
    %v3573 = vmul.f32 %v3534, %v3569
    %v3574 = vpack.c.bf16 %v3570, %v3570
    %v3575 = vpack.c.bf16 %v3571, %v3571
    %v3576 = vpack.c.bf16 %v3572, %v3572
    %v3577 = vpack.c.bf16 %v3573, %v3573
    %v3579 = vlaneseq
    %v3580 = vshrl.u32 %v3579, 7
    %v3581 = vsub.s32 0, %v3580
    %v3582 = vrot.slane %v2220, %v3581
    %v3648 = vunpack.c.l.b16 %v2155
    %v3649 = vunpack.c.l.b16 %v2156
    %v3650 = vunpack.c.l.b16 %v2157
    %v3651 = vunpack.c.l.b16 %v2158
    %v3652 = vunpack.c.l.b16 %v2159
    %v3653 = vunpack.c.l.b16 %v2160
    %v3654 = vunpack.c.l.b16 %v2161
    %v3655 = vunpack.c.l.b16 %v2162
    %v3656 = vunpack.c.l.b16 %v2163
    %v3657 = vunpack.c.l.b16 %v2164
    %v3658 = vunpack.c.l.b16 %v2165
    %v3659 = vunpack.c.l.b16 %v2166
    %v3660 = vunpack.c.l.b16 %v2167
    %v3661 = vunpack.c.l.b16 %v2168
    %v3662 = vunpack.c.l.b16 %v2169
    %v3663 = vunpack.c.l.b16 %v2170
    %v3664 = vunpack.c.l.b16 %v2171
    %v3665 = vunpack.c.l.b16 %v2172
    %v3666 = vunpack.c.l.b16 %v2173
    %v3667 = vunpack.c.l.b16 %v2174
    %v3668 = vunpack.c.l.b16 %v2175
    %v3669 = vunpack.c.l.b16 %v2176
    %v3670 = vunpack.c.l.b16 %v2177
    %v3671 = vunpack.c.l.b16 %v2178
    %v3672 = vunpack.c.l.b16 %v2179
    %v3673 = vunpack.c.l.b16 %v2180
    %v3674 = vunpack.c.l.b16 %v2181
    %v3675 = vunpack.c.l.b16 %v2182
    %v3676 = vunpack.c.l.b16 %v2183
    %v3677 = vunpack.c.l.b16 %v2184
    %v3678 = vunpack.c.l.b16 %v2185
    %v3679 = vunpack.c.l.b16 %v2186
    %v3680 = vunpack.c.l.b16 %v2187
    %v3681 = vunpack.c.l.b16 %v2188
    %v3682 = vunpack.c.l.b16 %v2189
    %v3683 = vunpack.c.l.b16 %v2190
    %v3684 = vunpack.c.l.b16 %v2191
    %v3685 = vunpack.c.l.b16 %v2192
    %v3686 = vunpack.c.l.b16 %v2193
    %v3687 = vunpack.c.l.b16 %v2194
    %v3688 = vunpack.c.l.b16 %v2195
    %v3689 = vunpack.c.l.b16 %v2196
    %v3690 = vunpack.c.l.b16 %v2197
    %v3691 = vunpack.c.l.b16 %v2198
    %v3692 = vunpack.c.l.b16 %v2199
    %v3693 = vunpack.c.l.b16 %v2200
    %v3694 = vunpack.c.l.b16 %v2201
    %v3695 = vunpack.c.l.b16 %v2202
    %v3696 = vunpack.c.l.b16 %v2203
    %v3697 = vunpack.c.l.b16 %v2204
    %v3698 = vunpack.c.l.b16 %v2205
    %v3699 = vunpack.c.l.b16 %v2206
    %v3700 = vunpack.c.l.b16 %v2207
    %v3701 = vunpack.c.l.b16 %v2208
    %v3702 = vunpack.c.l.b16 %v2209
    %v3703 = vunpack.c.l.b16 %v2210
    %v3704 = vunpack.c.l.b16 %v2211
    %v3705 = vunpack.c.l.b16 %v2212
    %v3706 = vunpack.c.l.b16 %v2213
    %v3707 = vunpack.c.l.b16 %v2214
    %v3708 = vunpack.c.l.b16 %v2215
    %v3709 = vunpack.c.l.b16 %v2216
    %v3710 = vunpack.c.l.b16 %v2217
    %v3711 = vunpack.c.l.b16 %v2218
    %v3712 = vpack.c.b16 %v3649, %v3648
    %v3713 = vpack.c.b16 %v3651, %v3650
    %v3714 = vpack.c.b16 %v3653, %v3652
    %v3715 = vpack.c.b16 %v3655, %v3654
    %v3716 = vpack.c.b16 %v3657, %v3656
    %v3717 = vpack.c.b16 %v3659, %v3658
    %v3718 = vpack.c.b16 %v3661, %v3660
    %v3719 = vpack.c.b16 %v3663, %v3662
    %v3720 = vpack.c.b16 %v3665, %v3664
    %v3721 = vpack.c.b16 %v3667, %v3666
    %v3722 = vpack.c.b16 %v3669, %v3668
    %v3723 = vpack.c.b16 %v3671, %v3670
    %v3724 = vpack.c.b16 %v3673, %v3672
    %v3725 = vpack.c.b16 %v3675, %v3674
    %v3726 = vpack.c.b16 %v3677, %v3676
    %v3727 = vpack.c.b16 %v3679, %v3678
    %v3728 = vpack.c.b16 %v3681, %v3680
    %v3729 = vpack.c.b16 %v3683, %v3682
    %v3730 = vpack.c.b16 %v3685, %v3684
    %v3731 = vpack.c.b16 %v3687, %v3686
    %v3732 = vpack.c.b16 %v3689, %v3688
    %v3733 = vpack.c.b16 %v3691, %v3690
    %v3734 = vpack.c.b16 %v3693, %v3692
    %v3735 = vpack.c.b16 %v3695, %v3694
    %v3736 = vpack.c.b16 %v3697, %v3696
    %v3737 = vpack.c.b16 %v3699, %v3698
    %v3738 = vpack.c.b16 %v3701, %v3700
    %v3739 = vpack.c.b16 %v3703, %v3702
    %v3740 = vpack.c.b16 %v3705, %v3704
    %v3741 = vpack.c.b16 %v3707, %v3706
    %v3742 = vpack.c.b16 %v3709, %v3708
    %v3743 = vpack.c.b16 %v3711, %v3710
    %3776 = vmatprep.subr.bf16.mxu0 0
    %3777 = vmatpush1.bf16.msra.mxu0 %v3719
    %3778 = vmatprep.subr.bf16.mxu0 0
    %3779 = vmatpush1.bf16.msra.mxu0 %v3718
    %3780 = vmatprep.subr.bf16.mxu0 0
    %3781 = vmatpush1.bf16.msra.mxu0 %v3717
    %3782 = vmatprep.subr.bf16.mxu0 0
    %3783 = vmatpush1.bf16.msra.mxu0 %v3716
    %3784 = vmatprep.subr.bf16.mxu0 0
    %3785 = vmatpush1.bf16.msra.mxu0 %v3715
    %3786 = vmatprep.subr.bf16.mxu0 0
    %3787 = vmatpush1.bf16.msra.mxu0 %v3714
    %3788 = vmatprep.subr.bf16.mxu0 0
    %3789 = vmatpush1.bf16.msra.mxu0 %v3713
    %3790 = vmatprep.subr.bf16.mxu0 0
    %3791 = vmatpush1.bf16.msra.mxu0 %v3712
    %3792 = vmatprep.subr.bf16.mxu0 0
    %3793 = vmatpush2.bf16.msra.mxu0 %v3727
    %3794 = vmatprep.subr.bf16.mxu0 0
    %3795 = vmatpush2.bf16.msra.mxu0 %v3726
    %3796 = vmatprep.subr.bf16.mxu0 0
    %3797 = vmatpush2.bf16.msra.mxu0 %v3725
    %3798 = vmatprep.subr.bf16.mxu0 0
    %3799 = vmatpush2.bf16.msra.mxu0 %v3724
    %3800 = vmatprep.subr.bf16.mxu0 0
    %3801 = vmatpush2.bf16.msra.mxu0 %v3723
    %3802 = vmatprep.subr.bf16.mxu0 0
    %3803 = vmatpush2.bf16.msra.mxu0 %v3722
    %3804 = vmatprep.subr.bf16.mxu0 0
    %3805 = vmatpush2.bf16.msra.mxu0 %v3721
    %3806 = vmatprep.subr.bf16.mxu0 0
    %3807 = vmatpush2.bf16.msra.mxu0 %v3720
    %3808 = vmatprep.mubr.bf16.mxu0 %v3575
    %3809 = vmatmul.mubr.bf16.gmra.mxu0 %v3574
    %v3810 = vpop.f32.mrf.mxu0
    %v3811 = vadd.f32 %v3582, %v3810
    %v3812 = vpop.f32.mrf.mxu0
    %v3813 = vpop.f32.mrf.mxu0
    %v3814 = vpop.f32.mrf.mxu0
    %3815 = vdwg.mxu0
    %3816 = vmatprep.subr.bf16.mxu0 0
    %3817 = vmatpush1.bf16.msra.mxu0 %v3735
    %3818 = vmatprep.subr.bf16.mxu0 0
    %3819 = vmatpush1.bf16.msra.mxu0 %v3734
    %3820 = vmatprep.subr.bf16.mxu0 0
    %3821 = vmatpush1.bf16.msra.mxu0 %v3733
    %3822 = vmatprep.subr.bf16.mxu0 0
    %3823 = vmatpush1.bf16.msra.mxu0 %v3732
    %3824 = vmatprep.subr.bf16.mxu0 0
    %3825 = vmatpush1.bf16.msra.mxu0 %v3731
    %3826 = vmatprep.subr.bf16.mxu0 0
    %3827 = vmatpush1.bf16.msra.mxu0 %v3730
    %3828 = vmatprep.subr.bf16.mxu0 0
    %3829 = vmatpush1.bf16.msra.mxu0 %v3729
    %3830 = vmatprep.subr.bf16.mxu0 0
    %3831 = vmatpush1.bf16.msra.mxu0 %v3728
    %3832 = vmatprep.subr.bf16.mxu0 0
    %3833 = vmatpush2.bf16.msra.mxu0 %v3743
    %3834 = vmatprep.subr.bf16.mxu0 0
    %3835 = vmatpush2.bf16.msra.mxu0 %v3742
    %3836 = vmatprep.subr.bf16.mxu0 0
    %3837 = vmatpush2.bf16.msra.mxu0 %v3741
    %3838 = vmatprep.subr.bf16.mxu0 0
    %3839 = vmatpush2.bf16.msra.mxu0 %v3740
    %3840 = vmatprep.subr.bf16.mxu0 0
    %3841 = vmatpush2.bf16.msra.mxu0 %v3739
    %3842 = vmatprep.subr.bf16.mxu0 0
    %3843 = vmatpush2.bf16.msra.mxu0 %v3738
    %3844 = vmatprep.subr.bf16.mxu0 0
    %3845 = vmatpush2.bf16.msra.mxu0 %v3737
    %3846 = vmatprep.subr.bf16.mxu0 0
    %3847 = vmatpush2.bf16.msra.mxu0 %v3736
    %3848 = vmatprep.mubr.bf16.mxu0 %v3577
    %3849 = vmatmul.mubr.bf16.gmra.mxu0 %v3576
    %v3850 = vpop.f32.mrf.mxu0
    %v3851 = vadd.f32 %v3811, %v3850
    %v3852 = vpop.f32.mrf.mxu0
    %v3853 = vpop.f32.mrf.mxu0
    %v3854 = vpop.f32.mrf.mxu0
    %3855 = vdwg.mxu0
    %v3856 = vadd.f32 %v3248, %v3851
    %v3857 = vld [vmem:[%s16] sm:$0x1]
    %v3858 = vld [vmem:[%s17] sm:$0x1]
    %3859 = vadd.xlane.f32.xlu0 %v3856
    %v3860 = vpop.xlane.xlu0 %3859
    %v3861 = vmul.f32 %v3860, %v417
    %v3862 = vsub.f32 %v3856, %v3861
    %v3863 = vmul.f32 %v3862, %v3862
    %3864 = vadd.xlane.f32.xlu0 %v3863
    %v3865 = vpop.xlane.xlu0 %3864
    %v3866 = vmul.f32 %v3865, %v417
    %v3867 = vadd.f32 %v3866, 1e-05
    %v3868 = vrsqrt.pop %v3867
    %v3869 = vmul.f32 %v3862, %v3868
    %v3871 = vlaneseq
    %v3872 = vshrl.u32 %v3871, 7
    %v3873 = vsub.s32 0, %v3872
    %v3874 = vrot.slane %v3857, %v3873
    %v3876 = vmul.f32 %v3869, %v3874
    %v3878 = vlaneseq
    %v3879 = vshrl.u32 %v3878, 7
    %v3880 = vsub.s32 0, %v3879
    %v3881 = vrot.slane %v3858, %v3880
    %v3883 = vadd.f32 %v3876, %v3881
    %3884 = vst [vmem:[#allocation8] sm:$0xff] %v3883
    // Predicated region
    $region82: #{vit_forward.1} parent=1 // pred_check
      _
    $region83: #{vit_forward.1} parent=1 // pred_check_branch
      %3886 = sbr.rel (0) target = $region85
    $region84: #{vit_forward.1} parent=1 // pred_region
      %s3888 = ssub.s32 128, 128
      %3889 = vsyncadd [#allocation5], %s3888
      %s3891 = sshll.u32 [#allocation8], 4
      %s3892 = int_to_ptr.vmem [resolvable:$true] %s3891
      %3894 = dma.vmem_to_hbm [thread:$0]  %s3892, 128, %s18, [#allocation5]
    $region85: #{vit_forward.1} parent=1 // pred_fallthru
      _
    // Predicated region
    $region86: #{vit_forward.1} parent=1 // pred_check
      _
    $region87: #{vit_forward.1} parent=1 // pred_check_branch
      %3896 = sbr.rel (0) target = $region89
    $region88: #{vit_forward.1} parent=1 // pred_region
      %3897 = dma.done [#allocation5], 128
    $region89: #{vit_forward.1} parent=1 // pred_fallthru
      _
    %3898 = vsyncpa [#allocation4], 1
    %3899 = vsyncpa [#allocation7], 1
    %3900 = vsyncpa [#allocation5], 1

</llo_original>
